<compile_context>
chip_gen: v5e
topology: v5e:2x2
jax: 0.10.0
libtpu: 0.0.40
codegen_flags: <defaults>
</compile_context>

<pallas_src>
import functools
import math

import jax
import jax.numpy as jnp
from jax import lax
from jax.experimental import pallas as pl
from jax.experimental.pallas import tpu as pltpu


# ----------------------------------------------------------------------------
# Pallas kernel: one (batch, query-tile) step of the DecoderLayer forward.
# ----------------------------------------------------------------------------
def _decoder_layer_kernel(
    trg_ref, enc_ref, tbias_ref, sbias_ref,
    sa_wq, sa_bq, sa_wk, sa_bk, sa_wv, sa_bv, sa_wo, sa_bo,
    ca_wq, ca_bq, ca_wk, ca_bk, ca_wv, ca_bv, ca_wo, ca_bo,
    ff_w1, ff_b1, ff_w2, ff_b2,
    ln_g, ln_b,
    out_ref, attn_ref,
    *, n_heads, head_dim, q_tile, matmul_dtype,
):
    md = matmul_dtype
    eps = jnp.float32(1e-5)
    gamma = ln_g[...]                     # (1, H) loaded once, shared by all 3 LNs
    beta = ln_b[...]

    def layer_norm(x):                    # f32 throughout
        mu = jnp.mean(x, axis=-1, keepdims=True)
        var = jnp.mean(jnp.square(x - mu), axis=-1, keepdims=True)
        return (x - mu) * lax.rsqrt(var + eps) * gamma + beta

    def mm(a, w_ref):
        # MXU matmul (bf16 inputs on v6e/v7x via matmul_dtype); always f32 accumulate.
        return jnp.dot(a.astype(md), w_ref[...].astype(md),
                       preferred_element_type=jnp.float32)

    def split_heads(t, s_len):
        # (S, H) f32 -> (n_heads, S, head_dim) in matmul dtype; one relayout per tensor
        # instead of n_heads lane slices.
        return t.reshape(s_len, n_heads, head_dim).transpose(1, 0, 2).astype(md)

    def mha(xq_m, xkv_m, bias, wq, bq, wk, bk, wv, bv, wo, bo, *, exact_softmax):
        sq = xq_m.shape[0]
        sk = xkv_m.shape[0]
        # Full-width projections; 1/sqrt(head_dim) pre-folded into wq/bq.
        q = mm(xq_m, wq) + bq[...]        # (sq, H) f32
        k = mm(xkv_m, wk) + bk[...]       # (sk, H)
        v = mm(xkv_m, wv) + bv[...]       # (sk, H)

        qh = split_heads(q, sq)           # (nh, sq, hd)
        kh = split_heads(k, sk)           # (nh, sk, hd)
        vh = split_heads(v, sk)           # (nh, sk, hd)

        # Head-batched attention core (no per-head python loop / concatenate).
        e = lax.dot_general(qh, kh, (((2,), (2,)), ((0,), (0,))),
                            preferred_element_type=jnp.float32)     # (nh, sq, sk) f32
        e = e + bias[None]                # additive mask bias (f32), single broadcast add
        m = jnp.max(e, axis=-1, keepdims=True)
        p = jnp.exp(e - m)
        denom = jnp.sum(p, axis=-1, keepdims=True)
        # approx recip (EUP) where attention weights are internal only; exact where they
        # are a module output (rows must sum to 1).
        inv = pl.reciprocal(denom, approx=not exact_softmax)
        attn = p * inv                                               # (nh, sq, sk)
        ctx = lax.dot_general(attn.astype(md), vh, (((2,), (1,)), ((0,), (0,))),
                              preferred_element_type=jnp.float32)    # (nh, sq, hd)
        ctx = ctx.transpose(1, 0, 2).reshape(sq, n_heads * head_dim)  # (sq, H)
        out = mm(ctx, wo) + bo[...]                                   # ONE output proj
        return out, attn

    qi = pl.program_id(1)
    q_start = pl.multiple_of(qi * q_tile, q_tile)

    trg_q = trg_ref[0, pl.ds(q_start, q_tile), :]    # (tq, H) f32, residual path
    trg_q_m = trg_q.astype(md)                       # casts hoisted: done once per step
    trg_kv_m = trg_ref[0].astype(md)                 # (St, H) self-attn K/V source
    enc_m = enc_ref[0].astype(md)                    # (Ss, H)
    tbias = tbias_ref[0]                             # (tq, St) additive bias (f32)
    sbias = sbias_ref[0]                             # (1, Ss)  additive bias (f32)

    # self attention + residual + LN
    sa, _ = mha(trg_q_m, trg_kv_m, tbias,
                sa_wq, sa_bq, sa_wk, sa_bk, sa_wv, sa_bv, sa_wo, sa_bo,
                exact_softmax=False)
    x = layer_norm(trg_q + sa)

    # encoder (cross) attention + residual + LN; attention weights are an output
    ca, attn = mha(x.astype(md), enc_m, sbias,
                   ca_wq, ca_bq, ca_wk, ca_bk, ca_wv, ca_bv, ca_wo, ca_bo,
                   exact_softmax=True)
    attn_ref[0] = attn                    # direct (nh, tq, Ss) store -> 4-D output block
    x = layer_norm(x + ca)

    # position-wise feed-forward + residual + LN
    h1 = jax.nn.relu(mm(x, ff_w1) + ff_b1[...])
    ff = mm(h1, ff_w2) + ff_b2[...]
    out_ref[0] = layer_norm(x + ff)


def decoder_layer(trg, enc_src, trg_mask, src_mask, params, *, n_heads,
                  matmul_dtype=jnp.bfloat16, q_tile=None):
    B, St, H = trg.shape
    _, Ss, _ = enc_src.shape
    assert H % n_heads == 0
    hd = H // n_heads

    if q_tile is None:
        q_tile = St if St <= 128 else 128
    assert St % q_tile == 0, "St must be divisible by q_tile"
    num_q = St // q_tile

    # Masks -> additive f32 biases in the wrapper (masks are exact 0.0/1.0 floats here;
    # this drops the in-kernel compare/select and keeps -1e10 / energies in f32).
    neg = jnp.float32(-1e10)
    zero = jnp.float32(0.0)
    tbias = jnp.where(trg_mask[:, 0] == 0, neg, zero).astype(jnp.float32)       # (B,St,St)
    sbias = jnp.where(src_mask[:, 0, 0] == 0, neg, zero).astype(jnp.float32)    # (B,Ss)
    sbias = sbias[:, None, :]                                                   # (B,1,Ss)

    def full_spec(shape):
        nd = len(shape)
        return pl.BlockSpec(shape, lambda b, q, nd=nd: (0,) * nd)

    in_specs = [
        pl.BlockSpec((1, St, H), lambda b, q: (b, 0, 0)),       # trg (full seq, K/V + Q slice)
        pl.BlockSpec((1, Ss, H), lambda b, q: (b, 0, 0)),       # enc_src
        pl.BlockSpec((1, q_tile, St), lambda b, q: (b, q, 0)),  # trg additive-bias rows
        pl.BlockSpec((1, 1, Ss), lambda b, q: (b, 0, 0)),       # src additive bias
    ]
    param_order = [
        "sa_wq", "sa_bq", "sa_wk", "sa_bk", "sa_wv", "sa_bv", "sa_wo", "sa_bo",
        "ca_wq", "ca_bq", "ca_wk", "ca_bk", "ca_wv", "ca_bv", "ca_wo", "ca_bo",
        "ff_w1", "ff_b1", "ff_w2", "ff_b2",
        "ln_g", "ln_b",
    ]
    param_vals = [params[k] for k in param_order]
    in_specs += [full_spec(p.shape) for p in param_vals]

    out_shape = (
        jax.ShapeDtypeStruct((B, St, H), jnp.float32),
        jax.ShapeDtypeStruct((B, n_heads, St, Ss), jnp.float32),   # consumer layout, no
    )                                                              # wrapper transpose
    out_specs = (
        pl.BlockSpec((1, q_tile, H), lambda b, q: (b, q, 0)),
        pl.BlockSpec((1, n_heads, q_tile, Ss), lambda b, q: (b, 0, q, 0)),
    )

    kernel = functools.partial(_decoder_layer_kernel, n_heads=n_heads, head_dim=hd,
                               q_tile=q_tile, matmul_dtype=matmul_dtype)
    out, attention = pl.pallas_call(
        kernel,
        out_shape=out_shape,
        grid_spec=pltpu.PrefetchScalarGridSpec(
            num_scalar_prefetch=0,
            grid=(B, num_q),                      # query-tile axis keeps MXU rows / both
            in_specs=in_specs,                    # v7x TCs busy even for small B
            out_specs=out_specs,
        ),
        compiler_params=pltpu.CompilerParams(
            dimension_semantics=("parallel", "parallel"),
            vmem_limit_bytes=48 * 1024 * 1024,    # above the 16/32 MiB scoped defaults,
        ),                                        # below v7x's 64 MiB physical
    )(trg, enc_src, tbias, sbias, *param_vals)
    return out, attention


def pack_params(full_params, *, n_heads, hid_dim, weight_dtype=jnp.float32):
    """Repack reference params: fold 1/sqrt(hd) into Q weights/bias, reshape biases to
    (1, H), and optionally store the big weight matrices in bf16 (halves HBM traffic;
    biases / LN params stay f32 since all elementwise math is f32)."""
    hd = hid_dim // n_heads
    s = 1.0 / math.sqrt(hd)
    wd = weight_dtype

    def attn(prefix, p):
        return {
            f"{prefix}_wq": (p["wq"] * s).astype(wd),
            f"{prefix}_bq": (p["bq"] * s).reshape(1, -1).astype(jnp.float32),
            f"{prefix}_wk": p["wk"].astype(wd),
            f"{prefix}_bk": p["bk"].reshape(1, -1).astype(jnp.float32),
            f"{prefix}_wv": p["wv"].astype(wd),
            f"{prefix}_bv": p["bv"].reshape(1, -1).astype(jnp.float32),
            f"{prefix}_wo": p["wo"].astype(wd),
            f"{prefix}_bo": p["bo"].reshape(1, -1).astype(jnp.float32),
        }

    kp = {}
    kp.update(attn("sa", full_params["sa"]))
    kp.update(attn("ca", full_params["ca"]))
    kp.update({
        "ff_w1": full_params["ff_w1"].astype(wd),
        "ff_b1": full_params["ff_b1"].reshape(1, -1).astype(jnp.float32),
        "ff_w2": full_params["ff_w2"].astype(wd),
        "ff_b2": full_params["ff_b2"].reshape(1, -1).astype(jnp.float32),
        "ln_g": full_params["ln_g"].reshape(1, -1).astype(jnp.float32),
        "ln_b": full_params["ln_b"].reshape(1, -1).astype(jnp.float32),
    })
    return kp


# ----------------------------------------------------------------------------
# Plain-JAX reference (mirrors the PyTorch module, dropout = identity).
# ----------------------------------------------------------------------------
def reference_decoder_layer(trg, enc_src, trg_mask, src_mask, full_params, *, n_heads):
    B, St, H = trg.shape
    hd = H // n_heads
    scale = math.sqrt(hd)

    def ln(x):
        mu = jnp.mean(x, -1, keepdims=True)
        var = jnp.mean((x - mu) ** 2, -1, keepdims=True)
        return (x - mu) / jnp.sqrt(var + 1e-5) * full_params["ln_g"] + full_params["ln_b"]

    def mha(xq, xkv, mask, p):
        Q = xq @ p["wq"] + p["bq"]
        K = xkv @ p["wk"] + p["bk"]
        V = xkv @ p["wv"] + p["bv"]

        def split(t):
            b, s, _ = t.shape
            return t.reshape(b, s, n_heads, hd).transpose(0, 2, 1, 3)

        Qh, Kh, Vh = split(Q), split(K), split(V)
        energy = jnp.einsum("bhqd,bhkd->bhqk", Qh, Kh) / scale
        energy = jnp.where(mask == 0, -1e10, energy)
        attn = jax.nn.softmax(energy, axis=-1)
        ctx = jnp.einsum("bhqk,bhkd->bhqd", attn, Vh)
        ctx = ctx.transpose(0, 2, 1, 3).reshape(xq.shape[0], xq.shape[1], H)
        return ctx @ p["wo"] + p["bo"], attn

    sa, _ = mha(trg, trg, trg_mask, full_params["sa"])
    x = ln(trg + sa)
    ca, attention = mha(x, enc_src, src_mask, full_params["ca"])
    x = ln(x + ca)
    ff = jax.nn.relu(x @ full_params["ff_w1"] + full_params["ff_b1"])
    ff = ff @ full_params["ff_w2"] + full_params["ff_b2"]
    x = ln(x + ff)
    return x, attention


# ----------------------------------------------------------------------------
if __name__ == "__main__":
    B, St, Ss = 2, 8, 16
    H, n_heads, pf = 32, 4, 64

    key = jax.random.PRNGKey(0)
    keys = jax.random.split(key, 20)

    def lin(k, din, dout):
        return 0.02 * jax.random.normal(k, (din, dout), jnp.float32)

    full_params = {
        "sa": {"wq": lin(keys[0], H, H), "bq": 0.01 * jax.random.normal(keys[1], (H,)),
               "wk": lin(keys[2], H, H), "bk": 0.01 * jax.random.normal(keys[3], (H,)),
               "wv": lin(keys[4], H, H), "bv": 0.01 * jax.random.normal(keys[5], (H,)),
               "wo": lin(keys[6], H, H), "bo": 0.01 * jax.random.normal(keys[7], (H,))},
        "ca": {"wq": lin(keys[8], H, H), "bq": 0.01 * jax.random.normal(keys[9], (H,)),
               "wk": lin(keys[10], H, H), "bk": 0.01 * jax.random.normal(keys[11], (H,)),
               "wv": lin(keys[12], H, H), "bv": 0.01 * jax.random.normal(keys[13], (H,)),
               "wo": lin(keys[14], H, H), "bo": 0.01 * jax.random.normal(keys[15], (H,))},
        "ff_w1": lin(keys[16], H, pf), "ff_b1": 0.01 * jax.random.normal(keys[17], (pf,)),
        "ff_w2": lin(keys[18], pf, H), "ff_b2": 0.01 * jax.random.normal(keys[19], (H,)),
        "ln_g": jnp.ones((H,), jnp.float32), "ln_b": jnp.zeros((H,), jnp.float32),
    }

    k_in = jax.random.split(jax.random.PRNGKey(1), 2)
    trg = jax.random.normal(k_in[0], (B, St, H), jnp.float32)
    enc_src = jax.random.normal(k_in[1], (B, Ss, H), jnp.float32)

    # causal target mask (B,1,St,St); source padding mask (B,1,1,Ss)
    causal = jnp.tril(jnp.ones((St, St), jnp.float32))
    trg_mask = jnp.broadcast_to(causal, (B, 1, St, St)).astype(jnp.float32)
    src_mask = jnp.ones((B, 1, 1, Ss), jnp.float32)
    src_mask = src_mask.at[1, 0, 0, Ss - 4:].set(0.0)  # pad last 4 src tokens of batch 1

    ref_out, ref_attn = reference_decoder_layer(trg, enc_src, trg_mask, src_mask,
                                                full_params, n_heads=n_heads)

    # ---- f32 matmul path (tight numerical check against the f32 reference) ----
    kp32 = pack_params(full_params, n_heads=n_heads, hid_dim=H, weight_dtype=jnp.float32)
    out32, attn32 = decoder_layer(trg, enc_src, trg_mask, src_mask, kp32,
                                  n_heads=n_heads, matmul_dtype=jnp.float32)
    out32 = jax.block_until_ready(out32)
    attn32 = jax.block_until_ready(attn32)
    assert out32.shape == (B, St, H) and attn32.shape == (B, n_heads, St, Ss)
    # Tolerance covers pl.reciprocal(approx=True) inside the self-attention softmax.
    assert jnp.allclose(out32, ref_out, atol=5e-3, rtol=5e-3), "f32 output mismatch"
    assert jnp.allclose(attn32, ref_attn, atol=5e-3, rtol=5e-3), "f32 attention mismatch"

    # ---- bf16 matmul path (default; MXU-native on v6e/v7x, f32 accumulation) ----
    kpbf = pack_params(full_params, n_heads=n_heads, hid_dim=H,
                       weight_dtype=jnp.bfloat16)
    outbf, attnbf = decoder_layer(trg, enc_src, trg_mask, src_mask, kpbf,
                                  n_heads=n_heads)   # matmul_dtype defaults to bf16
    outbf = jax.block_until_ready(outbf)
    attnbf = jax.block_until_ready(attnbf)
    assert jnp.allclose(outbf, ref_out, atol=5e-2, rtol=5e-2), "bf16 output mismatch"
    assert jnp.allclose(attnbf, ref_attn, atol=5e-2, rtol=5e-2), "bf16 attention mismatch"

    print("KERNEL_OK")
</pallas_src>

<mosaic_0001>
module attributes {stable_mosaic.version = 11 : i64} {
  func.func @_decoder_layer_kernel(%arg0: i32, %arg1: i32, %arg2: memref<1x8x32xf32, #tpu.memory_space<vmem>>, %arg3: memref<1x16x32xf32, #tpu.memory_space<vmem>>, %arg4: memref<1x8x8xf32, #tpu.memory_space<vmem>>, %arg5: memref<1x1x16xf32, #tpu.memory_space<vmem>>, %arg6: memref<32x32xf32, #tpu.memory_space<vmem>>, %arg7: memref<1x32xf32, #tpu.memory_space<vmem>>, %arg8: memref<32x32xf32, #tpu.memory_space<vmem>>, %arg9: memref<1x32xf32, #tpu.memory_space<vmem>>, %arg10: memref<32x32xf32, #tpu.memory_space<vmem>>, %arg11: memref<1x32xf32, #tpu.memory_space<vmem>>, %arg12: memref<32x32xf32, #tpu.memory_space<vmem>>, %arg13: memref<1x32xf32, #tpu.memory_space<vmem>>, %arg14: memref<32x32xf32, #tpu.memory_space<vmem>>, %arg15: memref<1x32xf32, #tpu.memory_space<vmem>>, %arg16: memref<32x32xf32, #tpu.memory_space<vmem>>, %arg17: memref<1x32xf32, #tpu.memory_space<vmem>>, %arg18: memref<32x32xf32, #tpu.memory_space<vmem>>, %arg19: memref<1x32xf32, #tpu.memory_space<vmem>>, %arg20: memref<32x32xf32, #tpu.memory_space<vmem>>, %arg21: memref<1x32xf32, #tpu.memory_space<vmem>>, %arg22: memref<32x64xf32, #tpu.memory_space<vmem>>, %arg23: memref<1x64xf32, #tpu.memory_space<vmem>>, %arg24: memref<64x32xf32, #tpu.memory_space<vmem>>, %arg25: memref<1x32xf32, #tpu.memory_space<vmem>>, %arg26: memref<1x32xf32, #tpu.memory_space<vmem>>, %arg27: memref<1x32xf32, #tpu.memory_space<vmem>>, %arg28: memref<1x8x32xf32, #tpu.memory_space<vmem>>, %arg29: memref<1x4x8x16xf32, #tpu.memory_space<vmem>>) attributes {dimension_semantics = [#tpu.dimension_semantics<parallel>, #tpu.dimension_semantics<parallel>], iteration_bounds = array<i64: 2, 1>, scalar_prefetch = 0 : i64, scratch_operands = 0 : i64, tpu.core_type = #tpu.core_type<tc>, window_params = [{transform_indices = @transform_0, window_bounds = array<i64: 1, 8, 32>}, {transform_indices = @transform_1, window_bounds = array<i64: 1, 16, 32>}, {transform_indices = @transform_2, window_bounds = array<i64: 1, 8, 8>}, {transform_indices = @transform_3, window_bounds = array<i64: 1, 1, 16>}, {pipeline_mode = #tpu.pipeline_mode<synchronous>, transform_indices = @transform_4, window_bounds = array<i64: 32, 32>}, {pipeline_mode = #tpu.pipeline_mode<synchronous>, transform_indices = @transform_5, window_bounds = array<i64: 1, 32>}, {pipeline_mode = #tpu.pipeline_mode<synchronous>, transform_indices = @transform_6, window_bounds = array<i64: 32, 32>}, {pipeline_mode = #tpu.pipeline_mode<synchronous>, transform_indices = @transform_7, window_bounds = array<i64: 1, 32>}, {pipeline_mode = #tpu.pipeline_mode<synchronous>, transform_indices = @transform_8, window_bounds = array<i64: 32, 32>}, {pipeline_mode = #tpu.pipeline_mode<synchronous>, transform_indices = @transform_9, window_bounds = array<i64: 1, 32>}, {pipeline_mode = #tpu.pipeline_mode<synchronous>, transform_indices = @transform_10, window_bounds = array<i64: 32, 32>}, {pipeline_mode = #tpu.pipeline_mode<synchronous>, transform_indices = @transform_11, window_bounds = array<i64: 1, 32>}, {pipeline_mode = #tpu.pipeline_mode<synchronous>, transform_indices = @transform_12, window_bounds = array<i64: 32, 32>}, {pipeline_mode = #tpu.pipeline_mode<synchronous>, transform_indices = @transform_13, window_bounds = array<i64: 1, 32>}, {pipeline_mode = #tpu.pipeline_mode<synchronous>, transform_indices = @transform_14, window_bounds = array<i64: 32, 32>}, {pipeline_mode = #tpu.pipeline_mode<synchronous>, transform_indices = @transform_15, window_bounds = array<i64: 1, 32>}, {pipeline_mode = #tpu.pipeline_mode<synchronous>, transform_indices = @transform_16, window_bounds = array<i64: 32, 32>}, {pipeline_mode = #tpu.pipeline_mode<synchronous>, transform_indices = @transform_17, window_bounds = array<i64: 1, 32>}, {pipeline_mode = #tpu.pipeline_mode<synchronous>, transform_indices = @transform_18, window_bounds = array<i64: 32, 32>}, {pipeline_mode = #tpu.pipeline_mode<synchronous>, transform_indices = @transform_19, window_bounds = array<i64: 1, 32>}, {pipeline_mode = #tpu.pipeline_mode<synchronous>, transform_indices = @transform_20, window_bounds = array<i64: 32, 64>}, {pipeline_mode = #tpu.pipeline_mode<synchronous>, transform_indices = @transform_21, window_bounds = array<i64: 1, 64>}, {pipeline_mode = #tpu.pipeline_mode<synchronous>, transform_indices = @transform_22, window_bounds = array<i64: 64, 32>}, {pipeline_mode = #tpu.pipeline_mode<synchronous>, transform_indices = @transform_23, window_bounds = array<i64: 1, 32>}, {pipeline_mode = #tpu.pipeline_mode<synchronous>, transform_indices = @transform_24, window_bounds = array<i64: 1, 32>}, {pipeline_mode = #tpu.pipeline_mode<synchronous>, transform_indices = @transform_25, window_bounds = array<i64: 1, 32>}, {transform_indices = @transform_26, window_bounds = array<i64: 1, 8, 32>}, {transform_indices = @transform_27, window_bounds = array<i64: 1, 4, 8, 16>}]} {
    %c0 = arith.constant 0 : index
    %c0_0 = arith.constant 0 : index
    %0 = vector.load %arg26[%c0, %c0_0] : memref<1x32xf32, #tpu.memory_space<vmem>>, vector<1x32xf32>
    %c0_1 = arith.constant 0 : index
    %c0_2 = arith.constant 0 : index
    %1 = vector.load %arg27[%c0_1, %c0_2] : memref<1x32xf32, #tpu.memory_space<vmem>>, vector<1x32xf32>
    %c8_i32 = arith.constant 8 : i32
    %2 = arith.muli %arg1, %c8_i32 : i32
    %3 = tpu.assume_multiple %2, 8 : i32
    %c0_3 = arith.constant 0 : index
    %4 = arith.index_cast %3 : i32 to index
    %c0_4 = arith.constant 0 : index
    %5 = vector.load %arg2[%c0_3, %4, %c0_4] : memref<1x8x32xf32, #tpu.memory_space<vmem>>, vector<1x8x32xf32>
    %6 = vector.shape_cast %5 : vector<1x8x32xf32> to vector<8x32xf32>
    %c0_5 = arith.constant 0 : index
    %c0_6 = arith.constant 0 : index
    %c0_7 = arith.constant 0 : index
    %7 = vector.load %arg2[%c0_5, %c0_6, %c0_7] : memref<1x8x32xf32, #tpu.memory_space<vmem>>, vector<1x8x32xf32>
    %8 = vector.shape_cast %7 : vector<1x8x32xf32> to vector<8x32xf32>
    %c0_8 = arith.constant 0 : index
    %c0_9 = arith.constant 0 : index
    %c0_10 = arith.constant 0 : index
    %9 = vector.load %arg3[%c0_8, %c0_9, %c0_10] : memref<1x16x32xf32, #tpu.memory_space<vmem>>, vector<1x16x32xf32>
    %10 = vector.shape_cast %9 : vector<1x16x32xf32> to vector<16x32xf32>
    %c0_11 = arith.constant 0 : index
    %c0_12 = arith.constant 0 : index
    %c0_13 = arith.constant 0 : index
    %11 = vector.load %arg4[%c0_11, %c0_12, %c0_13] : memref<1x8x8xf32, #tpu.memory_space<vmem>>, vector<1x8x8xf32>
    %12 = vector.shape_cast %11 : vector<1x8x8xf32> to vector<8x8xf32>
    %c0_14 = arith.constant 0 : index
    %c0_15 = arith.constant 0 : index
    %c0_16 = arith.constant 0 : index
    %13 = vector.load %arg5[%c0_14, %c0_15, %c0_16] : memref<1x1x16xf32, #tpu.memory_space<vmem>>, vector<1x1x16xf32>
    %14 = vector.shape_cast %13 : vector<1x1x16xf32> to vector<1x16xf32>
    %c0_17 = arith.constant 0 : index
    %c0_18 = arith.constant 0 : index
    %15 = vector.load %arg6[%c0_17, %c0_18] : memref<32x32xf32, #tpu.memory_space<vmem>>, vector<32x32xf32>
    %cst = arith.constant dense<0.000000e+00> : vector<8x32xf32>
    %16 = tpu.matmul %6, %15, %cst {dimension_numbers = #tpu.dot_dimension_numbers<[1], [0], [0], [1], [0, 0, 1, 1], [], []>} : vector<8x32xf32>, vector<32x32xf32>, vector<8x32xf32> -> vector<8x32xf32>
    %c0_19 = arith.constant 0 : index
    %c0_20 = arith.constant 0 : index
    %17 = vector.load %arg7[%c0_19, %c0_20] : memref<1x32xf32, #tpu.memory_space<vmem>>, vector<1x32xf32>
    %18 = vector.broadcast %17 : vector<1x32xf32> to vector<8x32xf32>
    %19 = arith.addf %16, %18 : vector<8x32xf32>
    %c0_21 = arith.constant 0 : index
    %c0_22 = arith.constant 0 : index
    %20 = vector.load %arg8[%c0_21, %c0_22] : memref<32x32xf32, #tpu.memory_space<vmem>>, vector<32x32xf32>
    %cst_23 = arith.constant dense<0.000000e+00> : vector<8x32xf32>
    %21 = tpu.matmul %8, %20, %cst_23 {dimension_numbers = #tpu.dot_dimension_numbers<[1], [0], [0], [1], [0, 0, 1, 1], [], []>} : vector<8x32xf32>, vector<32x32xf32>, vector<8x32xf32> -> vector<8x32xf32>
    %c0_24 = arith.constant 0 : index
    %c0_25 = arith.constant 0 : index
    %22 = vector.load %arg9[%c0_24, %c0_25] : memref<1x32xf32, #tpu.memory_space<vmem>>, vector<1x32xf32>
    %23 = vector.broadcast %22 : vector<1x32xf32> to vector<8x32xf32>
    %24 = arith.addf %21, %23 : vector<8x32xf32>
    %c0_26 = arith.constant 0 : index
    %c0_27 = arith.constant 0 : index
    %25 = vector.load %arg10[%c0_26, %c0_27] : memref<32x32xf32, #tpu.memory_space<vmem>>, vector<32x32xf32>
    %cst_28 = arith.constant dense<0.000000e+00> : vector<8x32xf32>
    %26 = tpu.matmul %8, %25, %cst_28 {dimension_numbers = #tpu.dot_dimension_numbers<[1], [0], [0], [1], [0, 0, 1, 1], [], []>} : vector<8x32xf32>, vector<32x32xf32>, vector<8x32xf32> -> vector<8x32xf32>
    %c0_29 = arith.constant 0 : index
    %c0_30 = arith.constant 0 : index
    %27 = vector.load %arg11[%c0_29, %c0_30] : memref<1x32xf32, #tpu.memory_space<vmem>>, vector<1x32xf32>
    %28 = vector.broadcast %27 : vector<1x32xf32> to vector<8x32xf32>
    %29 = arith.addf %26, %28 : vector<8x32xf32>
    %30 = vector.shape_cast %19 : vector<8x32xf32> to vector<8x4x8xf32>
    %31 = tpu.transpose %30, [1, 0, 2] : vector<8x4x8xf32> -> vector<4x8x8xf32>
    %32 = vector.shape_cast %24 : vector<8x32xf32> to vector<8x4x8xf32>
    %33 = tpu.transpose %32, [1, 0, 2] : vector<8x4x8xf32> -> vector<4x8x8xf32>
    %34 = vector.shape_cast %29 : vector<8x32xf32> to vector<8x4x8xf32>
    %35 = tpu.transpose %34, [1, 0, 2] : vector<8x4x8xf32> -> vector<4x8x8xf32>
    %cst_31 = arith.constant dense<0.000000e+00> : vector<4x8x8xf32>
    %36 = tpu.matmul %31, %33, %cst_31 {dimension_numbers = #tpu.dot_dimension_numbers<[2], [2], [1], [1], [0, 0, 0, 1, 1, 1], [0], [0]>} : vector<4x8x8xf32>, vector<4x8x8xf32>, vector<4x8x8xf32> -> vector<4x8x8xf32>
    %37 = vector.shape_cast %12 : vector<8x8xf32> to vector<1x8x8xf32>
    %38 = vector.broadcast %37 : vector<1x8x8xf32> to vector<4x8x8xf32>
    %39 = arith.addf %36, %38 : vector<4x8x8xf32>
    %cst_32 = arith.constant dense<0xFF800000> : vector<4x8xf32>
    %40 = vector.multi_reduction <maximumf>, %39, %cst_32 [2] : vector<4x8x8xf32> to vector<4x8xf32>
    %41 = vector.shape_cast %40 : vector<4x8xf32> to vector<4x8x1xf32>
    %42 = vector.broadcast %41 : vector<4x8x1xf32> to vector<4x8x8xf32>
    %43 = arith.subf %39, %42 : vector<4x8x8xf32>
    %44 = math.exp %43 : vector<4x8x8xf32>
    %cst_33 = arith.constant dense<0.000000e+00> : vector<4x8xf32>
    %45 = vector.multi_reduction <add>, %44, %cst_33 [2] : vector<4x8x8xf32> to vector<4x8xf32>
    %46 = vector.shape_cast %45 : vector<4x8xf32> to vector<4x8x1xf32>
    %47 = tpu.reciprocal %46 {approx = true} : vector<4x8x1xf32> -> vector<4x8x1xf32>
    %48 = vector.broadcast %47 : vector<4x8x1xf32> to vector<4x8x8xf32>
    %49 = arith.mulf %44, %48 : vector<4x8x8xf32>
    %cst_34 = arith.constant dense<0.000000e+00> : vector<4x8x8xf32>
    %50 = tpu.matmul %49, %35, %cst_34 {dimension_numbers = #tpu.dot_dimension_numbers<[2], [1], [1], [2], [0, 0, 0, 1, 1, 2], [0], [0]>} : vector<4x8x8xf32>, vector<4x8x8xf32>, vector<4x8x8xf32> -> vector<4x8x8xf32>
    %51 = tpu.transpose %50, [1, 0, 2] : vector<4x8x8xf32> -> vector<8x4x8xf32>
    %52 = vector.shape_cast %51 : vector<8x4x8xf32> to vector<8x32xf32>
    %c0_35 = arith.constant 0 : index
    %c0_36 = arith.constant 0 : index
    %53 = vector.load %arg12[%c0_35, %c0_36] : memref<32x32xf32, #tpu.memory_space<vmem>>, vector<32x32xf32>
    %cst_37 = arith.constant dense<0.000000e+00> : vector<8x32xf32>
    %54 = tpu.matmul %52, %53, %cst_37 {dimension_numbers = #tpu.dot_dimension_numbers<[1], [0], [0], [1], [0, 0, 1, 1], [], []>} : vector<8x32xf32>, vector<32x32xf32>, vector<8x32xf32> -> vector<8x32xf32>
    %c0_38 = arith.constant 0 : index
    %c0_39 = arith.constant 0 : index
    %55 = vector.load %arg13[%c0_38, %c0_39] : memref<1x32xf32, #tpu.memory_space<vmem>>, vector<1x32xf32>
    %56 = vector.broadcast %55 : vector<1x32xf32> to vector<8x32xf32>
    %57 = arith.addf %54, %56 : vector<8x32xf32>
    %58 = arith.addf %6, %57 : vector<8x32xf32>
    %cst_40 = arith.constant dense<0.000000e+00> : vector<8xf32>
    %59 = vector.multi_reduction <add>, %58, %cst_40 [1] : vector<8x32xf32> to vector<8xf32>
    %60 = vector.shape_cast %59 : vector<8xf32> to vector<8x1xf32>
    %cst_41 = arith.constant 3.200000e+01 : f32
    %61 = vector.broadcast %cst_41 : f32 to vector<8x1xf32>
    %62 = arith.divf %60, %61 : vector<8x1xf32>
    %63 = vector.broadcast %62 : vector<8x1xf32> to vector<8x32xf32>
    %64 = arith.subf %58, %63 : vector<8x32xf32>
    %65 = arith.mulf %64, %64 : vector<8x32xf32>
    %cst_42 = arith.constant dense<0.000000e+00> : vector<8xf32>
    %66 = vector.multi_reduction <add>, %65, %cst_42 [1] : vector<8x32xf32> to vector<8xf32>
    %67 = vector.shape_cast %66 : vector<8xf32> to vector<8x1xf32>
    %cst_43 = arith.constant 3.200000e+01 : f32
    %68 = vector.broadcast %cst_43 : f32 to vector<8x1xf32>
    %69 = arith.divf %67, %68 : vector<8x1xf32>
    %70 = vector.broadcast %62 : vector<8x1xf32> to vector<8x32xf32>
    %71 = arith.subf %58, %70 : vector<8x32xf32>
    %cst_44 = arith.constant 9.99999974E-6 : f32
    %72 = vector.broadcast %cst_44 : f32 to vector<8x1xf32>
    %73 = arith.addf %69, %72 : vector<8x1xf32>
    %74 = math.rsqrt %73 : vector<8x1xf32>
    %75 = vector.broadcast %74 : vector<8x1xf32> to vector<8x32xf32>
    %76 = arith.mulf %71, %75 : vector<8x32xf32>
    %77 = vector.broadcast %0 : vector<1x32xf32> to vector<8x32xf32>
    %78 = arith.mulf %76, %77 : vector<8x32xf32>
    %79 = vector.broadcast %1 : vector<1x32xf32> to vector<8x32xf32>
    %80 = arith.addf %78, %79 : vector<8x32xf32>
    %c0_45 = arith.constant 0 : index
    %c0_46 = arith.constant 0 : index
    %81 = vector.load %arg14[%c0_45, %c0_46] : memref<32x32xf32, #tpu.memory_space<vmem>>, vector<32x32xf32>
    %cst_47 = arith.constant dense<0.000000e+00> : vector<8x32xf32>
    %82 = tpu.matmul %80, %81, %cst_47 {dimension_numbers = #tpu.dot_dimension_numbers<[1], [0], [0], [1], [0, 0, 1, 1], [], []>} : vector<8x32xf32>, vector<32x32xf32>, vector<8x32xf32> -> vector<8x32xf32>
    %c0_48 = arith.constant 0 : index
    %c0_49 = arith.constant 0 : index
    %83 = vector.load %arg15[%c0_48, %c0_49] : memref<1x32xf32, #tpu.memory_space<vmem>>, vector<1x32xf32>
    %84 = vector.broadcast %83 : vector<1x32xf32> to vector<8x32xf32>
    %85 = arith.addf %82, %84 : vector<8x32xf32>
    %c0_50 = arith.constant 0 : index
    %c0_51 = arith.constant 0 : index
    %86 = vector.load %arg16[%c0_50, %c0_51] : memref<32x32xf32, #tpu.memory_space<vmem>>, vector<32x32xf32>
    %cst_52 = arith.constant dense<0.000000e+00> : vector<16x32xf32>
    %87 = tpu.matmul %10, %86, %cst_52 {dimension_numbers = #tpu.dot_dimension_numbers<[1], [0], [0], [1], [0, 0, 1, 1], [], []>} : vector<16x32xf32>, vector<32x32xf32>, vector<16x32xf32> -> vector<16x32xf32>
    %c0_53 = arith.constant 0 : index
    %c0_54 = arith.constant 0 : index
    %88 = vector.load %arg17[%c0_53, %c0_54] : memref<1x32xf32, #tpu.memory_space<vmem>>, vector<1x32xf32>
    %89 = vector.broadcast %88 : vector<1x32xf32> to vector<16x32xf32>
    %90 = arith.addf %87, %89 : vector<16x32xf32>
    %c0_55 = arith.constant 0 : index
    %c0_56 = arith.constant 0 : index
    %91 = vector.load %arg18[%c0_55, %c0_56] : memref<32x32xf32, #tpu.memory_space<vmem>>, vector<32x32xf32>
    %cst_57 = arith.constant dense<0.000000e+00> : vector<16x32xf32>
    %92 = tpu.matmul %10, %91, %cst_57 {dimension_numbers = #tpu.dot_dimension_numbers<[1], [0], [0], [1], [0, 0, 1, 1], [], []>} : vector<16x32xf32>, vector<32x32xf32>, vector<16x32xf32> -> vector<16x32xf32>
    %c0_58 = arith.constant 0 : index
    %c0_59 = arith.constant 0 : index
    %93 = vector.load %arg19[%c0_58, %c0_59] : memref<1x32xf32, #tpu.memory_space<vmem>>, vector<1x32xf32>
    %94 = vector.broadcast %93 : vector<1x32xf32> to vector<16x32xf32>
    %95 = arith.addf %92, %94 : vector<16x32xf32>
    %96 = vector.shape_cast %85 : vector<8x32xf32> to vector<8x4x8xf32>
    %97 = tpu.transpose %96, [1, 0, 2] : vector<8x4x8xf32> -> vector<4x8x8xf32>
    %98 = vector.shape_cast %90 : vector<16x32xf32> to vector<16x4x8xf32>
    %99 = tpu.transpose %98, [1, 0, 2] : vector<16x4x8xf32> -> vector<4x16x8xf32>
    %100 = vector.shape_cast %95 : vector<16x32xf32> to vector<16x4x8xf32>
    %101 = tpu.transpose %100, [1, 0, 2] : vector<16x4x8xf32> -> vector<4x16x8xf32>
    %cst_60 = arith.constant dense<0.000000e+00> : vector<4x8x16xf32>
    %102 = tpu.matmul %97, %99, %cst_60 {dimension_numbers = #tpu.dot_dimension_numbers<[2], [2], [1], [1], [0, 0, 0, 1, 1, 1], [0], [0]>} : vector<4x8x8xf32>, vector<4x16x8xf32>, vector<4x8x16xf32> -> vector<4x8x16xf32>
    %103 = vector.shape_cast %14 : vector<1x16xf32> to vector<1x1x16xf32>
    %104 = vector.broadcast %103 : vector<1x1x16xf32> to vector<4x8x16xf32>
    %105 = arith.addf %102, %104 : vector<4x8x16xf32>
    %cst_61 = arith.constant dense<0xFF800000> : vector<4x8xf32>
    %106 = vector.multi_reduction <maximumf>, %105, %cst_61 [2] : vector<4x8x16xf32> to vector<4x8xf32>
    %107 = vector.shape_cast %106 : vector<4x8xf32> to vector<4x8x1xf32>
    %108 = vector.broadcast %107 : vector<4x8x1xf32> to vector<4x8x16xf32>
    %109 = arith.subf %105, %108 : vector<4x8x16xf32>
    %110 = math.exp %109 : vector<4x8x16xf32>
    %cst_62 = arith.constant dense<0.000000e+00> : vector<4x8xf32>
    %111 = vector.multi_reduction <add>, %110, %cst_62 [2] : vector<4x8x16xf32> to vector<4x8xf32>
    %112 = vector.shape_cast %111 : vector<4x8xf32> to vector<4x8x1xf32>
    %113 = tpu.reciprocal %112 : vector<4x8x1xf32> -> vector<4x8x1xf32>
    %114 = vector.broadcast %113 : vector<4x8x1xf32> to vector<4x8x16xf32>
    %115 = arith.mulf %110, %114 : vector<4x8x16xf32>
    %cst_63 = arith.constant dense<0.000000e+00> : vector<4x8x8xf32>
    %116 = tpu.matmul %115, %101, %cst_63 {dimension_numbers = #tpu.dot_dimension_numbers<[2], [1], [1], [2], [0, 0, 0, 1, 1, 2], [0], [0]>} : vector<4x8x16xf32>, vector<4x16x8xf32>, vector<4x8x8xf32> -> vector<4x8x8xf32>
    %117 = tpu.transpose %116, [1, 0, 2] : vector<4x8x8xf32> -> vector<8x4x8xf32>
    %118 = vector.shape_cast %117 : vector<8x4x8xf32> to vector<8x32xf32>
    %c0_64 = arith.constant 0 : index
    %c0_65 = arith.constant 0 : index
    %119 = vector.load %arg20[%c0_64, %c0_65] : memref<32x32xf32, #tpu.memory_space<vmem>>, vector<32x32xf32>
    %cst_66 = arith.constant dense<0.000000e+00> : vector<8x32xf32>
    %120 = tpu.matmul %118, %119, %cst_66 {dimension_numbers = #tpu.dot_dimension_numbers<[1], [0], [0], [1], [0, 0, 1, 1], [], []>} : vector<8x32xf32>, vector<32x32xf32>, vector<8x32xf32> -> vector<8x32xf32>
    %c0_67 = arith.constant 0 : index
    %c0_68 = arith.constant 0 : index
    %121 = vector.load %arg21[%c0_67, %c0_68] : memref<1x32xf32, #tpu.memory_space<vmem>>, vector<1x32xf32>
    %122 = vector.broadcast %121 : vector<1x32xf32> to vector<8x32xf32>
    %123 = arith.addf %120, %122 : vector<8x32xf32>
    %c0_69 = arith.constant 0 : index
    %c0_70 = arith.constant 0 : index
    %c0_71 = arith.constant 0 : index
    %c0_72 = arith.constant 0 : index
    %124 = vector.load %arg29[%c0_69, %c0_70, %c0_71, %c0_72] : memref<1x4x8x16xf32, #tpu.memory_space<vmem>>, vector<1x4x8x16xf32>
    %125 = vector.shape_cast %124 : vector<1x4x8x16xf32> to vector<4x8x16xf32>
    %126 = vector.shape_cast %115 : vector<4x8x16xf32> to vector<1x4x8x16xf32>
    tpu.vector_store %arg29[%c0_69, %c0_70, %c0_71, %c0_72], %126 {strides = array<i32>} : memref<1x4x8x16xf32, #tpu.memory_space<vmem>>, vector<1x4x8x16xf32>,
    %127 = arith.addf %80, %123 : vector<8x32xf32>
    %cst_73 = arith.constant dense<0.000000e+00> : vector<8xf32>
    %128 = vector.multi_reduction <add>, %127, %cst_73 [1] : vector<8x32xf32> to vector<8xf32>
    %129 = vector.shape_cast %128 : vector<8xf32> to vector<8x1xf32>
    %cst_74 = arith.constant 3.200000e+01 : f32
    %130 = vector.broadcast %cst_74 : f32 to vector<8x1xf32>
    %131 = arith.divf %129, %130 : vector<8x1xf32>
    %132 = vector.broadcast %131 : vector<8x1xf32> to vector<8x32xf32>
    %133 = arith.subf %127, %132 : vector<8x32xf32>
    %134 = arith.mulf %133, %133 : vector<8x32xf32>
    %cst_75 = arith.constant dense<0.000000e+00> : vector<8xf32>
    %135 = vector.multi_reduction <add>, %134, %cst_75 [1] : vector<8x32xf32> to vector<8xf32>
    %136 = vector.shape_cast %135 : vector<8xf32> to vector<8x1xf32>
    %cst_76 = arith.constant 3.200000e+01 : f32
    %137 = vector.broadcast %cst_76 : f32 to vector<8x1xf32>
    %138 = arith.divf %136, %137 : vector<8x1xf32>
    %139 = vector.broadcast %131 : vector<8x1xf32> to vector<8x32xf32>
    %140 = arith.subf %127, %139 : vector<8x32xf32>
    %cst_77 = arith.constant 9.99999974E-6 : f32
    %141 = vector.broadcast %cst_77 : f32 to vector<8x1xf32>
    %142 = arith.addf %138, %141 : vector<8x1xf32>
    %143 = math.rsqrt %142 : vector<8x1xf32>
    %144 = vector.broadcast %143 : vector<8x1xf32> to vector<8x32xf32>
    %145 = arith.mulf %140, %144 : vector<8x32xf32>
    %146 = vector.broadcast %0 : vector<1x32xf32> to vector<8x32xf32>
    %147 = arith.mulf %145, %146 : vector<8x32xf32>
    %148 = vector.broadcast %1 : vector<1x32xf32> to vector<8x32xf32>
    %149 = arith.addf %147, %148 : vector<8x32xf32>
    %c0_78 = arith.constant 0 : index
    %c0_79 = arith.constant 0 : index
    %150 = vector.load %arg22[%c0_78, %c0_79] : memref<32x64xf32, #tpu.memory_space<vmem>>, vector<32x64xf32>
    %cst_80 = arith.constant dense<0.000000e+00> : vector<8x64xf32>
    %151 = tpu.matmul %149, %150, %cst_80 {dimension_numbers = #tpu.dot_dimension_numbers<[1], [0], [0], [1], [0, 0, 1, 1], [], []>} : vector<8x32xf32>, vector<32x64xf32>, vector<8x64xf32> -> vector<8x64xf32>
    %c0_81 = arith.constant 0 : index
    %c0_82 = arith.constant 0 : index
    %152 = vector.load %arg23[%c0_81, %c0_82] : memref<1x64xf32, #tpu.memory_space<vmem>>, vector<1x64xf32>
    %153 = vector.broadcast %152 : vector<1x64xf32> to vector<8x64xf32>
    %154 = arith.addf %151, %153 : vector<8x64xf32>
    %cst_83 = arith.constant 0.000000e+00 : f32
    %155 = vector.broadcast %cst_83 : f32 to vector<8x64xf32>
    %156 = arith.maximumf %154, %155 : vector<8x64xf32>
    %c0_84 = arith.constant 0 : index
    %c0_85 = arith.constant 0 : index
    %157 = vector.load %arg24[%c0_84, %c0_85] : memref<64x32xf32, #tpu.memory_space<vmem>>, vector<64x32xf32>
    %cst_86 = arith.constant dense<0.000000e+00> : vector<8x32xf32>
    %158 = tpu.matmul %156, %157, %cst_86 {dimension_numbers = #tpu.dot_dimension_numbers<[1], [0], [0], [1], [0, 0, 1, 1], [], []>} : vector<8x64xf32>, vector<64x32xf32>, vector<8x32xf32> -> vector<8x32xf32>
    %c0_87 = arith.constant 0 : index
    %c0_88 = arith.constant 0 : index
    %159 = vector.load %arg25[%c0_87, %c0_88] : memref<1x32xf32, #tpu.memory_space<vmem>>, vector<1x32xf32>
    %160 = vector.broadcast %159 : vector<1x32xf32> to vector<8x32xf32>
    %161 = arith.addf %158, %160 : vector<8x32xf32>
    %162 = arith.addf %149, %161 : vector<8x32xf32>
    %cst_89 = arith.constant dense<0.000000e+00> : vector<8xf32>
    %163 = vector.multi_reduction <add>, %162, %cst_89 [1] : vector<8x32xf32> to vector<8xf32>
    %164 = vector.shape_cast %163 : vector<8xf32> to vector<8x1xf32>
    %cst_90 = arith.constant 3.200000e+01 : f32
    %165 = vector.broadcast %cst_90 : f32 to vector<8x1xf32>
    %166 = arith.divf %164, %165 : vector<8x1xf32>
    %167 = vector.broadcast %166 : vector<8x1xf32> to vector<8x32xf32>
    %168 = arith.subf %162, %167 : vector<8x32xf32>
    %169 = arith.mulf %168, %168 : vector<8x32xf32>
    %cst_91 = arith.constant dense<0.000000e+00> : vector<8xf32>
    %170 = vector.multi_reduction <add>, %169, %cst_91 [1] : vector<8x32xf32> to vector<8xf32>
    %171 = vector.shape_cast %170 : vector<8xf32> to vector<8x1xf32>
    %cst_92 = arith.constant 3.200000e+01 : f32
    %172 = vector.broadcast %cst_92 : f32 to vector<8x1xf32>
    %173 = arith.divf %171, %172 : vector<8x1xf32>
    %174 = vector.broadcast %166 : vector<8x1xf32> to vector<8x32xf32>
    %175 = arith.subf %162, %174 : vector<8x32xf32>
    %cst_93 = arith.constant 9.99999974E-6 : f32
    %176 = vector.broadcast %cst_93 : f32 to vector<8x1xf32>
    %177 = arith.addf %173, %176 : vector<8x1xf32>
    %178 = math.rsqrt %177 : vector<8x1xf32>
    %179 = vector.broadcast %178 : vector<8x1xf32> to vector<8x32xf32>
    %180 = arith.mulf %175, %179 : vector<8x32xf32>
    %181 = vector.broadcast %0 : vector<1x32xf32> to vector<8x32xf32>
    %182 = arith.mulf %180, %181 : vector<8x32xf32>
    %183 = vector.broadcast %1 : vector<1x32xf32> to vector<8x32xf32>
    %184 = arith.addf %182, %183 : vector<8x32xf32>
    %c0_94 = arith.constant 0 : index
    %c0_95 = arith.constant 0 : index
    %c0_96 = arith.constant 0 : index
    %185 = vector.load %arg28[%c0_94, %c0_95, %c0_96] : memref<1x8x32xf32, #tpu.memory_space<vmem>>, vector<1x8x32xf32>
    %186 = vector.shape_cast %185 : vector<1x8x32xf32> to vector<8x32xf32>
    %187 = vector.shape_cast %184 : vector<8x32xf32> to vector<1x8x32xf32>
    tpu.vector_store %arg28[%c0_94, %c0_95, %c0_96], %187 {strides = array<i32>} : memref<1x8x32xf32, #tpu.memory_space<vmem>>, vector<1x8x32xf32>,
    return
  }
  func.func @transform_0(%arg0: i32, %arg1: i32) -> (i32, i32, i32) {
    %c0_i32 = arith.constant 0 : i32
    %c0_i32_0 = arith.constant 0 : i32
    %c0_i32_1 = arith.constant 0 : i32
    return %arg0, %c0_i32, %c0_i32_0 : i32, i32, i32
  }
  func.func @transform_1(%arg0: i32, %arg1: i32) -> (i32, i32, i32) {
    %c0_i32 = arith.constant 0 : i32
    %c0_i32_0 = arith.constant 0 : i32
    %c0_i32_1 = arith.constant 0 : i32
    return %arg0, %c0_i32, %c0_i32_0 : i32, i32, i32
  }
  func.func @transform_2(%arg0: i32, %arg1: i32) -> (i32, i32, i32) {
    %c0_i32 = arith.constant 0 : i32
    %c0_i32_0 = arith.constant 0 : i32
    return %arg0, %arg1, %c0_i32 : i32, i32, i32
  }
  func.func @transform_3(%arg0: i32, %arg1: i32) -> (i32, i32, i32) {
    %c0_i32 = arith.constant 0 : i32
    %c0_i32_0 = arith.constant 0 : i32
    %c0_i32_1 = arith.constant 0 : i32
    return %arg0, %c0_i32, %c0_i32_0 : i32, i32, i32
  }
  func.func @transform_4(%arg0: i32, %arg1: i32) -> (i32, i32) {
    %c0_i32 = arith.constant 0 : i32
    %c0_i32_0 = arith.constant 0 : i32
    %c0_i32_1 = arith.constant 0 : i32
    return %c0_i32, %c0_i32_0 : i32, i32
  }
  func.func @transform_5(%arg0: i32, %arg1: i32) -> (i32, i32) {
    %c0_i32 = arith.constant 0 : i32
    %c0_i32_0 = arith.constant 0 : i32
    %c0_i32_1 = arith.constant 0 : i32
    return %c0_i32, %c0_i32_0 : i32, i32
  }
  func.func @transform_6(%arg0: i32, %arg1: i32) -> (i32, i32) {
    %c0_i32 = arith.constant 0 : i32
    %c0_i32_0 = arith.constant 0 : i32
    %c0_i32_1 = arith.constant 0 : i32
    return %c0_i32, %c0_i32_0 : i32, i32
  }
  func.func @transform_7(%arg0: i32, %arg1: i32) -> (i32, i32) {
    %c0_i32 = arith.constant 0 : i32
    %c0_i32_0 = arith.constant 0 : i32
    %c0_i32_1 = arith.constant 0 : i32
    return %c0_i32, %c0_i32_0 : i32, i32
  }
  func.func @transform_8(%arg0: i32, %arg1: i32) -> (i32, i32) {
    %c0_i32 = arith.constant 0 : i32
    %c0_i32_0 = arith.constant 0 : i32
    %c0_i32_1 = arith.constant 0 : i32
    return %c0_i32, %c0_i32_0 : i32, i32
  }
  func.func @transform_9(%arg0: i32, %arg1: i32) -> (i32, i32) {
    %c0_i32 = arith.constant 0 : i32
    %c0_i32_0 = arith.constant 0 : i32
    %c0_i32_1 = arith.constant 0 : i32
    return %c0_i32, %c0_i32_0 : i32, i32
  }
  func.func @transform_10(%arg0: i32, %arg1: i32) -> (i32, i32) {
    %c0_i32 = arith.constant 0 : i32
    %c0_i32_0 = arith.constant 0 : i32
    %c0_i32_1 = arith.constant 0 : i32
    return %c0_i32, %c0_i32_0 : i32, i32
  }
  func.func @transform_11(%arg0: i32, %arg1: i32) -> (i32, i32) {
    %c0_i32 = arith.constant 0 : i32
    %c0_i32_0 = arith.constant 0 : i32
    %c0_i32_1 = arith.constant 0 : i32
    return %c0_i32, %c0_i32_0 : i32, i32
  }
  func.func @transform_12(%arg0: i32, %arg1: i32) -> (i32, i32) {
    %c0_i32 = arith.constant 0 : i32
    %c0_i32_0 = arith.constant 0 : i32
    %c0_i32_1 = arith.constant 0 : i32
    return %c0_i32, %c0_i32_0 : i32, i32
  }
  func.func @transform_13(%arg0: i32, %arg1: i32) -> (i32, i32) {
    %c0_i32 = arith.constant 0 : i32
    %c0_i32_0 = arith.constant 0 : i32
    %c0_i32_1 = arith.constant 0 : i32
    return %c0_i32, %c0_i32_0 : i32, i32
  }
  func.func @transform_14(%arg0: i32, %arg1: i32) -> (i32, i32) {
    %c0_i32 = arith.constant 0 : i32
    %c0_i32_0 = arith.constant 0 : i32
    %c0_i32_1 = arith.constant 0 : i32
    return %c0_i32, %c0_i32_0 : i32, i32
  }
  func.func @transform_15(%arg0: i32, %arg1: i32) -> (i32, i32) {
    %c0_i32 = arith.constant 0 : i32
    %c0_i32_0 = arith.constant 0 : i32
    %c0_i32_1 = arith.constant 0 : i32
    return %c0_i32, %c0_i32_0 : i32, i32
  }
  func.func @transform_16(%arg0: i32, %arg1: i32) -> (i32, i32) {
    %c0_i32 = arith.constant 0 : i32
    %c0_i32_0 = arith.constant 0 : i32
    %c0_i32_1 = arith.constant 0 : i32
    return %c0_i32, %c0_i32_0 : i32, i32
  }
  func.func @transform_17(%arg0: i32, %arg1: i32) -> (i32, i32) {
    %c0_i32 = arith.constant 0 : i32
    %c0_i32_0 = arith.constant 0 : i32
    %c0_i32_1 = arith.constant 0 : i32
    return %c0_i32, %c0_i32_0 : i32, i32
  }
  func.func @transform_18(%arg0: i32, %arg1: i32) -> (i32, i32) {
    %c0_i32 = arith.constant 0 : i32
    %c0_i32_0 = arith.constant 0 : i32
    %c0_i32_1 = arith.constant 0 : i32
    return %c0_i32, %c0_i32_0 : i32, i32
  }
  func.func @transform_19(%arg0: i32, %arg1: i32) -> (i32, i32) {
    %c0_i32 = arith.constant 0 : i32
    %c0_i32_0 = arith.constant 0 : i32
    %c0_i32_1 = arith.constant 0 : i32
    return %c0_i32, %c0_i32_0 : i32, i32
  }
  func.func @transform_20(%arg0: i32, %arg1: i32) -> (i32, i32) {
    %c0_i32 = arith.constant 0 : i32
    %c0_i32_0 = arith.constant 0 : i32
    %c0_i32_1 = arith.constant 0 : i32
    return %c0_i32, %c0_i32_0 : i32, i32
  }
  func.func @transform_21(%arg0: i32, %arg1: i32) -> (i32, i32) {
    %c0_i32 = arith.constant 0 : i32
    %c0_i32_0 = arith.constant 0 : i32
    %c0_i32_1 = arith.constant 0 : i32
    return %c0_i32, %c0_i32_0 : i32, i32
  }
  func.func @transform_22(%arg0: i32, %arg1: i32) -> (i32, i32) {
    %c0_i32 = arith.constant 0 : i32
    %c0_i32_0 = arith.constant 0 : i32
    %c0_i32_1 = arith.constant 0 : i32
    return %c0_i32, %c0_i32_0 : i32, i32
  }
  func.func @transform_23(%arg0: i32, %arg1: i32) -> (i32, i32) {
    %c0_i32 = arith.constant 0 : i32
    %c0_i32_0 = arith.constant 0 : i32
    %c0_i32_1 = arith.constant 0 : i32
    return %c0_i32, %c0_i32_0 : i32, i32
  }
  func.func @transform_24(%arg0: i32, %arg1: i32) -> (i32, i32) {
    %c0_i32 = arith.constant 0 : i32
    %c0_i32_0 = arith.constant 0 : i32
    %c0_i32_1 = arith.constant 0 : i32
    return %c0_i32, %c0_i32_0 : i32, i32
  }
  func.func @transform_25(%arg0: i32, %arg1: i32) -> (i32, i32) {
    %c0_i32 = arith.constant 0 : i32
    %c0_i32_0 = arith.constant 0 : i32
    %c0_i32_1 = arith.constant 0 : i32
    return %c0_i32, %c0_i32_0 : i32, i32
  }
  func.func @transform_26(%arg0: i32, %arg1: i32) -> (i32, i32, i32) {
    %c0_i32 = arith.constant 0 : i32
    %c0_i32_0 = arith.constant 0 : i32
    return %arg0, %arg1, %c0_i32 : i32, i32, i32
  }
  func.func @transform_27(%arg0: i32, %arg1: i32) -> (i32, i32, i32, i32) {
    %c0_i32 = arith.constant 0 : i32
    %c0_i32_0 = arith.constant 0 : i32
    %c0_i32_1 = arith.constant 0 : i32
    return %arg0, %c0_i32, %arg1, %c0_i32_0 : i32, i32, i32, i32
  }
}

</mosaic_0001>

<llo_original>
// kernel: tpu_custom_call.1
$region0: #{tpu_custom_call.1}
  #allocation0 [shape = 'u32[]', space=smem, size = 0x4, offset = 0x4, fixed_abs, tag = 'smem constant byte address 0x4 - core index']
  #allocation1 [shape = 'u32[72,128]{1,0:T(1,128)}', space=vmem, size = 0x9000, scoped, tag = 'internal scratch']
  %s0 = inlined_call_operand.hbm [shape: f32[2,8,32], index: 0, kind: input, shape index: {}]
  %s1 = inlined_call_operand.vmem [shape: f32[2,16,32], index: 1, kind: input, shape index: {}]
  %s2 = inlined_call_operand.hbm [shape: f32[2,8,8], index: 2, kind: input, shape index: {}]
  %s3 = inlined_call_operand.hbm [shape: f32[2,1,16], index: 3, kind: input, shape index: {}]
  %s4 = inlined_call_operand.vmem [shape: f32[32,32], index: 4, kind: input, shape index: {}]
  %s5 = inlined_call_operand.vmem [shape: f32[1,32], index: 5, kind: input, shape index: {}]
  %s6 = inlined_call_operand.vmem [shape: f32[32,32], index: 6, kind: input, shape index: {}]
  %s7 = inlined_call_operand.vmem [shape: f32[1,32], index: 7, kind: input, shape index: {}]
  %s8 = inlined_call_operand.hbm [shape: f32[32,32], index: 8, kind: input, shape index: {}]
  %s9 = inlined_call_operand.vmem [shape: f32[1,32], index: 9, kind: input, shape index: {}]
  %s10 = inlined_call_operand.hbm [shape: f32[32,32], index: 10, kind: input, shape index: {}]
  %s11 = inlined_call_operand.vmem [shape: f32[1,32], index: 11, kind: input, shape index: {}]
  %s12 = inlined_call_operand.hbm [shape: f32[32,32], index: 12, kind: input, shape index: {}]
  %s13 = inlined_call_operand.vmem [shape: f32[1,32], index: 13, kind: input, shape index: {}]
  %s14 = inlined_call_operand.hbm [shape: f32[32,32], index: 14, kind: input, shape index: {}]
  %s15 = inlined_call_operand.vmem [shape: f32[1,32], index: 15, kind: input, shape index: {}]
  %s16 = inlined_call_operand.hbm [shape: f32[32,32], index: 16, kind: input, shape index: {}]
  %s17 = inlined_call_operand.vmem [shape: f32[1,32], index: 17, kind: input, shape index: {}]
  %s18 = inlined_call_operand.hbm [shape: f32[32,32], index: 18, kind: input, shape index: {}]
  %s19 = inlined_call_operand.vmem [shape: f32[1,32], index: 19, kind: input, shape index: {}]
  %s20 = inlined_call_operand.hbm [shape: f32[32,64], index: 20, kind: input, shape index: {}]
  %s21 = inlined_call_operand.vmem [shape: f32[1,64], index: 21, kind: input, shape index: {}]
  %s22 = inlined_call_operand.vmem [shape: f32[64,32], index: 22, kind: input, shape index: {}]
  %s23 = inlined_call_operand.vmem [shape: f32[1,32], index: 23, kind: input, shape index: {}]
  %s24 = inlined_call_operand.vmem [shape: f32[1,32], index: 24, kind: input, shape index: {}]
  %s25 = inlined_call_operand.vmem [shape: f32[1,32], index: 25, kind: input, shape index: {}]
  %s26 = inlined_call_operand.hbm [shape: f32[2,8,32], index: 26, kind: output, shape index: {0}]
  %s27 = inlined_call_operand.hbm [shape: f32[2,4,8,16], index: 27, kind: output, shape index: {1}]
  %28 = xla_tuple %s26, %s27
  %s29 = sld [smem:[#allocation0]]
  $region185: #{tpu_custom_call.1} parent=0
    _
  %s31 = ssub.s32 1, %s29
  %s32 = scalar_select 0, %s31, %s29
  $region1: #{tpu_custom_call.1} parent=0
    #allocation2 [shape = 'u8[8192]{0}', space=vmem, size = 0x2000, scoped, tag = 'input window, operand 0']
    #allocation3 [shape = 's32[2]{0}', space=sflag, size = 0x8, scoped, tag = 'scoped memory for tpu_custom_call.1']
    #allocation4 [shape = 's32[2]{0}', space=sflag, size = 0x8, scoped, tag = 'scoped memory for tpu_custom_call.1']
    #allocation5 [shape = 'u8[8192]{0}', space=vmem, size = 0x2000, scoped, tag = 'input window, operand 2']
    #allocation6 [shape = 's32[2]{0}', space=sflag, size = 0x8, scoped, tag = 'scoped memory for tpu_custom_call.1']
    #allocation7 [shape = 'u8[1024]{0}', space=vmem, size = 0x400, scoped, tag = 'input window, operand 3']
    #allocation8 [shape = 'u8[16384]{0}', space=vmem, size = 0x4000, scoped, tag = 'input window, operand 8, single buffered']
    #allocation9 [shape = 's32[1]{0}', space=sflag, size = 0x4, scoped, tag = 'scoped memory for tpu_custom_call.1']
    #allocation10 [shape = 'u8[16384]{0}', space=vmem, size = 0x4000, scoped, tag = 'input window, operand 10, single buffered']
    #allocation11 [shape = 'u8[16384]{0}', space=vmem, size = 0x4000, scoped, tag = 'input window, operand 12, single buffered']
    #allocation12 [shape = 's32[1]{0}', space=sflag, size = 0x4, scoped, tag = 'scoped memory for tpu_custom_call.1']
    #allocation13 [shape = 'u8[16384]{0}', space=vmem, size = 0x4000, scoped, tag = 'input window, operand 14, single buffered']
    #allocation14 [shape = 'u8[16384]{0}', space=vmem, size = 0x4000, scoped, tag = 'input window, operand 16, single buffered']
    #allocation15 [shape = 's32[1]{0}', space=sflag, size = 0x4, scoped, tag = 'scoped memory for tpu_custom_call.1']
    #allocation16 [shape = 'u8[16384]{0}', space=vmem, size = 0x4000, scoped, tag = 'input window, operand 18, single buffered']
    #allocation17 [shape = 'u8[16384]{0}', space=vmem, size = 0x4000, scoped, tag = 'input window, operand 20, single buffered']
    #allocation18 [shape = 's32[1]{0}', space=sflag, size = 0x4, scoped, tag = 'scoped memory for tpu_custom_call.1']
    #allocation19 [shape = 'u8[8192]{0}', space=vmem, size = 0x2000, scoped, tag = 'output window, operand 0']
    #allocation20 [shape = 'u8[32768]{0}', space=vmem, size = 0x8000, scoped, tag = 'output window, operand 1']
    #allocation21 [shape = 's32[2]{0}', space=sflag, size = 0x8, scoped, tag = 'scoped memory for tpu_custom_call.1']
    %33 = vsyncpa [#allocation3], 0
    %s34 = scalar_lea.sflag [#allocation3], 1
    %35 = vsyncpa %s34, 0
    %36 = vsyncpa [#allocation6], 0
    %s37 = scalar_lea.sflag [#allocation6], 1
    %38 = vsyncpa %s37, 0
    %39 = vsyncpa [#allocation9], 0
    %40 = vsyncpa [#allocation12], 0
    %41 = vsyncpa [#allocation15], 0
    %42 = vsyncpa [#allocation18], 0
    %43 = vsyncpa [#allocation4], 0
    %s44 = scalar_lea.sflag [#allocation4], 1
    %45 = vsyncpa %s44, 0
    %46 = vsyncpa [#allocation21], 0
    %s47 = scalar_lea.sflag [#allocation21], 1
    %48 = vsyncpa %s47, 0
    loop: start=0, step=1, limit=4
    $region2: #{tpu_custom_call.1} parent=1 // loop_pre_header
      _
    $region3: #{tpu_custom_call.1} parent=1 // loop_header
      %s50 = sphi 0, %s54
      %p51 = scmp.ge.s32.totalorder %s50, 4
      %s57 = sphi 0, %s69
      %s58 = sphi 0, %s65
      %s59 = sphi 0, %s57
      %s60 = sphi 0, %s58
      %s61 = sphi 0, %s59
      %s62 = sphi 0, %s60
      %s72 = sphi 0, %s74
      %s75 = sphi 0, %s72
      %s76 = sphi 0, %s75
      %s92 = sphi 0, %s76
      %s98 = sphi 0, %s100
      %s101 = sphi 0, %s98
      %s102 = sphi 0, %s101
      %s118 = sphi 0, %s102
      %s126 = sphi 0, %s128
      %s129 = sphi 0, %s126
      %s130 = sphi 0, %s129
      %s146 = sphi 0, %s130
      %s152 = sphi 0, %s154
      %s155 = sphi 0, %s152
      %s156 = sphi 0, %s155
      %s172 = sphi 0, %s156
      %s176 = sphi 0, %s176
      %s178 = sphi 0, %s176
      %s179 = sphi 0, %s178
      %s193 = sphi 0, %s179
      %s197 = sphi 0, %s197
      %s199 = sphi 0, %s197
      %s200 = sphi 0, %s199
      %s214 = sphi 0, %s200
      %s218 = sphi 0, %s218
      %s220 = sphi 0, %s218
      %s221 = sphi 0, %s220
      %s235 = sphi 0, %s221
      %s239 = sphi 0, %s239
      %s241 = sphi 0, %s239
      %s242 = sphi 0, %s241
      %s256 = sphi 0, %s242
      %s260 = sphi 0, %s260
      %s262 = sphi 0, %s260
      %s263 = sphi 0, %s262
      %s277 = sphi 0, %s263
      %s281 = sphi 0, %s281
      %s283 = sphi 0, %s281
      %s284 = sphi 0, %s283
      %s298 = sphi 0, %s284
      %s302 = sphi 0, %s302
      %s304 = sphi 0, %s302
      %s305 = sphi 0, %s304
      %s319 = sphi 0, %s305
      %s323 = sphi 0, %s323
      %s325 = sphi 0, %s323
      %s326 = sphi 0, %s325
      %s340 = sphi 0, %s326
      %s344 = sphi 0, %s344
      %s346 = sphi 0, %s344
      %s347 = sphi 0, %s346
      %s361 = sphi 0, %s347
      %s365 = sphi 0, %s365
      %s367 = sphi 0, %s365
      %s368 = sphi 0, %s367
      %s382 = sphi 0, %s368
      %s386 = sphi 0, %s386
      %s388 = sphi 0, %s386
      %s389 = sphi 0, %s388
      %s403 = sphi 0, %s389
      %s407 = sphi 0, %s407
      %s409 = sphi 0, %s407
      %s410 = sphi 0, %s409
      %s424 = sphi 0, %s410
      %s428 = sphi 0, %s428
      %s430 = sphi 0, %s428
      %s431 = sphi 0, %s430
      %s445 = sphi 0, %s431
      %s449 = sphi 0, %s449
      %s451 = sphi 0, %s449
      %s452 = sphi 0, %s451
      %s466 = sphi 0, %s452
      %s470 = sphi 0, %s470
      %s472 = sphi 0, %s470
      %s473 = sphi 0, %s472
      %s487 = sphi 0, %s473
      %s491 = sphi 0, %s491
      %s493 = sphi 0, %s491
      %s494 = sphi 0, %s493
      %s508 = sphi 0, %s494
      %s512 = sphi 0, %s512
      %s514 = sphi 0, %s512
      %s515 = sphi 0, %s514
      %s529 = sphi 0, %s515
      %s533 = sphi 0, %s533
      %s535 = sphi 0, %s533
      %s536 = sphi 0, %s535
      %s550 = sphi 0, %s536
      %s554 = sphi 0, %s554
      %s556 = sphi 0, %s554
      %s557 = sphi 0, %s556
      %s571 = sphi 0, %s557
      %s575 = sphi 0, %s575
      %s577 = sphi 0, %s575
      %s578 = sphi 0, %s577
      %s592 = sphi 0, %s578
      %s596 = sphi 0, %s596
      %s598 = sphi 0, %s596
      %s599 = sphi 0, %s598
      %s613 = sphi 0, %s599
      %s617 = sphi 0, %s617
      %s619 = sphi 0, %s617
      %s620 = sphi 0, %s619
      %s634 = sphi 0, %s620
      %s642 = sphi 0, %s644
      %s645 = sphi 0, %s642
      %s646 = sphi 0, %s645
      %s662 = sphi 0, %s646
      %s670 = sphi 0, %s672
      %s673 = sphi 0, %s670
      %s674 = sphi 0, %s673
      %s690 = sphi 0, %s674
    $region4: #{tpu_custom_call.1} parent=1 // loop_header_branch
      %53 = sbr.rel (%p51) target = $region8
    $region5: #{tpu_custom_call.1} parent=1 // loop_body
      %s55 = ssub.s32 %s50, 1
      %s56 = ssub.s32 %s50, 2
      %s63 = sadd.s32 1, %s58
      %p64 = scmp.ge.s32.totalorder %s63, 1
      %s65 = scalar_select %p64, 0, %s63
      %s66 = sadd.s32 1, %s57
      %s67 = scalar_select %p64, %s66, %s57
      %p68 = scmp.ge.s32.totalorder %s67, 2
      %s69 = scalar_select %p68, 0, %s67
      %s70 = ssub.s32 %s57, %s69
      %p71 = scmp.eq.s32.totalorder %s70, 0
      %s73 = sadd.s32 %s72, 1
      %s74 = scalar_select %p71, %s72, %s73
      %p77 = pneg %p71
      %p78 = scmp.eq.s32.totalorder %s50, 1
      %p79 = por %p77, %p78
      %p80 = scmp.ne.s32.totalorder %s72, %s75
      %p81 = scmp.eq.s32.totalorder %s50, 0
      %p82 = por %p80, %p81
      %p83 = scmp.ne.s32.totalorder %s72, %s75
      %p84 = scmp.eq.s32.totalorder %s55, 1
      %p85 = por %p83, %p84
      %p86 = scmp.ne.s32.totalorder %s75, %s76
      %p87 = scmp.eq.s32.totalorder %s55, 0
      %p88 = por %p86, %p87
      %p89 = scmp.ne.s32.totalorder %s75, %s76
      %p90 = scmp.eq.s32.totalorder %s56, 1
      %p91 = por %p89, %p90
      %p93 = scmp.ne.s32.totalorder %s76, %s92
      %p94 = scmp.eq.s32.totalorder %s56, 0
      %p95 = por %p93, %p94
      %s96 = ssub.s32 %s57, %s69
      %p97 = scmp.eq.s32.totalorder %s96, 0
      %s99 = sadd.s32 %s98, 1
      %s100 = scalar_select %p97, %s98, %s99
      %p103 = pneg %p97
      %p104 = scmp.eq.s32.totalorder %s50, 1
      %p105 = por %p103, %p104
      %p106 = scmp.ne.s32.totalorder %s98, %s101
      %p107 = scmp.eq.s32.totalorder %s50, 0
      %p108 = por %p106, %p107
      %p109 = scmp.ne.s32.totalorder %s98, %s101
      %p110 = scmp.eq.s32.totalorder %s55, 1
      %p111 = por %p109, %p110
      %p112 = scmp.ne.s32.totalorder %s101, %s102
      %p113 = scmp.eq.s32.totalorder %s55, 0
      %p114 = por %p112, %p113
      %p115 = scmp.ne.s32.totalorder %s101, %s102
      %p116 = scmp.eq.s32.totalorder %s56, 1
      %p117 = por %p115, %p116
      %p119 = scmp.ne.s32.totalorder %s102, %s118
      %p120 = scmp.eq.s32.totalorder %s56, 0
      %p121 = por %p119, %p120
      %s122 = ssub.s32 %s57, %s69
      %s123 = ssub.s32 %s58, %s65
      %s124 = sor.u32 %s122, %s123
      %p125 = scmp.eq.s32.totalorder %s124, 0
      %s127 = sadd.s32 %s126, 1
      %s128 = scalar_select %p125, %s126, %s127
      %p131 = pneg %p125
      %p132 = scmp.eq.s32.totalorder %s50, 1
      %p133 = por %p131, %p132
      %p134 = scmp.ne.s32.totalorder %s126, %s129
      %p135 = scmp.eq.s32.totalorder %s50, 0
      %p136 = por %p134, %p135
      %p137 = scmp.ne.s32.totalorder %s126, %s129
      %p138 = scmp.eq.s32.totalorder %s55, 1
      %p139 = por %p137, %p138
      %p140 = scmp.ne.s32.totalorder %s129, %s130
      %p141 = scmp.eq.s32.totalorder %s55, 0
      %p142 = por %p140, %p141
      %p143 = scmp.ne.s32.totalorder %s129, %s130
      %p144 = scmp.eq.s32.totalorder %s56, 1
      %p145 = por %p143, %p144
      %p147 = scmp.ne.s32.totalorder %s130, %s146
      %p148 = scmp.eq.s32.totalorder %s56, 0
      %p149 = por %p147, %p148
      %s150 = ssub.s32 %s57, %s69
      %p151 = scmp.eq.s32.totalorder %s150, 0
      %s153 = sadd.s32 %s152, 1
      %s154 = scalar_select %p151, %s152, %s153
      %p157 = pneg %p151
      %p158 = scmp.eq.s32.totalorder %s50, 1
      %p159 = por %p157, %p158
      %p160 = scmp.ne.s32.totalorder %s152, %s155
      %p161 = scmp.eq.s32.totalorder %s50, 0
      %p162 = por %p160, %p161
      %p163 = scmp.ne.s32.totalorder %s152, %s155
      %p164 = scmp.eq.s32.totalorder %s55, 1
      %p165 = por %p163, %p164
      %p166 = scmp.ne.s32.totalorder %s155, %s156
      %p167 = scmp.eq.s32.totalorder %s55, 0
      %p168 = por %p166, %p167
      %p169 = scmp.ne.s32.totalorder %s155, %s156
      %p170 = scmp.eq.s32.totalorder %s56, 1
      %p171 = por %p169, %p170
      %p173 = scmp.ne.s32.totalorder %s156, %s172
      %p174 = scmp.eq.s32.totalorder %s56, 0
      %p175 = por %p173, %p174
      %s177 = sadd.s32 %s176, 1
      %p180 = scmp.eq.s32.totalorder %s50, 1
      %p181 = scmp.ne.s32.totalorder %s176, %s178
      %p182 = scmp.eq.s32.totalorder %s50, 0
      %p183 = por %p181, %p182
      %p184 = scmp.ne.s32.totalorder %s176, %s178
      %p185 = scmp.eq.s32.totalorder %s55, 1
      %p186 = por %p184, %p185
      %p187 = scmp.ne.s32.totalorder %s178, %s179
      %p188 = scmp.eq.s32.totalorder %s55, 0
      %p189 = por %p187, %p188
      %p190 = scmp.ne.s32.totalorder %s178, %s179
      %p191 = scmp.eq.s32.totalorder %s56, 1
      %p192 = por %p190, %p191
      %p194 = scmp.ne.s32.totalorder %s179, %s193
      %p195 = scmp.eq.s32.totalorder %s56, 0
      %p196 = por %p194, %p195
      %s198 = sadd.s32 %s197, 1
      %p201 = scmp.eq.s32.totalorder %s50, 1
      %p202 = scmp.ne.s32.totalorder %s197, %s199
      %p203 = scmp.eq.s32.totalorder %s50, 0
      %p204 = por %p202, %p203
      %p205 = scmp.ne.s32.totalorder %s197, %s199
      %p206 = scmp.eq.s32.totalorder %s55, 1
      %p207 = por %p205, %p206
      %p208 = scmp.ne.s32.totalorder %s199, %s200
      %p209 = scmp.eq.s32.totalorder %s55, 0
      %p210 = por %p208, %p209
      %p211 = scmp.ne.s32.totalorder %s199, %s200
      %p212 = scmp.eq.s32.totalorder %s56, 1
      %p213 = por %p211, %p212
      %p215 = scmp.ne.s32.totalorder %s200, %s214
      %p216 = scmp.eq.s32.totalorder %s56, 0
      %p217 = por %p215, %p216
      %s219 = sadd.s32 %s218, 1
      %p222 = scmp.eq.s32.totalorder %s50, 1
      %p223 = scmp.ne.s32.totalorder %s218, %s220
      %p224 = scmp.eq.s32.totalorder %s50, 0
      %p225 = por %p223, %p224
      %p226 = scmp.ne.s32.totalorder %s218, %s220
      %p227 = scmp.eq.s32.totalorder %s55, 1
      %p228 = por %p226, %p227
      %p229 = scmp.ne.s32.totalorder %s220, %s221
      %p230 = scmp.eq.s32.totalorder %s55, 0
      %p231 = por %p229, %p230
      %p232 = scmp.ne.s32.totalorder %s220, %s221
      %p233 = scmp.eq.s32.totalorder %s56, 1
      %p234 = por %p232, %p233
      %p236 = scmp.ne.s32.totalorder %s221, %s235
      %p237 = scmp.eq.s32.totalorder %s56, 0
      %p238 = por %p236, %p237
      %s240 = sadd.s32 %s239, 1
      %p243 = scmp.eq.s32.totalorder %s50, 1
      %p244 = scmp.ne.s32.totalorder %s239, %s241
      %p245 = scmp.eq.s32.totalorder %s50, 0
      %p246 = por %p244, %p245
      %p247 = scmp.ne.s32.totalorder %s239, %s241
      %p248 = scmp.eq.s32.totalorder %s55, 1
      %p249 = por %p247, %p248
      %p250 = scmp.ne.s32.totalorder %s241, %s242
      %p251 = scmp.eq.s32.totalorder %s55, 0
      %p252 = por %p250, %p251
      %p253 = scmp.ne.s32.totalorder %s241, %s242
      %p254 = scmp.eq.s32.totalorder %s56, 1
      %p255 = por %p253, %p254
      %p257 = scmp.ne.s32.totalorder %s242, %s256
      %p258 = scmp.eq.s32.totalorder %s56, 0
      %p259 = por %p257, %p258
      %s261 = sadd.s32 %s260, 1
      %p264 = scmp.eq.s32.totalorder %s50, 1
      %p265 = scmp.ne.s32.totalorder %s260, %s262
      %p266 = scmp.eq.s32.totalorder %s50, 0
      %p267 = por %p265, %p266
      %p268 = scmp.ne.s32.totalorder %s260, %s262
      %p269 = scmp.eq.s32.totalorder %s55, 1
      %p270 = por %p268, %p269
      %p271 = scmp.ne.s32.totalorder %s262, %s263
      %p272 = scmp.eq.s32.totalorder %s55, 0
      %p273 = por %p271, %p272
      %p274 = scmp.ne.s32.totalorder %s262, %s263
      %p275 = scmp.eq.s32.totalorder %s56, 1
      %p276 = por %p274, %p275
      %p278 = scmp.ne.s32.totalorder %s263, %s277
      %p279 = scmp.eq.s32.totalorder %s56, 0
      %p280 = por %p278, %p279
      %s282 = sadd.s32 %s281, 1
      %p285 = scmp.eq.s32.totalorder %s50, 1
      %p286 = scmp.ne.s32.totalorder %s281, %s283
      %p287 = scmp.eq.s32.totalorder %s50, 0
      %p288 = por %p286, %p287
      %p289 = scmp.ne.s32.totalorder %s281, %s283
      %p290 = scmp.eq.s32.totalorder %s55, 1
      %p291 = por %p289, %p290
      %p292 = scmp.ne.s32.totalorder %s283, %s284
      %p293 = scmp.eq.s32.totalorder %s55, 0
      %p294 = por %p292, %p293
      %p295 = scmp.ne.s32.totalorder %s283, %s284
      %p296 = scmp.eq.s32.totalorder %s56, 1
      %p297 = por %p295, %p296
      %p299 = scmp.ne.s32.totalorder %s284, %s298
      %p300 = scmp.eq.s32.totalorder %s56, 0
      %p301 = por %p299, %p300
      %s303 = sadd.s32 %s302, 1
      %p306 = scmp.eq.s32.totalorder %s50, 1
      %p307 = scmp.ne.s32.totalorder %s302, %s304
      %p308 = scmp.eq.s32.totalorder %s50, 0
      %p309 = por %p307, %p308
      %p310 = scmp.ne.s32.totalorder %s302, %s304
      %p311 = scmp.eq.s32.totalorder %s55, 1
      %p312 = por %p310, %p311
      %p313 = scmp.ne.s32.totalorder %s304, %s305
      %p314 = scmp.eq.s32.totalorder %s55, 0
      %p315 = por %p313, %p314
      %p316 = scmp.ne.s32.totalorder %s304, %s305
      %p317 = scmp.eq.s32.totalorder %s56, 1
      %p318 = por %p316, %p317
      %p320 = scmp.ne.s32.totalorder %s305, %s319
      %p321 = scmp.eq.s32.totalorder %s56, 0
      %p322 = por %p320, %p321
      %s324 = sadd.s32 %s323, 1
      %p327 = scmp.eq.s32.totalorder %s50, 1
      %p328 = scmp.ne.s32.totalorder %s323, %s325
      %p329 = scmp.eq.s32.totalorder %s50, 0
      %p330 = por %p328, %p329
      %p331 = scmp.ne.s32.totalorder %s323, %s325
      %p332 = scmp.eq.s32.totalorder %s55, 1
      %p333 = por %p331, %p332
      %p334 = scmp.ne.s32.totalorder %s325, %s326
      %p335 = scmp.eq.s32.totalorder %s55, 0
      %p336 = por %p334, %p335
      %p337 = scmp.ne.s32.totalorder %s325, %s326
      %p338 = scmp.eq.s32.totalorder %s56, 1
      %p339 = por %p337, %p338
      %p341 = scmp.ne.s32.totalorder %s326, %s340
      %p342 = scmp.eq.s32.totalorder %s56, 0
      %p343 = por %p341, %p342
      %s345 = sadd.s32 %s344, 1
      %p348 = scmp.eq.s32.totalorder %s50, 1
      %p349 = scmp.ne.s32.totalorder %s344, %s346
      %p350 = scmp.eq.s32.totalorder %s50, 0
      %p351 = por %p349, %p350
      %p352 = scmp.ne.s32.totalorder %s344, %s346
      %p353 = scmp.eq.s32.totalorder %s55, 1
      %p354 = por %p352, %p353
      %p355 = scmp.ne.s32.totalorder %s346, %s347
      %p356 = scmp.eq.s32.totalorder %s55, 0
      %p357 = por %p355, %p356
      %p358 = scmp.ne.s32.totalorder %s346, %s347
      %p359 = scmp.eq.s32.totalorder %s56, 1
      %p360 = por %p358, %p359
      %p362 = scmp.ne.s32.totalorder %s347, %s361
      %p363 = scmp.eq.s32.totalorder %s56, 0
      %p364 = por %p362, %p363
      %s366 = sadd.s32 %s365, 1
      %p369 = scmp.eq.s32.totalorder %s50, 1
      %p370 = scmp.ne.s32.totalorder %s365, %s367
      %p371 = scmp.eq.s32.totalorder %s50, 0
      %p372 = por %p370, %p371
      %p373 = scmp.ne.s32.totalorder %s365, %s367
      %p374 = scmp.eq.s32.totalorder %s55, 1
      %p375 = por %p373, %p374
      %p376 = scmp.ne.s32.totalorder %s367, %s368
      %p377 = scmp.eq.s32.totalorder %s55, 0
      %p378 = por %p376, %p377
      %p379 = scmp.ne.s32.totalorder %s367, %s368
      %p380 = scmp.eq.s32.totalorder %s56, 1
      %p381 = por %p379, %p380
      %p383 = scmp.ne.s32.totalorder %s368, %s382
      %p384 = scmp.eq.s32.totalorder %s56, 0
      %p385 = por %p383, %p384
      %s387 = sadd.s32 %s386, 1
      %p390 = scmp.eq.s32.totalorder %s50, 1
      %p391 = scmp.ne.s32.totalorder %s386, %s388
      %p392 = scmp.eq.s32.totalorder %s50, 0
      %p393 = por %p391, %p392
      %p394 = scmp.ne.s32.totalorder %s386, %s388
      %p395 = scmp.eq.s32.totalorder %s55, 1
      %p396 = por %p394, %p395
      %p397 = scmp.ne.s32.totalorder %s388, %s389
      %p398 = scmp.eq.s32.totalorder %s55, 0
      %p399 = por %p397, %p398
      %p400 = scmp.ne.s32.totalorder %s388, %s389
      %p401 = scmp.eq.s32.totalorder %s56, 1
      %p402 = por %p400, %p401
      %p404 = scmp.ne.s32.totalorder %s389, %s403
      %p405 = scmp.eq.s32.totalorder %s56, 0
      %p406 = por %p404, %p405
      %s408 = sadd.s32 %s407, 1
      %p411 = scmp.eq.s32.totalorder %s50, 1
      %p412 = scmp.ne.s32.totalorder %s407, %s409
      %p413 = scmp.eq.s32.totalorder %s50, 0
      %p414 = por %p412, %p413
      %p415 = scmp.ne.s32.totalorder %s407, %s409
      %p416 = scmp.eq.s32.totalorder %s55, 1
      %p417 = por %p415, %p416
      %p418 = scmp.ne.s32.totalorder %s409, %s410
      %p419 = scmp.eq.s32.totalorder %s55, 0
      %p420 = por %p418, %p419
      %p421 = scmp.ne.s32.totalorder %s409, %s410
      %p422 = scmp.eq.s32.totalorder %s56, 1
      %p423 = por %p421, %p422
      %p425 = scmp.ne.s32.totalorder %s410, %s424
      %p426 = scmp.eq.s32.totalorder %s56, 0
      %p427 = por %p425, %p426
      %s429 = sadd.s32 %s428, 1
      %p432 = scmp.eq.s32.totalorder %s50, 1
      %p433 = scmp.ne.s32.totalorder %s428, %s430
      %p434 = scmp.eq.s32.totalorder %s50, 0
      %p435 = por %p433, %p434
      %p436 = scmp.ne.s32.totalorder %s428, %s430
      %p437 = scmp.eq.s32.totalorder %s55, 1
      %p438 = por %p436, %p437
      %p439 = scmp.ne.s32.totalorder %s430, %s431
      %p440 = scmp.eq.s32.totalorder %s55, 0
      %p441 = por %p439, %p440
      %p442 = scmp.ne.s32.totalorder %s430, %s431
      %p443 = scmp.eq.s32.totalorder %s56, 1
      %p444 = por %p442, %p443
      %p446 = scmp.ne.s32.totalorder %s431, %s445
      %p447 = scmp.eq.s32.totalorder %s56, 0
      %p448 = por %p446, %p447
      %s450 = sadd.s32 %s449, 1
      %p453 = scmp.eq.s32.totalorder %s50, 1
      %p454 = scmp.ne.s32.totalorder %s449, %s451
      %p455 = scmp.eq.s32.totalorder %s50, 0
      %p456 = por %p454, %p455
      %p457 = scmp.ne.s32.totalorder %s449, %s451
      %p458 = scmp.eq.s32.totalorder %s55, 1
      %p459 = por %p457, %p458
      %p460 = scmp.ne.s32.totalorder %s451, %s452
      %p461 = scmp.eq.s32.totalorder %s55, 0
      %p462 = por %p460, %p461
      %p463 = scmp.ne.s32.totalorder %s451, %s452
      %p464 = scmp.eq.s32.totalorder %s56, 1
      %p465 = por %p463, %p464
      %p467 = scmp.ne.s32.totalorder %s452, %s466
      %p468 = scmp.eq.s32.totalorder %s56, 0
      %p469 = por %p467, %p468
      %s471 = sadd.s32 %s470, 1
      %p474 = scmp.eq.s32.totalorder %s50, 1
      %p475 = scmp.ne.s32.totalorder %s470, %s472
      %p476 = scmp.eq.s32.totalorder %s50, 0
      %p477 = por %p475, %p476
      %p478 = scmp.ne.s32.totalorder %s470, %s472
      %p479 = scmp.eq.s32.totalorder %s55, 1
      %p480 = por %p478, %p479
      %p481 = scmp.ne.s32.totalorder %s472, %s473
      %p482 = scmp.eq.s32.totalorder %s55, 0
      %p483 = por %p481, %p482
      %p484 = scmp.ne.s32.totalorder %s472, %s473
      %p485 = scmp.eq.s32.totalorder %s56, 1
      %p486 = por %p484, %p485
      %p488 = scmp.ne.s32.totalorder %s473, %s487
      %p489 = scmp.eq.s32.totalorder %s56, 0
      %p490 = por %p488, %p489
      %s492 = sadd.s32 %s491, 1
      %p495 = scmp.eq.s32.totalorder %s50, 1
      %p496 = scmp.ne.s32.totalorder %s491, %s493
      %p497 = scmp.eq.s32.totalorder %s50, 0
      %p498 = por %p496, %p497
      %p499 = scmp.ne.s32.totalorder %s491, %s493
      %p500 = scmp.eq.s32.totalorder %s55, 1
      %p501 = por %p499, %p500
      %p502 = scmp.ne.s32.totalorder %s493, %s494
      %p503 = scmp.eq.s32.totalorder %s55, 0
      %p504 = por %p502, %p503
      %p505 = scmp.ne.s32.totalorder %s493, %s494
      %p506 = scmp.eq.s32.totalorder %s56, 1
      %p507 = por %p505, %p506
      %p509 = scmp.ne.s32.totalorder %s494, %s508
      %p510 = scmp.eq.s32.totalorder %s56, 0
      %p511 = por %p509, %p510
      %s513 = sadd.s32 %s512, 1
      %p516 = scmp.eq.s32.totalorder %s50, 1
      %p517 = scmp.ne.s32.totalorder %s512, %s514
      %p518 = scmp.eq.s32.totalorder %s50, 0
      %p519 = por %p517, %p518
      %p520 = scmp.ne.s32.totalorder %s512, %s514
      %p521 = scmp.eq.s32.totalorder %s55, 1
      %p522 = por %p520, %p521
      %p523 = scmp.ne.s32.totalorder %s514, %s515
      %p524 = scmp.eq.s32.totalorder %s55, 0
      %p525 = por %p523, %p524
      %p526 = scmp.ne.s32.totalorder %s514, %s515
      %p527 = scmp.eq.s32.totalorder %s56, 1
      %p528 = por %p526, %p527
      %p530 = scmp.ne.s32.totalorder %s515, %s529
      %p531 = scmp.eq.s32.totalorder %s56, 0
      %p532 = por %p530, %p531
      %s534 = sadd.s32 %s533, 1
      %p537 = scmp.eq.s32.totalorder %s50, 1
      %p538 = scmp.ne.s32.totalorder %s533, %s535
      %p539 = scmp.eq.s32.totalorder %s50, 0
      %p540 = por %p538, %p539
      %p541 = scmp.ne.s32.totalorder %s533, %s535
      %p542 = scmp.eq.s32.totalorder %s55, 1
      %p543 = por %p541, %p542
      %p544 = scmp.ne.s32.totalorder %s535, %s536
      %p545 = scmp.eq.s32.totalorder %s55, 0
      %p546 = por %p544, %p545
      %p547 = scmp.ne.s32.totalorder %s535, %s536
      %p548 = scmp.eq.s32.totalorder %s56, 1
      %p549 = por %p547, %p548
      %p551 = scmp.ne.s32.totalorder %s536, %s550
      %p552 = scmp.eq.s32.totalorder %s56, 0
      %p553 = por %p551, %p552
      %s555 = sadd.s32 %s554, 1
      %p558 = scmp.eq.s32.totalorder %s50, 1
      %p559 = scmp.ne.s32.totalorder %s554, %s556
      %p560 = scmp.eq.s32.totalorder %s50, 0
      %p561 = por %p559, %p560
      %p562 = scmp.ne.s32.totalorder %s554, %s556
      %p563 = scmp.eq.s32.totalorder %s55, 1
      %p564 = por %p562, %p563
      %p565 = scmp.ne.s32.totalorder %s556, %s557
      %p566 = scmp.eq.s32.totalorder %s55, 0
      %p567 = por %p565, %p566
      %p568 = scmp.ne.s32.totalorder %s556, %s557
      %p569 = scmp.eq.s32.totalorder %s56, 1
      %p570 = por %p568, %p569
      %p572 = scmp.ne.s32.totalorder %s557, %s571
      %p573 = scmp.eq.s32.totalorder %s56, 0
      %p574 = por %p572, %p573
      %s576 = sadd.s32 %s575, 1
      %p579 = scmp.eq.s32.totalorder %s50, 1
      %p580 = scmp.ne.s32.totalorder %s575, %s577
      %p581 = scmp.eq.s32.totalorder %s50, 0
      %p582 = por %p580, %p581
      %p583 = scmp.ne.s32.totalorder %s575, %s577
      %p584 = scmp.eq.s32.totalorder %s55, 1
      %p585 = por %p583, %p584
      %p586 = scmp.ne.s32.totalorder %s577, %s578
      %p587 = scmp.eq.s32.totalorder %s55, 0
      %p588 = por %p586, %p587
      %p589 = scmp.ne.s32.totalorder %s577, %s578
      %p590 = scmp.eq.s32.totalorder %s56, 1
      %p591 = por %p589, %p590
      %p593 = scmp.ne.s32.totalorder %s578, %s592
      %p594 = scmp.eq.s32.totalorder %s56, 0
      %p595 = por %p593, %p594
      %s597 = sadd.s32 %s596, 1
      %p600 = scmp.eq.s32.totalorder %s50, 1
      %p601 = scmp.ne.s32.totalorder %s596, %s598
      %p602 = scmp.eq.s32.totalorder %s50, 0
      %p603 = por %p601, %p602
      %p604 = scmp.ne.s32.totalorder %s596, %s598
      %p605 = scmp.eq.s32.totalorder %s55, 1
      %p606 = por %p604, %p605
      %p607 = scmp.ne.s32.totalorder %s598, %s599
      %p608 = scmp.eq.s32.totalorder %s55, 0
      %p609 = por %p607, %p608
      %p610 = scmp.ne.s32.totalorder %s598, %s599
      %p611 = scmp.eq.s32.totalorder %s56, 1
      %p612 = por %p610, %p611
      %p614 = scmp.ne.s32.totalorder %s599, %s613
      %p615 = scmp.eq.s32.totalorder %s56, 0
      %p616 = por %p614, %p615
      %s618 = sadd.s32 %s617, 1
      %p621 = scmp.eq.s32.totalorder %s50, 1
      %p622 = scmp.ne.s32.totalorder %s617, %s619
      %p623 = scmp.eq.s32.totalorder %s50, 0
      %p624 = por %p622, %p623
      %p625 = scmp.ne.s32.totalorder %s617, %s619
      %p626 = scmp.eq.s32.totalorder %s55, 1
      %p627 = por %p625, %p626
      %p628 = scmp.ne.s32.totalorder %s619, %s620
      %p629 = scmp.eq.s32.totalorder %s55, 0
      %p630 = por %p628, %p629
      %p631 = scmp.ne.s32.totalorder %s619, %s620
      %p632 = scmp.eq.s32.totalorder %s56, 1
      %p633 = por %p631, %p632
      %p635 = scmp.ne.s32.totalorder %s620, %s634
      %p636 = scmp.eq.s32.totalorder %s56, 0
      %p637 = por %p635, %p636
      %s638 = ssub.s32 %s57, %s69
      %s639 = ssub.s32 %s58, %s65
      %s640 = sor.u32 %s638, %s639
      %p641 = scmp.eq.s32.totalorder %s640, 0
      %s643 = sadd.s32 %s642, 1
      %s644 = scalar_select %p641, %s642, %s643
      %p647 = pneg %p641
      %p648 = scmp.eq.s32.totalorder %s50, 1
      %p649 = por %p647, %p648
      %p650 = scmp.ne.s32.totalorder %s642, %s645
      %p651 = scmp.eq.s32.totalorder %s50, 0
      %p652 = por %p650, %p651
      %p653 = scmp.ne.s32.totalorder %s642, %s645
      %p654 = scmp.eq.s32.totalorder %s55, 1
      %p655 = por %p653, %p654
      %p656 = scmp.ne.s32.totalorder %s645, %s646
      %p657 = scmp.eq.s32.totalorder %s55, 0
      %p658 = por %p656, %p657
      %p659 = scmp.ne.s32.totalorder %s645, %s646
      %p660 = scmp.eq.s32.totalorder %s56, 1
      %p661 = por %p659, %p660
      %p663 = scmp.ne.s32.totalorder %s646, %s662
      %p664 = scmp.eq.s32.totalorder %s56, 0
      %p665 = por %p663, %p664
      %s666 = ssub.s32 %s57, %s69
      %s667 = ssub.s32 %s58, %s65
      %s668 = sor.u32 %s666, %s667
      %p669 = scmp.eq.s32.totalorder %s668, 0
      %s671 = sadd.s32 %s670, 1
      %s672 = scalar_select %p669, %s670, %s671
      %p675 = pneg %p669
      %p676 = scmp.eq.s32.totalorder %s50, 1
      %p677 = por %p675, %p676
      %p678 = scmp.ne.s32.totalorder %s670, %s673
      %p679 = scmp.eq.s32.totalorder %s50, 0
      %p680 = por %p678, %p679
      %p681 = scmp.ne.s32.totalorder %s670, %s673
      %p682 = scmp.eq.s32.totalorder %s55, 1
      %p683 = por %p681, %p682
      %p684 = scmp.ne.s32.totalorder %s673, %s674
      %p685 = scmp.eq.s32.totalorder %s55, 0
      %p686 = por %p684, %p685
      %p687 = scmp.ne.s32.totalorder %s673, %s674
      %p688 = scmp.eq.s32.totalorder %s56, 1
      %p689 = por %p687, %p688
      %p691 = scmp.ne.s32.totalorder %s674, %s690
      %p692 = scmp.eq.s32.totalorder %s56, 0
      %p693 = por %p691, %p692
      %p694 = scmp.le.s32.totalorder 1, %s50
      %p695 = scmp.lt.s32.totalorder %s50, 3
      %p696 = pnand %p694, %p695
      %p697 = pneg %p696
      // Predicated region
      $region9: #{tpu_custom_call.1} parent=5 // pred_check
        _
      $region10: #{tpu_custom_call.1} parent=5 // pred_check_branch
        %699 = sbr.rel (%p696) target = $region12
      $region11: #{tpu_custom_call.1} parent=5 // pred_region
        %s700 = ssub.s32 %s50, 1
        // Predicated region
        $region13: #{tpu_custom_call.1} parent=11 // pred_check
          %p701 = pneg %p189
        $region14: #{tpu_custom_call.1} parent=11 // pred_check_branch
          %703 = sbr.rel (%p701) target = $region16
        $region15: #{tpu_custom_call.1} parent=11 // pred_region
          _
        $region16: #{tpu_custom_call.1} parent=11 // pred_fallthru
          _
        // Predicated region
        $region17: #{tpu_custom_call.1} parent=11 // pred_check
          %p704 = pneg %p210
        $region18: #{tpu_custom_call.1} parent=11 // pred_check_branch
          %706 = sbr.rel (%p704) target = $region20
        $region19: #{tpu_custom_call.1} parent=11 // pred_region
          _
        $region20: #{tpu_custom_call.1} parent=11 // pred_fallthru
          _
        // Predicated region
        $region21: #{tpu_custom_call.1} parent=11 // pred_check
          %p707 = pneg %p231
        $region22: #{tpu_custom_call.1} parent=11 // pred_check_branch
          %709 = sbr.rel (%p707) target = $region24
        $region23: #{tpu_custom_call.1} parent=11 // pred_region
          _
        $region24: #{tpu_custom_call.1} parent=11 // pred_fallthru
          _
        // Predicated region
        $region25: #{tpu_custom_call.1} parent=11 // pred_check
          %p710 = pneg %p252
        $region26: #{tpu_custom_call.1} parent=11 // pred_check_branch
          %712 = sbr.rel (%p710) target = $region28
        $region27: #{tpu_custom_call.1} parent=11 // pred_region
          _
        $region28: #{tpu_custom_call.1} parent=11 // pred_fallthru
          _
        // Predicated region
        $region29: #{tpu_custom_call.1} parent=11 // pred_check
          %p713 = pneg %p273
        $region30: #{tpu_custom_call.1} parent=11 // pred_check_branch
          %715 = sbr.rel (%p713) target = $region32
        $region31: #{tpu_custom_call.1} parent=11 // pred_region
          %717 = vsyncadd [#allocation9], 0
          %s718 = sshll.u32 %s8, 4
          %s719 = int_to_ptr.hbm [resolvable:$true] %s718
          %s720 = sshll.u32 [#allocation8], 4
          %s721 = int_to_ptr.vmem [resolvable:$true] %s720
          %726 = dma.hbm_to_vmem [thread:$0]  %s719, 512, %s721, [#allocation9], 128, 128, 8
        $region32: #{tpu_custom_call.1} parent=11 // pred_fallthru
          _
        // Predicated region
        $region33: #{tpu_custom_call.1} parent=11 // pred_check
          %p727 = pneg %p294
        $region34: #{tpu_custom_call.1} parent=11 // pred_check_branch
          %729 = sbr.rel (%p727) target = $region36
        $region35: #{tpu_custom_call.1} parent=11 // pred_region
          _
        $region36: #{tpu_custom_call.1} parent=11 // pred_fallthru
          _
        // Predicated region
        $region37: #{tpu_custom_call.1} parent=11 // pred_check
          %p730 = pneg %p315
        $region38: #{tpu_custom_call.1} parent=11 // pred_check_branch
          %732 = sbr.rel (%p730) target = $region40
        $region39: #{tpu_custom_call.1} parent=11 // pred_region
          %734 = vsyncadd [#allocation9], 0
          %s735 = sshll.u32 %s10, 4
          %s736 = int_to_ptr.hbm [resolvable:$true] %s735
          %s737 = sshll.u32 [#allocation10], 4
          %s738 = int_to_ptr.vmem [resolvable:$true] %s737
          %743 = dma.hbm_to_vmem [thread:$0]  %s736, 512, %s738, [#allocation9], 128, 128, 8
        $region40: #{tpu_custom_call.1} parent=11 // pred_fallthru
          _
        // Predicated region
        $region41: #{tpu_custom_call.1} parent=11 // pred_check
          %p744 = pneg %p336
        $region42: #{tpu_custom_call.1} parent=11 // pred_check_branch
          %746 = sbr.rel (%p744) target = $region44
        $region43: #{tpu_custom_call.1} parent=11 // pred_region
          _
        $region44: #{tpu_custom_call.1} parent=11 // pred_fallthru
          _
        // Predicated region
        $region45: #{tpu_custom_call.1} parent=11 // pred_check
          %p747 = pneg %p357
        $region46: #{tpu_custom_call.1} parent=11 // pred_check_branch
          %749 = sbr.rel (%p747) target = $region48
        $region47: #{tpu_custom_call.1} parent=11 // pred_region
          %751 = vsyncadd [#allocation12], 0
          %s752 = sshll.u32 %s12, 4
          %s753 = int_to_ptr.hbm [resolvable:$true] %s752
          %s754 = sshll.u32 [#allocation11], 4
          %s755 = int_to_ptr.vmem [resolvable:$true] %s754
          %760 = dma.hbm_to_vmem [thread:$0]  %s753, 512, %s755, [#allocation12], 128, 128, 8
        $region48: #{tpu_custom_call.1} parent=11 // pred_fallthru
          _
        // Predicated region
        $region49: #{tpu_custom_call.1} parent=11 // pred_check
          %p761 = pneg %p378
        $region50: #{tpu_custom_call.1} parent=11 // pred_check_branch
          %763 = sbr.rel (%p761) target = $region52
        $region51: #{tpu_custom_call.1} parent=11 // pred_region
          _
        $region52: #{tpu_custom_call.1} parent=11 // pred_fallthru
          _
        // Predicated region
        $region53: #{tpu_custom_call.1} parent=11 // pred_check
          %p764 = pneg %p399
        $region54: #{tpu_custom_call.1} parent=11 // pred_check_branch
          %766 = sbr.rel (%p764) target = $region56
        $region55: #{tpu_custom_call.1} parent=11 // pred_region
          %768 = vsyncadd [#allocation12], 0
          %s769 = sshll.u32 %s14, 4
          %s770 = int_to_ptr.hbm [resolvable:$true] %s769
          %s771 = sshll.u32 [#allocation13], 4
          %s772 = int_to_ptr.vmem [resolvable:$true] %s771
          %777 = dma.hbm_to_vmem [thread:$0]  %s770, 512, %s772, [#allocation12], 128, 128, 8
        $region56: #{tpu_custom_call.1} parent=11 // pred_fallthru
          _
        // Predicated region
        $region57: #{tpu_custom_call.1} parent=11 // pred_check
          %p778 = pneg %p420
        $region58: #{tpu_custom_call.1} parent=11 // pred_check_branch
          %780 = sbr.rel (%p778) target = $region60
        $region59: #{tpu_custom_call.1} parent=11 // pred_region
          _
        $region60: #{tpu_custom_call.1} parent=11 // pred_fallthru
          _
        // Predicated region
        $region61: #{tpu_custom_call.1} parent=11 // pred_check
          %p781 = pneg %p441
        $region62: #{tpu_custom_call.1} parent=11 // pred_check_branch
          %783 = sbr.rel (%p781) target = $region64
        $region63: #{tpu_custom_call.1} parent=11 // pred_region
          %785 = vsyncadd [#allocation15], 0
          %s786 = sshll.u32 %s16, 4
          %s787 = int_to_ptr.hbm [resolvable:$true] %s786
          %s788 = sshll.u32 [#allocation14], 4
          %s789 = int_to_ptr.vmem [resolvable:$true] %s788
          %794 = dma.hbm_to_vmem [thread:$0]  %s787, 512, %s789, [#allocation15], 128, 128, 8
        $region64: #{tpu_custom_call.1} parent=11 // pred_fallthru
          _
        // Predicated region
        $region65: #{tpu_custom_call.1} parent=11 // pred_check
          %p795 = pneg %p462
        $region66: #{tpu_custom_call.1} parent=11 // pred_check_branch
          %797 = sbr.rel (%p795) target = $region68
        $region67: #{tpu_custom_call.1} parent=11 // pred_region
          _
        $region68: #{tpu_custom_call.1} parent=11 // pred_fallthru
          _
        // Predicated region
        $region69: #{tpu_custom_call.1} parent=11 // pred_check
          %p798 = pneg %p483
        $region70: #{tpu_custom_call.1} parent=11 // pred_check_branch
          %800 = sbr.rel (%p798) target = $region72
        $region71: #{tpu_custom_call.1} parent=11 // pred_region
          %802 = vsyncadd [#allocation15], 0
          %s803 = sshll.u32 %s18, 4
          %s804 = int_to_ptr.hbm [resolvable:$true] %s803
          %s805 = sshll.u32 [#allocation16], 4
          %s806 = int_to_ptr.vmem [resolvable:$true] %s805
          %811 = dma.hbm_to_vmem [thread:$0]  %s804, 512, %s806, [#allocation15], 128, 128, 8
        $region72: #{tpu_custom_call.1} parent=11 // pred_fallthru
          _
        // Predicated region
        $region73: #{tpu_custom_call.1} parent=11 // pred_check
          %p812 = pneg %p504
        $region74: #{tpu_custom_call.1} parent=11 // pred_check_branch
          %814 = sbr.rel (%p812) target = $region76
        $region75: #{tpu_custom_call.1} parent=11 // pred_region
          _
        $region76: #{tpu_custom_call.1} parent=11 // pred_fallthru
          _
        // Predicated region
        $region77: #{tpu_custom_call.1} parent=11 // pred_check
          %p815 = pneg %p525
        $region78: #{tpu_custom_call.1} parent=11 // pred_check_branch
          %817 = sbr.rel (%p815) target = $region80
        $region79: #{tpu_custom_call.1} parent=11 // pred_region
          %819 = vsyncadd [#allocation18], 0
          %s820 = sshll.u32 %s20, 4
          %s821 = int_to_ptr.hbm [resolvable:$true] %s820
          %s822 = sshll.u32 [#allocation17], 4
          %s823 = int_to_ptr.vmem [resolvable:$true] %s822
          %828 = dma.hbm_to_vmem [thread:$0]  %s821, 512, %s823, [#allocation18], 128, 128, 8
        $region80: #{tpu_custom_call.1} parent=11 // pred_fallthru
          _
        // Predicated region
        $region81: #{tpu_custom_call.1} parent=11 // pred_check
          %p829 = pneg %p546
        $region82: #{tpu_custom_call.1} parent=11 // pred_check_branch
          %831 = sbr.rel (%p829) target = $region84
        $region83: #{tpu_custom_call.1} parent=11 // pred_region
          _
        $region84: #{tpu_custom_call.1} parent=11 // pred_fallthru
          _
        // Predicated region
        $region85: #{tpu_custom_call.1} parent=11 // pred_check
          %p832 = pneg %p567
        $region86: #{tpu_custom_call.1} parent=11 // pred_check_branch
          %834 = sbr.rel (%p832) target = $region88
        $region87: #{tpu_custom_call.1} parent=11 // pred_region
          _
        $region88: #{tpu_custom_call.1} parent=11 // pred_fallthru
          _
        // Predicated region
        $region89: #{tpu_custom_call.1} parent=11 // pred_check
          %p835 = pneg %p588
        $region90: #{tpu_custom_call.1} parent=11 // pred_check_branch
          %837 = sbr.rel (%p835) target = $region92
        $region91: #{tpu_custom_call.1} parent=11 // pred_region
          _
        $region92: #{tpu_custom_call.1} parent=11 // pred_fallthru
          _
        // Predicated region
        $region93: #{tpu_custom_call.1} parent=11 // pred_check
          %p838 = pneg %p609
        $region94: #{tpu_custom_call.1} parent=11 // pred_check_branch
          %840 = sbr.rel (%p838) target = $region96
        $region95: #{tpu_custom_call.1} parent=11 // pred_region
          _
        $region96: #{tpu_custom_call.1} parent=11 // pred_fallthru
          _
        // Predicated region
        $region97: #{tpu_custom_call.1} parent=11 // pred_check
          %p841 = pneg %p630
        $region98: #{tpu_custom_call.1} parent=11 // pred_check_branch
          %843 = sbr.rel (%p841) target = $region100
        $region99: #{tpu_custom_call.1} parent=11 // pred_region
          _
        $region100: #{tpu_custom_call.1} parent=11 // pred_fallthru
          _
      $region12: #{tpu_custom_call.1} parent=5 // pred_fallthru
        _
      %p844 = scmp.lt.s32.totalorder %s50, 2
      // Predicated region
      $region101: #{tpu_custom_call.1} parent=5 // pred_check
        %p845 = pneg %p844
      $region102: #{tpu_custom_call.1} parent=5 // pred_check_branch
        %847 = sbr.rel (%p845) target = $region104
      $region103: #{tpu_custom_call.1} parent=5 // pred_region
        // Predicated region
        $region105: #{tpu_custom_call.1} parent=103 // pred_check
          %p848 = pneg %p82
        $region106: #{tpu_custom_call.1} parent=103 // pred_check_branch
          %850 = sbr.rel (%p848) target = $region108
        $region107: #{tpu_custom_call.1} parent=103 // pred_region
          %s851 = sand.u32 %s72, 1
          %s852 = scalar_lea.sflag [#allocation3], %s851
          %s853 = sand.u32 %s72, 1
          %s854 = smul.addr %s853, 8
          %s855 = scalar_lea.vmem [#allocation2], %s854
          %857 = vsyncadd %s852, 0
          %s858 = smul.addr %s57, 8
          %s859 = scalar_lea.hbm %s0, %s858
          %s861 = sshll.u32 %s859, 4
          %s862 = int_to_ptr.hbm [resolvable:$true] %s861
          %s863 = sshll.u32 %s855, 4
          %s864 = int_to_ptr.vmem [resolvable:$true] %s863
          %866 = dma.hbm_to_vmem [thread:$0]  %s862, 128, %s864, %s852
        $region108: #{tpu_custom_call.1} parent=103 // pred_fallthru
          _
        // Predicated region
        $region109: #{tpu_custom_call.1} parent=103 // pred_check
          %p867 = pneg %p108
        $region110: #{tpu_custom_call.1} parent=103 // pred_check_branch
          %869 = sbr.rel (%p867) target = $region112
        $region111: #{tpu_custom_call.1} parent=103 // pred_region
          %p870 = scmp.lt.s32.totalorder %s57, 1
          %s871 = scalar_select %p870, %s57, 1
          %s872 = smul.addr %s871, 2
          %s873 = smul.addr %s872, 8
          %s874 = scalar_lea.vmem %s1, %s873
        $region112: #{tpu_custom_call.1} parent=103 // pred_fallthru
          _
        // Predicated region
        $region113: #{tpu_custom_call.1} parent=103 // pred_check
          %p875 = pneg %p136
        $region114: #{tpu_custom_call.1} parent=103 // pred_check_branch
          %877 = sbr.rel (%p875) target = $region116
        $region115: #{tpu_custom_call.1} parent=103 // pred_region
          %s878 = sand.u32 %s50, 1
          %s879 = scalar_lea.sflag [#allocation6], %s878
          %s880 = sand.u32 %s126, 1
          %s881 = smul.addr %s880, 8
          %s882 = scalar_lea.vmem [#allocation5], %s881
          %884 = vsyncadd %s879, 0
          %s885 = sadd.s32 %s58, %s57
          %s886 = smul.addr %s885, 8
          %s887 = scalar_lea.hbm %s2, %s886
          %s889 = sshll.u32 %s887, 4
          %s890 = int_to_ptr.hbm [resolvable:$true] %s889
          %s891 = sshll.u32 %s882, 4
          %s892 = int_to_ptr.vmem [resolvable:$true] %s891
          %894 = dma.hbm_to_vmem [thread:$0]  %s890, 128, %s892, %s879
        $region116: #{tpu_custom_call.1} parent=103 // pred_fallthru
          _
        // Predicated region
        $region117: #{tpu_custom_call.1} parent=103 // pred_check
          %p895 = pneg %p162
        $region118: #{tpu_custom_call.1} parent=103 // pred_check_branch
          %897 = sbr.rel (%p895) target = $region120
        $region119: #{tpu_custom_call.1} parent=103 // pred_region
          %s898 = sand.u32 %s50, 1
          %s899 = scalar_lea.sflag [#allocation6], %s898
          %s900 = sand.u32 %s152, 1
          %s901 = scalar_lea.vmem [#allocation7], %s900
          %903 = vsyncadd %s899, 0
          %s904 = scalar_lea.hbm %s3, %s57
          %s906 = sshll.u32 %s904, 4
          %s907 = int_to_ptr.hbm [resolvable:$true] %s906
          %s908 = sshll.u32 %s901, 4
          %s909 = int_to_ptr.vmem [resolvable:$true] %s908
          %911 = dma.hbm_to_vmem [thread:$0]  %s907, 16, %s909, %s899
        $region120: #{tpu_custom_call.1} parent=103 // pred_fallthru
          _
      $region104: #{tpu_custom_call.1} parent=5 // pred_fallthru
        _
      %p912 = scmp.le.s32.totalorder 1, %s50
      %p913 = scmp.lt.s32.totalorder %s50, 3
      %p914 = pnand %p912, %p913
      %p915 = pneg %p914
      // Predicated region
      $region121: #{tpu_custom_call.1} parent=5 // pred_check
        _
      $region122: #{tpu_custom_call.1} parent=5 // pred_check_branch
        %917 = sbr.rel (%p914) target = $region124
      $region123: #{tpu_custom_call.1} parent=5 // pred_region
        %s918 = ssub.s32 %s50, 1
        %s919 = sand.u32 %s75, 1
        %s920 = scalar_lea.sflag [#allocation3], %s919
        %s921 = sand.u32 %s75, 1
        %s922 = smul.addr %s921, 8
        %s923 = scalar_lea.vmem [#allocation2], %s922
        // Predicated region
        $region125: #{tpu_custom_call.1} parent=123 // pred_check
          %p924 = pneg %p88
        $region126: #{tpu_custom_call.1} parent=123 // pred_check_branch
          %926 = sbr.rel (%p924) target = $region128
        $region127: #{tpu_custom_call.1} parent=123 // pred_region
          %928 = dma.done %s920, 128
        $region128: #{tpu_custom_call.1} parent=123 // pred_fallthru
          _
        %s929 = sand.u32 %s55, 1
        %s930 = scalar_lea.sflag [#allocation6], %s929
        %s931 = sand.u32 %s129, 1
        %s932 = smul.addr %s931, 8
        %s933 = scalar_lea.vmem [#allocation5], %s932
        // Predicated region
        $region129: #{tpu_custom_call.1} parent=123 // pred_check
          %p934 = pneg %p142
        $region130: #{tpu_custom_call.1} parent=123 // pred_check_branch
          %936 = sbr.rel (%p934) target = $region132
        $region131: #{tpu_custom_call.1} parent=123 // pred_region
          %938 = dma.done %s930, 128
        $region132: #{tpu_custom_call.1} parent=123 // pred_fallthru
          _
        %s939 = sand.u32 %s55, 1
        %s940 = scalar_lea.sflag [#allocation6], %s939
        %s941 = sand.u32 %s155, 1
        %s942 = scalar_lea.vmem [#allocation7], %s941
        // Predicated region
        $region133: #{tpu_custom_call.1} parent=123 // pred_check
          %p943 = pneg %p168
        $region134: #{tpu_custom_call.1} parent=123 // pred_check_branch
          %945 = sbr.rel (%p943) target = $region136
        $region135: #{tpu_custom_call.1} parent=123 // pred_region
          %947 = dma.done %s940, 16
        $region136: #{tpu_custom_call.1} parent=123 // pred_fallthru
          _
        // Predicated region
        $region137: #{tpu_custom_call.1} parent=123 // pred_check
          %p948 = pneg %p273
        $region138: #{tpu_custom_call.1} parent=123 // pred_check_branch
          %950 = sbr.rel (%p948) target = $region140
        $region139: #{tpu_custom_call.1} parent=123 // pred_region
          %952 = dma.done [#allocation9], 512
        $region140: #{tpu_custom_call.1} parent=123 // pred_fallthru
          _
        // Predicated region
        $region141: #{tpu_custom_call.1} parent=123 // pred_check
          %p953 = pneg %p315
        $region142: #{tpu_custom_call.1} parent=123 // pred_check_branch
          %955 = sbr.rel (%p953) target = $region144
        $region143: #{tpu_custom_call.1} parent=123 // pred_region
          %957 = dma.done [#allocation9], 512
        $region144: #{tpu_custom_call.1} parent=123 // pred_fallthru
          _
        // Predicated region
        $region145: #{tpu_custom_call.1} parent=123 // pred_check
          %p958 = pneg %p357
        $region146: #{tpu_custom_call.1} parent=123 // pred_check_branch
          %960 = sbr.rel (%p958) target = $region148
        $region147: #{tpu_custom_call.1} parent=123 // pred_region
          %962 = dma.done [#allocation12], 512
        $region148: #{tpu_custom_call.1} parent=123 // pred_fallthru
          _
        // Predicated region
        $region149: #{tpu_custom_call.1} parent=123 // pred_check
          %p963 = pneg %p399
        $region150: #{tpu_custom_call.1} parent=123 // pred_check_branch
          %965 = sbr.rel (%p963) target = $region152
        $region151: #{tpu_custom_call.1} parent=123 // pred_region
          %967 = dma.done [#allocation12], 512
        $region152: #{tpu_custom_call.1} parent=123 // pred_fallthru
          _
        // Predicated region
        $region153: #{tpu_custom_call.1} parent=123 // pred_check
          %p968 = pneg %p441
        $region154: #{tpu_custom_call.1} parent=123 // pred_check_branch
          %970 = sbr.rel (%p968) target = $region156
        $region155: #{tpu_custom_call.1} parent=123 // pred_region
          %972 = dma.done [#allocation15], 512
        $region156: #{tpu_custom_call.1} parent=123 // pred_fallthru
          _
        // Predicated region
        $region157: #{tpu_custom_call.1} parent=123 // pred_check
          %p973 = pneg %p483
        $region158: #{tpu_custom_call.1} parent=123 // pred_check_branch
          %975 = sbr.rel (%p973) target = $region160
        $region159: #{tpu_custom_call.1} parent=123 // pred_region
          %977 = dma.done [#allocation15], 512
        $region160: #{tpu_custom_call.1} parent=123 // pred_fallthru
          _
        // Predicated region
        $region161: #{tpu_custom_call.1} parent=123 // pred_check
          %p978 = pneg %p525
        $region162: #{tpu_custom_call.1} parent=123 // pred_check_branch
          %980 = sbr.rel (%p978) target = $region164
        $region163: #{tpu_custom_call.1} parent=123 // pred_region
          %982 = dma.done [#allocation18], 512
        $region164: #{tpu_custom_call.1} parent=123 // pred_fallthru
          _
        %s983 = sand.u32 %s75, 1
        %s984 = scalar_lea.sflag [#allocation3], %s983
        %s985 = sand.u32 %s75, 1
        %s986 = smul.addr %s985, 8
        %s987 = scalar_lea.vmem [#allocation2], %s986
        %p988 = pneg %p88
        %p989 = pneg %p85
        %p990 = scmp.lt.s32.totalorder %s59, 1
        %s991 = scalar_select %p990, %s59, 1
        %s992 = smul.addr %s991, 2
        %s993 = smul.addr %s992, 8
        %s994 = scalar_lea.vmem %s1, %s993
        %p995 = pneg %p114
        %p996 = pneg %p111
        %s997 = sand.u32 %s55, 1
        %s998 = scalar_lea.sflag [#allocation6], %s997
        %s999 = sand.u32 %s129, 1
        %s1000 = smul.addr %s999, 8
        %s1001 = scalar_lea.vmem [#allocation5], %s1000
        %p1002 = pneg %p142
        %p1003 = pneg %p139
        %s1004 = sand.u32 %s55, 1
        %s1005 = scalar_lea.sflag [#allocation6], %s1004
        %s1006 = sand.u32 %s155, 1
        %s1007 = scalar_lea.vmem [#allocation7], %s1006
        %p1008 = pneg %p168
        %p1009 = pneg %p165
        %p1010 = pneg %p189
        %p1011 = pneg %p186
        %p1012 = pneg %p210
        %p1013 = pneg %p207
        %p1014 = pneg %p231
        %p1015 = pneg %p228
        %p1016 = pneg %p252
        %p1017 = pneg %p249
        %p1018 = pneg %p273
        %p1019 = pneg %p270
        %p1020 = pneg %p294
        %p1021 = pneg %p291
        %p1022 = pneg %p315
        %p1023 = pneg %p312
        %p1024 = pneg %p336
        %p1025 = pneg %p333
        %p1026 = pneg %p357
        %p1027 = pneg %p354
        %p1028 = pneg %p378
        %p1029 = pneg %p375
        %p1030 = pneg %p399
        %p1031 = pneg %p396
        %p1032 = pneg %p420
        %p1033 = pneg %p417
        %p1034 = pneg %p441
        %p1035 = pneg %p438
        %p1036 = pneg %p462
        %p1037 = pneg %p459
        %p1038 = pneg %p483
        %p1039 = pneg %p480
        %p1040 = pneg %p504
        %p1041 = pneg %p501
        %p1042 = pneg %p525
        %p1043 = pneg %p522
        %p1044 = pneg %p546
        %p1045 = pneg %p543
        %p1046 = pneg %p567
        %p1047 = pneg %p564
        %p1048 = pneg %p588
        %p1049 = pneg %p585
        %p1050 = pneg %p609
        %p1051 = pneg %p606
        %p1052 = pneg %p630
        %p1053 = pneg %p627
        %p1054 = pneg %p658
        %p1055 = pneg %p655
        %s1056 = sand.u32 %s645, 1
        %s1057 = scalar_lea.sflag [#allocation4], %s1056
        %s1058 = sand.u32 %s645, 1
        %s1059 = smul.addr %s1058, 8
        %s1060 = scalar_lea.vmem [#allocation19], %s1059
        %p1061 = pneg %p686
        %p1062 = pneg %p683
        %s1063 = sand.u32 %s673, 1
        %s1064 = scalar_lea.sflag [#allocation21], %s1063
        %s1065 = sand.u32 %s673, 1
        %s1066 = smul.addr %s1065, 32
        %s1067 = scalar_lea.vmem [#allocation20], %s1066
        %p1068 = scmp.lt.s32.totalorder %s59, 1
        %s1069 = scalar_select %p1068, %s59, 1
        %s1070 = smul.addr %s1069, 2
        %s1071 = smul.addr %s1070, 8
        %s1072 = scalar_lea.vmem %s1, %s1071
        %v1073 = vld [vmem:[%s24] sm:$0x1]
        %v1074 = vld [vmem:[%s25] sm:$0x1]
        %s1075 = smul.u32 %s60, 8
        %s1076 = scalar_lea.vmem %s923, %s1075 [#allocation2]
        %v1077 = vld [vmem:[%s1076] sm:$0xff]
        %v1078 = vld [vmem:[%s923] sm:$0xff]
        %v1079 = vld [vmem:[%s1072] sm:$0xff]
        %v1080 = vld [vmem:[%s1072 + $0x8] sm:$0xff]
        %v1081 = vld [vmem:[%s933] sm:$0xff]
        %v1082 = vld [vmem:[%s942] sm:$0x1]
        %v1083 = vld [vmem:[%s4] sm:$0xff]
        %v1084 = vld [vmem:[%s4 + $0x8] sm:$0xff]
        %v1085 = vld [vmem:[%s4 + $0x10] sm:$0xff]
        %v1086 = vld [vmem:[%s4 + $0x18] sm:$0xff]
        %v1087 = vld [vmem:[%s5] sm:$0x1]
        %v1089 = vperm.slane %v1087, 0
        %vm1091 = vcmask 261120
        %v1093 = vsel %vm1091, %v1077, 0
        %1095 = vmatpush.msra.mxu0 0.0
        %1096 = vmatpush.msra.mxu0 0.0
        %1097 = vmatpush.msra.mxu0 0.0
        %1098 = vmatpush.msra.mxu0 0.0
        %1099 = vmatpush.msra.mxu0 0.0
        %1100 = vmatpush.msra.mxu0 0.0
        %1101 = vmatpush.msra.mxu0 0.0
        %1102 = vmatpush.msra.mxu0 0.0
        %1103 = vmatpush.msra.mxu0 0.0
        %1104 = vmatpush.msra.mxu0 0.0
        %1105 = vmatpush.msra.mxu0 0.0
        %1106 = vmatpush.msra.mxu0 0.0
        %1107 = vmatpush.msra.mxu0 %v1086
        %1108 = vmatpush.msra.mxu0 %v1085
        %1109 = vmatpush.msra.mxu0 %v1084
        %1110 = vmatpush.msra.mxu0 %v1083
        %1111 = vmatmul.f32.gmra.mxu0 %v1093
        %v1112 = vpop.f32.mrf.mxu0
        %v1113 = vadd.f32 %v1089, %v1112
        %1114 = vdwg.mxu0
        %v1115 = vld [vmem:[%s6] sm:$0xff]
        %v1116 = vld [vmem:[%s6 + $0x8] sm:$0xff]
        %v1117 = vld [vmem:[%s6 + $0x10] sm:$0xff]
        %v1118 = vld [vmem:[%s6 + $0x18] sm:$0xff]
        %v1119 = vld [vmem:[%s7] sm:$0x1]
        %v1121 = vperm.slane %v1119, 0
        %v1124 = vsel %vm1091, %v1078, 0
        %1126 = vmatpush.msra.mxu0 0.0
        %1127 = vmatpush.msra.mxu0 0.0
        %1128 = vmatpush.msra.mxu0 0.0
        %1129 = vmatpush.msra.mxu0 0.0
        %1130 = vmatpush.msra.mxu0 0.0
        %1131 = vmatpush.msra.mxu0 0.0
        %1132 = vmatpush.msra.mxu0 0.0
        %1133 = vmatpush.msra.mxu0 0.0
        %1134 = vmatpush.msra.mxu0 0.0
        %1135 = vmatpush.msra.mxu0 0.0
        %1136 = vmatpush.msra.mxu0 0.0
        %1137 = vmatpush.msra.mxu0 0.0
        %1138 = vmatpush.msra.mxu0 %v1118
        %1139 = vmatpush.msra.mxu0 %v1117
        %1140 = vmatpush.msra.mxu0 %v1116
        %1141 = vmatpush.msra.mxu0 %v1115
        %1142 = vmatmul.f32.gmra.mxu0 %v1124
        %v1143 = vpop.f32.mrf.mxu0
        %v1144 = vadd.f32 %v1121, %v1143
        %1145 = vdwg.mxu0
        %v1146 = vld [vmem:[#allocation8] sm:$0xff]
        %v1147 = vld [vmem:[#allocation8 + $0x8] sm:$0xff]
        %v1148 = vld [vmem:[#allocation8 + $0x10] sm:$0xff]
        %v1149 = vld [vmem:[#allocation8 + $0x18] sm:$0xff]
        %v1150 = vld [vmem:[%s9] sm:$0x1]
        %v1152 = vperm.slane %v1150, 0
        %1154 = vmatpush.msra.mxu0 0.0
        %1155 = vmatpush.msra.mxu0 0.0
        %1156 = vmatpush.msra.mxu0 0.0
        %1157 = vmatpush.msra.mxu0 0.0
        %1158 = vmatpush.msra.mxu0 0.0
        %1159 = vmatpush.msra.mxu0 0.0
        %1160 = vmatpush.msra.mxu0 0.0
        %1161 = vmatpush.msra.mxu0 0.0
        %1162 = vmatpush.msra.mxu0 0.0
        %1163 = vmatpush.msra.mxu0 0.0
        %1164 = vmatpush.msra.mxu0 0.0
        %1165 = vmatpush.msra.mxu0 0.0
        %1166 = vmatpush.msra.mxu0 %v1149
        %1167 = vmatpush.msra.mxu0 %v1148
        %1168 = vmatpush.msra.mxu0 %v1147
        %1169 = vmatpush.msra.mxu0 %v1146
        %1170 = vmatmul.f32.gmra.mxu0 %v1124
        %v1171 = vpop.f32.mrf.mxu0
        %v1172 = vadd.f32 %v1152, %v1171
        %1173 = vdwg.mxu0
        %1175 = vrot.lane.b32.xlu0 %v1113, 120
        %v1176 = vpop.permute.xlu0 %1175
        %1178 = vrot.lane.b32.xlu0 %v1113, 112
        %v1179 = vpop.permute.xlu0 %1178
        %1181 = vrot.lane.b32.xlu0 %v1113, 104
        %v1182 = vpop.permute.xlu0 %1181
        %v1184 = vrot.slane %v1179, 4
        %vm1185 = vcmask 1047556
        %v1186 = vsel %vm1185, %v1184, %v1113
        %v1187 = vrot.slane %v1113, 4
        %v1188 = vsel %vm1185, %v1179, %v1187
        %v1190 = vunpack.c.l.s4 1983009808
        %v1191 = vunpack.c.0.s8 %v1190
        %v1192 = vperm.slane %v1186, %v1191
        %v1194 = vunpack.c.l.s4 1983009808
        %v1195 = vunpack.c.0.s8 %v1194
        %v1196 = vperm.slane %v1188, %v1195
        %v1197 = vrot.slane %v1182, 4
        %v1198 = vsel %vm1185, %v1197, %v1176
        %v1199 = vrot.slane %v1176, 4
        %v1200 = vsel %vm1185, %v1182, %v1199
        %v1202 = vunpack.c.l.s4 1983009808
        %v1203 = vunpack.c.0.s8 %v1202
        %v1204 = vperm.slane %v1198, %v1203
        %v1206 = vunpack.c.l.s4 1983009808
        %v1207 = vunpack.c.0.s8 %v1206
        %v1208 = vperm.slane %v1200, %v1207
        %v1209 = vrot.slane %v1204, 4
        %v1210 = vsel %vm1185, %v1209, %v1192
        %v1211 = vrot.slane %v1192, 4
        %v1212 = vsel %vm1185, %v1204, %v1211
        %v1214 = vunpack.c.l.s4 1934713408
        %v1215 = vunpack.c.0.s8 %v1214
        %v1216 = vperm.slane %v1210, %v1215
        %v1218 = vunpack.c.l.s4 1934713408
        %v1219 = vunpack.c.0.s8 %v1218
        %v1220 = vperm.slane %v1212, %v1219
        %v1221 = vrot.slane %v1208, 4
        %v1222 = vsel %vm1185, %v1221, %v1196
        %v1223 = vrot.slane %v1196, 4
        %v1224 = vsel %vm1185, %v1208, %v1223
        %v1226 = vunpack.c.l.s4 1934713408
        %v1227 = vunpack.c.0.s8 %v1226
        %v1228 = vperm.slane %v1222, %v1227
        %v1230 = vunpack.c.l.s4 1934713408
        %v1231 = vunpack.c.0.s8 %v1230
        %v1232 = vperm.slane %v1224, %v1231
        %v1233 = vrot.slane %v1216, 4
        %v1234 = vsel %vm1185, 0.0, %v1233
        %v1235 = vrot.slane %v1220, 4
        %v1236 = vsel %vm1185, 0.0, %v1235
        %v1237 = vrot.slane %v1228, 4
        %v1238 = vsel %vm1185, 0.0, %v1237
        %v1239 = vrot.slane %v1232, 4
        %v1240 = vsel %vm1185, 0.0, %v1239
        %v1241 = vsel %vm1185, %v1235, %v1216
        %v1243 = vunpack.c.l.s4 1983009808
        %v1244 = vunpack.c.0.s8 %v1243
        %v1245 = vperm.slane %v1241, %v1244
        %v1246 = vrot.slane %v1236, 4
        %v1247 = vsel %vm1185, %v1246, %v1234
        %v1249 = vunpack.c.l.s4 1983009808
        %v1250 = vunpack.c.0.s8 %v1249
        %v1251 = vperm.slane %v1247, %v1250
        %v1252 = vsel %vm1185, %v1239, %v1228
        %v1254 = vunpack.c.l.s4 1983009808
        %v1255 = vunpack.c.0.s8 %v1254
        %v1256 = vperm.slane %v1252, %v1255
        %v1257 = vrot.slane %v1240, 4
        %v1258 = vsel %vm1185, %v1257, %v1238
        %v1260 = vunpack.c.l.s4 1983009808
        %v1261 = vunpack.c.0.s8 %v1260
        %v1262 = vperm.slane %v1258, %v1261
        %v1263 = vrot.slane %v1251, 4
        %v1264 = vsel %vm1185, %v1263, %v1245
        %v1265 = vrot.slane %v1245, 4
        %v1266 = vsel %vm1185, %v1251, %v1265
        %v1268 = vunpack.c.l.s4 1934713408
        %v1269 = vunpack.c.0.s8 %v1268
        %v1270 = vperm.slane %v1264, %v1269
        %v1272 = vunpack.c.l.s4 1934713408
        %v1273 = vunpack.c.0.s8 %v1272
        %v1274 = vperm.slane %v1266, %v1273
        %v1275 = vrot.slane %v1262, 4
        %v1276 = vsel %vm1185, %v1275, %v1256
        %v1277 = vrot.slane %v1256, 4
        %v1278 = vsel %vm1185, %v1262, %v1277
        %v1280 = vunpack.c.l.s4 1934713408
        %v1281 = vunpack.c.0.s8 %v1280
        %v1282 = vperm.slane %v1276, %v1281
        %v1284 = vunpack.c.l.s4 1934713408
        %v1285 = vunpack.c.0.s8 %v1284
        %v1286 = vperm.slane %v1278, %v1285
        %v1287 = vrot.slane %v1282, 4
        %v1288 = vsel %vm1185, %v1287, %v1270
        %v1289 = vrot.slane %v1270, 4
        %v1290 = vsel %vm1185, %v1282, %v1289
        %v1291 = vrot.slane %v1286, 4
        %v1292 = vsel %vm1185, %v1291, %v1274
        %v1293 = vrot.slane %v1274, 4
        %v1294 = vsel %vm1185, %v1286, %v1293
        %1296 = vrot.lane.b32.xlu0 %v1144, 120
        %v1297 = vpop.permute.xlu0 %1296
        %1299 = vrot.lane.b32.xlu0 %v1144, 112
        %v1300 = vpop.permute.xlu0 %1299
        %1302 = vrot.lane.b32.xlu0 %v1144, 104
        %v1303 = vpop.permute.xlu0 %1302
        %v1305 = vrot.slane %v1300, 4
        %v1306 = vsel %vm1185, %v1305, %v1144
        %v1307 = vrot.slane %v1144, 4
        %v1308 = vsel %vm1185, %v1300, %v1307
        %v1310 = vunpack.c.l.s4 1983009808
        %v1311 = vunpack.c.0.s8 %v1310
        %v1312 = vperm.slane %v1306, %v1311
        %v1314 = vunpack.c.l.s4 1983009808
        %v1315 = vunpack.c.0.s8 %v1314
        %v1316 = vperm.slane %v1308, %v1315
        %v1317 = vrot.slane %v1303, 4
        %v1318 = vsel %vm1185, %v1317, %v1297
        %v1319 = vrot.slane %v1297, 4
        %v1320 = vsel %vm1185, %v1303, %v1319
        %v1322 = vunpack.c.l.s4 1983009808
        %v1323 = vunpack.c.0.s8 %v1322
        %v1324 = vperm.slane %v1318, %v1323
        %v1326 = vunpack.c.l.s4 1983009808
        %v1327 = vunpack.c.0.s8 %v1326
        %v1328 = vperm.slane %v1320, %v1327
        %v1329 = vrot.slane %v1324, 4
        %v1330 = vsel %vm1185, %v1329, %v1312
        %v1331 = vrot.slane %v1312, 4
        %v1332 = vsel %vm1185, %v1324, %v1331
        %v1334 = vunpack.c.l.s4 1934713408
        %v1335 = vunpack.c.0.s8 %v1334
        %v1336 = vperm.slane %v1330, %v1335
        %v1338 = vunpack.c.l.s4 1934713408
        %v1339 = vunpack.c.0.s8 %v1338
        %v1340 = vperm.slane %v1332, %v1339
        %v1341 = vrot.slane %v1328, 4
        %v1342 = vsel %vm1185, %v1341, %v1316
        %v1343 = vrot.slane %v1316, 4
        %v1344 = vsel %vm1185, %v1328, %v1343
        %v1346 = vunpack.c.l.s4 1934713408
        %v1347 = vunpack.c.0.s8 %v1346
        %v1348 = vperm.slane %v1342, %v1347
        %v1350 = vunpack.c.l.s4 1934713408
        %v1351 = vunpack.c.0.s8 %v1350
        %v1352 = vperm.slane %v1344, %v1351
        %v1353 = vrot.slane %v1336, 4
        %v1354 = vsel %vm1185, 0.0, %v1353
        %v1355 = vrot.slane %v1340, 4
        %v1356 = vsel %vm1185, 0.0, %v1355
        %v1357 = vrot.slane %v1348, 4
        %v1358 = vsel %vm1185, 0.0, %v1357
        %v1359 = vrot.slane %v1352, 4
        %v1360 = vsel %vm1185, 0.0, %v1359
        %v1361 = vsel %vm1185, %v1355, %v1336
        %v1363 = vunpack.c.l.s4 1983009808
        %v1364 = vunpack.c.0.s8 %v1363
        %v1365 = vperm.slane %v1361, %v1364
        %v1366 = vrot.slane %v1356, 4
        %v1367 = vsel %vm1185, %v1366, %v1354
        %v1369 = vunpack.c.l.s4 1983009808
        %v1370 = vunpack.c.0.s8 %v1369
        %v1371 = vperm.slane %v1367, %v1370
        %v1372 = vsel %vm1185, %v1359, %v1348
        %v1374 = vunpack.c.l.s4 1983009808
        %v1375 = vunpack.c.0.s8 %v1374
        %v1376 = vperm.slane %v1372, %v1375
        %v1377 = vrot.slane %v1360, 4
        %v1378 = vsel %vm1185, %v1377, %v1358
        %v1380 = vunpack.c.l.s4 1983009808
        %v1381 = vunpack.c.0.s8 %v1380
        %v1382 = vperm.slane %v1378, %v1381
        %v1383 = vrot.slane %v1371, 4
        %v1384 = vsel %vm1185, %v1383, %v1365
        %v1385 = vrot.slane %v1365, 4
        %v1386 = vsel %vm1185, %v1371, %v1385
        %v1388 = vunpack.c.l.s4 1934713408
        %v1389 = vunpack.c.0.s8 %v1388
        %v1390 = vperm.slane %v1384, %v1389
        %v1392 = vunpack.c.l.s4 1934713408
        %v1393 = vunpack.c.0.s8 %v1392
        %v1394 = vperm.slane %v1386, %v1393
        %v1395 = vrot.slane %v1382, 4
        %v1396 = vsel %vm1185, %v1395, %v1376
        %v1397 = vrot.slane %v1376, 4
        %v1398 = vsel %vm1185, %v1382, %v1397
        %v1400 = vunpack.c.l.s4 1934713408
        %v1401 = vunpack.c.0.s8 %v1400
        %v1402 = vperm.slane %v1396, %v1401
        %v1404 = vunpack.c.l.s4 1934713408
        %v1405 = vunpack.c.0.s8 %v1404
        %v1406 = vperm.slane %v1398, %v1405
        %v1407 = vrot.slane %v1402, 4
        %v1408 = vsel %vm1185, %v1407, %v1390
        %v1409 = vrot.slane %v1390, 4
        %v1410 = vsel %vm1185, %v1402, %v1409
        %v1411 = vrot.slane %v1406, 4
        %v1412 = vsel %vm1185, %v1411, %v1394
        %v1413 = vrot.slane %v1394, 4
        %v1414 = vsel %vm1185, %v1406, %v1413
        %1416 = vrot.lane.b32.xlu0 %v1172, 120
        %v1417 = vpop.permute.xlu0 %1416
        %1419 = vrot.lane.b32.xlu0 %v1172, 112
        %v1420 = vpop.permute.xlu0 %1419
        %1422 = vrot.lane.b32.xlu0 %v1172, 104
        %v1423 = vpop.permute.xlu0 %1422
        %v1425 = vrot.slane %v1420, 4
        %v1426 = vsel %vm1185, %v1425, %v1172
        %v1427 = vrot.slane %v1172, 4
        %v1428 = vsel %vm1185, %v1420, %v1427
        %v1430 = vunpack.c.l.s4 1983009808
        %v1431 = vunpack.c.0.s8 %v1430
        %v1432 = vperm.slane %v1426, %v1431
        %v1434 = vunpack.c.l.s4 1983009808
        %v1435 = vunpack.c.0.s8 %v1434
        %v1436 = vperm.slane %v1428, %v1435
        %v1437 = vrot.slane %v1423, 4
        %v1438 = vsel %vm1185, %v1437, %v1417
        %v1439 = vrot.slane %v1417, 4
        %v1440 = vsel %vm1185, %v1423, %v1439
        %v1442 = vunpack.c.l.s4 1983009808
        %v1443 = vunpack.c.0.s8 %v1442
        %v1444 = vperm.slane %v1438, %v1443
        %v1446 = vunpack.c.l.s4 1983009808
        %v1447 = vunpack.c.0.s8 %v1446
        %v1448 = vperm.slane %v1440, %v1447
        %v1449 = vrot.slane %v1444, 4
        %v1450 = vsel %vm1185, %v1449, %v1432
        %v1451 = vrot.slane %v1432, 4
        %v1452 = vsel %vm1185, %v1444, %v1451
        %v1454 = vunpack.c.l.s4 1934713408
        %v1455 = vunpack.c.0.s8 %v1454
        %v1456 = vperm.slane %v1450, %v1455
        %v1458 = vunpack.c.l.s4 1934713408
        %v1459 = vunpack.c.0.s8 %v1458
        %v1460 = vperm.slane %v1452, %v1459
        %v1461 = vrot.slane %v1448, 4
        %v1462 = vsel %vm1185, %v1461, %v1436
        %v1463 = vrot.slane %v1436, 4
        %v1464 = vsel %vm1185, %v1448, %v1463
        %v1466 = vunpack.c.l.s4 1934713408
        %v1467 = vunpack.c.0.s8 %v1466
        %v1468 = vperm.slane %v1462, %v1467
        %v1470 = vunpack.c.l.s4 1934713408
        %v1471 = vunpack.c.0.s8 %v1470
        %v1472 = vperm.slane %v1464, %v1471
        %v1473 = vrot.slane %v1456, 4
        %v1474 = vsel %vm1185, 0.0, %v1473
        %v1475 = vrot.slane %v1460, 4
        %v1476 = vsel %vm1185, 0.0, %v1475
        %v1477 = vrot.slane %v1468, 4
        %v1478 = vsel %vm1185, 0.0, %v1477
        %v1479 = vrot.slane %v1472, 4
        %v1480 = vsel %vm1185, 0.0, %v1479
        %v1481 = vsel %vm1185, %v1475, %v1456
        %v1483 = vunpack.c.l.s4 1983009808
        %v1484 = vunpack.c.0.s8 %v1483
        %v1485 = vperm.slane %v1481, %v1484
        %v1486 = vrot.slane %v1476, 4
        %v1487 = vsel %vm1185, %v1486, %v1474
        %v1489 = vunpack.c.l.s4 1983009808
        %v1490 = vunpack.c.0.s8 %v1489
        %v1491 = vperm.slane %v1487, %v1490
        %v1492 = vsel %vm1185, %v1479, %v1468
        %v1494 = vunpack.c.l.s4 1983009808
        %v1495 = vunpack.c.0.s8 %v1494
        %v1496 = vperm.slane %v1492, %v1495
        %v1497 = vrot.slane %v1480, 4
        %v1498 = vsel %vm1185, %v1497, %v1478
        %v1500 = vunpack.c.l.s4 1983009808
        %v1501 = vunpack.c.0.s8 %v1500
        %v1502 = vperm.slane %v1498, %v1501
        %v1503 = vrot.slane %v1491, 4
        %v1504 = vsel %vm1185, %v1503, %v1485
        %v1505 = vrot.slane %v1485, 4
        %v1506 = vsel %vm1185, %v1491, %v1505
        %v1508 = vunpack.c.l.s4 1934713408
        %v1509 = vunpack.c.0.s8 %v1508
        %v1510 = vperm.slane %v1504, %v1509
        %v1512 = vunpack.c.l.s4 1934713408
        %v1513 = vunpack.c.0.s8 %v1512
        %v1514 = vperm.slane %v1506, %v1513
        %v1515 = vrot.slane %v1502, 4
        %v1516 = vsel %vm1185, %v1515, %v1496
        %v1517 = vrot.slane %v1496, 4
        %v1518 = vsel %vm1185, %v1502, %v1517
        %v1520 = vunpack.c.l.s4 1934713408
        %v1521 = vunpack.c.0.s8 %v1520
        %v1522 = vperm.slane %v1516, %v1521
        %v1524 = vunpack.c.l.s4 1934713408
        %v1525 = vunpack.c.0.s8 %v1524
        %v1526 = vperm.slane %v1518, %v1525
        %v1527 = vrot.slane %v1522, 4
        %v1528 = vsel %vm1185, %v1527, %v1510
        %v1529 = vrot.slane %v1510, 4
        %v1530 = vsel %vm1185, %v1522, %v1529
        %v1531 = vrot.slane %v1526, 4
        %v1532 = vsel %vm1185, %v1531, %v1514
        %v1533 = vrot.slane %v1514, 4
        %v1534 = vsel %vm1185, %v1526, %v1533
        %vm1535 = vcmask 64512
        %v1537 = vsel %vm1535, %v1288, 0
        %v1540 = vsel %vm1535, %v1408, 0
        %1542 = vmatpush.xpose.msra.mxu0 0.0
        %1543 = vmatpush.xpose.msra.mxu0 0.0
        %1544 = vmatpush.xpose.msra.mxu0 0.0
        %1545 = vmatpush.xpose.msra.mxu0 0.0
        %1546 = vmatpush.xpose.msra.mxu0 0.0
        %1547 = vmatpush.xpose.msra.mxu0 0.0
        %1548 = vmatpush.xpose.msra.mxu0 0.0
        %1549 = vmatpush.xpose.msra.mxu0 0.0
        %1550 = vmatpush.xpose.msra.mxu0 0.0
        %1551 = vmatpush.xpose.msra.mxu0 0.0
        %1552 = vmatpush.xpose.msra.mxu0 0.0
        %1553 = vmatpush.xpose.msra.mxu0 0.0
        %1554 = vmatpush.xpose.msra.mxu0 0.0
        %1555 = vmatpush.xpose.msra.mxu0 0.0
        %1556 = vmatpush.xpose.msra.mxu0 0.0
        %1557 = vmatpush.xpose.msra.mxu0 %v1540
        %1558 = vmatmul.f32.gmra.mxu0 %v1537
        %v1559 = vpop.f32.mrf.mxu0
        %v1560 = vadd.f32 %v1081, %v1559
        %1561 = vdwg.mxu0
        %v1563 = vsel %vm1535, %v1290, 0
        %v1566 = vsel %vm1535, %v1410, 0
        %1568 = vmatpush.xpose.msra.mxu0 0.0
        %1569 = vmatpush.xpose.msra.mxu0 0.0
        %1570 = vmatpush.xpose.msra.mxu0 0.0
        %1571 = vmatpush.xpose.msra.mxu0 0.0
        %1572 = vmatpush.xpose.msra.mxu0 0.0
        %1573 = vmatpush.xpose.msra.mxu0 0.0
        %1574 = vmatpush.xpose.msra.mxu0 0.0
        %1575 = vmatpush.xpose.msra.mxu0 0.0
        %1576 = vmatpush.xpose.msra.mxu0 0.0
        %1577 = vmatpush.xpose.msra.mxu0 0.0
        %1578 = vmatpush.xpose.msra.mxu0 0.0
        %1579 = vmatpush.xpose.msra.mxu0 0.0
        %1580 = vmatpush.xpose.msra.mxu0 0.0
        %1581 = vmatpush.xpose.msra.mxu0 0.0
        %1582 = vmatpush.xpose.msra.mxu0 0.0
        %1583 = vmatpush.xpose.msra.mxu0 %v1566
        %1584 = vmatmul.f32.gmra.mxu0 %v1563
        %v1585 = vpop.f32.mrf.mxu0
        %v1586 = vadd.f32 %v1081, %v1585
        %1587 = vdwg.mxu0
        %v1589 = vsel %vm1535, %v1292, 0
        %v1592 = vsel %vm1535, %v1412, 0
        %1594 = vmatpush.xpose.msra.mxu0 0.0
        %1595 = vmatpush.xpose.msra.mxu0 0.0
        %1596 = vmatpush.xpose.msra.mxu0 0.0
        %1597 = vmatpush.xpose.msra.mxu0 0.0
        %1598 = vmatpush.xpose.msra.mxu0 0.0
        %1599 = vmatpush.xpose.msra.mxu0 0.0
        %1600 = vmatpush.xpose.msra.mxu0 0.0
        %1601 = vmatpush.xpose.msra.mxu0 0.0
        %1602 = vmatpush.xpose.msra.mxu0 0.0
        %1603 = vmatpush.xpose.msra.mxu0 0.0
        %1604 = vmatpush.xpose.msra.mxu0 0.0
        %1605 = vmatpush.xpose.msra.mxu0 0.0
        %1606 = vmatpush.xpose.msra.mxu0 0.0
        %1607 = vmatpush.xpose.msra.mxu0 0.0
        %1608 = vmatpush.xpose.msra.mxu0 0.0
        %1609 = vmatpush.xpose.msra.mxu0 %v1592
        %1610 = vmatmul.f32.gmra.mxu0 %v1589
        %v1611 = vpop.f32.mrf.mxu0
        %v1612 = vadd.f32 %v1081, %v1611
        %1613 = vdwg.mxu0
        %v1615 = vsel %vm1535, %v1294, 0
        %v1618 = vsel %vm1535, %v1414, 0
        %1620 = vmatpush.xpose.msra.mxu0 0.0
        %1621 = vmatpush.xpose.msra.mxu0 0.0
        %1622 = vmatpush.xpose.msra.mxu0 0.0
        %1623 = vmatpush.xpose.msra.mxu0 0.0
        %1624 = vmatpush.xpose.msra.mxu0 0.0
        %1625 = vmatpush.xpose.msra.mxu0 0.0
        %1626 = vmatpush.xpose.msra.mxu0 0.0
        %1627 = vmatpush.xpose.msra.mxu0 0.0
        %1628 = vmatpush.xpose.msra.mxu0 0.0
        %1629 = vmatpush.xpose.msra.mxu0 0.0
        %1630 = vmatpush.xpose.msra.mxu0 0.0
        %1631 = vmatpush.xpose.msra.mxu0 0.0
        %1632 = vmatpush.xpose.msra.mxu0 0.0
        %1633 = vmatpush.xpose.msra.mxu0 0.0
        %1634 = vmatpush.xpose.msra.mxu0 0.0
        %1635 = vmatpush.xpose.msra.mxu0 %v1618
        %1636 = vmatmul.f32.gmra.mxu0 %v1615
        %v1637 = vpop.f32.mrf.mxu0
        %v1638 = vadd.f32 %v1081, %v1637
        %1639 = vdwg.mxu0
        %v1640 = vsel %vm1535, %v1560, -inf
        %1641 = vmax.xlane.f32.xlu0 %v1640
        %v1642 = vpop.xlane.xlu0 %1641
        %v1643 = vsel %vm1535, %v1586, -inf
        %1644 = vmax.xlane.f32.xlu0 %v1643
        %v1645 = vpop.xlane.xlu0 %1644
        %v1646 = vsel %vm1535, %v1612, -inf
        %1647 = vmax.xlane.f32.xlu0 %v1646
        %v1648 = vpop.xlane.xlu0 %1647
        %v1649 = vsel %vm1535, %v1638, -inf
        %1650 = vmax.xlane.f32.xlu0 %v1649
        %v1651 = vpop.xlane.xlu0 %1650
        %v1652 = vsub.f32 %v1560, %v1642
        %v1653 = vsub.f32 %v1586, %v1645
        %v1654 = vsub.f32 %v1612, %v1648
        %v1655 = vsub.f32 %v1638, %v1651
        %v1656 = vmul.f32 %v1652, 1.442695
        %v1657 = vpow.pop %v1656
        %v1658 = vmul.f32 %v1653, 1.442695
        %v1659 = vpow.pop %v1658
        %v1660 = vmul.f32 %v1654, 1.442695
        %v1661 = vpow.pop %v1660
        %v1662 = vmul.f32 %v1655, 1.442695
        %v1663 = vpow.pop %v1662
        %v1664 = vsel %vm1535, %v1657, 0.0
        %1665 = vadd.xlane.f32.xlu0 %v1664
        %v1666 = vpop.xlane.xlu0 %1665
        %v1667 = vsel %vm1535, %v1659, 0.0
        %1668 = vadd.xlane.f32.xlu0 %v1667
        %v1669 = vpop.xlane.xlu0 %1668
        %v1670 = vsel %vm1535, %v1661, 0.0
        %1671 = vadd.xlane.f32.xlu0 %v1670
        %v1672 = vpop.xlane.xlu0 %1671
        %v1673 = vsel %vm1535, %v1663, 0.0
        %1674 = vadd.xlane.f32.xlu0 %v1673
        %v1675 = vpop.xlane.xlu0 %1674
        %v1676 = vrcp.pop %v1666
        %v1677 = vrcp.pop %v1669
        %v1678 = vrcp.pop %v1672
        %v1679 = vrcp.pop %v1675
        %v1680 = vmul.f32 %v1657, %v1676
        %v1681 = vmul.f32 %v1659, %v1677
        %v1682 = vmul.f32 %v1661, %v1678
        %v1683 = vmul.f32 %v1663, %v1679
        %v1685 = vsel %vm1535, %v1680, 0
        %1687 = vmatpush.msra.mxu0 0.0
        %1688 = vmatpush.msra.mxu0 0.0
        %1689 = vmatpush.msra.mxu0 0.0
        %1690 = vmatpush.msra.mxu0 0.0
        %1691 = vmatpush.msra.mxu0 0.0
        %1692 = vmatpush.msra.mxu0 0.0
        %1693 = vmatpush.msra.mxu0 0.0
        %1694 = vmatpush.msra.mxu0 0.0
        %1695 = vmatpush.msra.mxu0 0.0
        %1696 = vmatpush.msra.mxu0 0.0
        %1697 = vmatpush.msra.mxu0 0.0
        %1698 = vmatpush.msra.mxu0 0.0
        %1699 = vmatpush.msra.mxu0 0.0
        %1700 = vmatpush.msra.mxu0 0.0
        %1701 = vmatpush.msra.mxu0 0.0
        %1702 = vmatpush.msra.mxu0 %v1528
        %1703 = vmatmul.f32.gmra.mxu0 %v1685
        %v1704 = vpop.f32.mrf.mxu0
        %v1705 = vadd.f32 0.0, %v1704
        %1706 = vdwg.mxu0
        %v1708 = vsel %vm1535, %v1681, 0
        %1710 = vmatpush.msra.mxu0 0.0
        %1711 = vmatpush.msra.mxu0 0.0
        %1712 = vmatpush.msra.mxu0 0.0
        %1713 = vmatpush.msra.mxu0 0.0
        %1714 = vmatpush.msra.mxu0 0.0
        %1715 = vmatpush.msra.mxu0 0.0
        %1716 = vmatpush.msra.mxu0 0.0
        %1717 = vmatpush.msra.mxu0 0.0
        %1718 = vmatpush.msra.mxu0 0.0
        %1719 = vmatpush.msra.mxu0 0.0
        %1720 = vmatpush.msra.mxu0 0.0
        %1721 = vmatpush.msra.mxu0 0.0
        %1722 = vmatpush.msra.mxu0 0.0
        %1723 = vmatpush.msra.mxu0 0.0
        %1724 = vmatpush.msra.mxu0 0.0
        %1725 = vmatpush.msra.mxu0 %v1530
        %1726 = vmatmul.f32.gmra.mxu0 %v1708
        %v1727 = vpop.f32.mrf.mxu0
        %v1728 = vadd.f32 0.0, %v1727
        %1729 = vdwg.mxu0
        %v1731 = vsel %vm1535, %v1682, 0
        %1733 = vmatpush.msra.mxu0 0.0
        %1734 = vmatpush.msra.mxu0 0.0
        %1735 = vmatpush.msra.mxu0 0.0
        %1736 = vmatpush.msra.mxu0 0.0
        %1737 = vmatpush.msra.mxu0 0.0
        %1738 = vmatpush.msra.mxu0 0.0
        %1739 = vmatpush.msra.mxu0 0.0
        %1740 = vmatpush.msra.mxu0 0.0
        %1741 = vmatpush.msra.mxu0 0.0
        %1742 = vmatpush.msra.mxu0 0.0
        %1743 = vmatpush.msra.mxu0 0.0
        %1744 = vmatpush.msra.mxu0 0.0
        %1745 = vmatpush.msra.mxu0 0.0
        %1746 = vmatpush.msra.mxu0 0.0
        %1747 = vmatpush.msra.mxu0 0.0
        %1748 = vmatpush.msra.mxu0 %v1532
        %1749 = vmatmul.f32.gmra.mxu0 %v1731
        %v1750 = vpop.f32.mrf.mxu0
        %v1751 = vadd.f32 0.0, %v1750
        %1752 = vdwg.mxu0
        %v1754 = vsel %vm1535, %v1683, 0
        %1756 = vmatpush.msra.mxu0 0.0
        %1757 = vmatpush.msra.mxu0 0.0
        %1758 = vmatpush.msra.mxu0 0.0
        %1759 = vmatpush.msra.mxu0 0.0
        %1760 = vmatpush.msra.mxu0 0.0
        %1761 = vmatpush.msra.mxu0 0.0
        %1762 = vmatpush.msra.mxu0 0.0
        %1763 = vmatpush.msra.mxu0 0.0
        %1764 = vmatpush.msra.mxu0 0.0
        %1765 = vmatpush.msra.mxu0 0.0
        %1766 = vmatpush.msra.mxu0 0.0
        %1767 = vmatpush.msra.mxu0 0.0
        %1768 = vmatpush.msra.mxu0 0.0
        %1769 = vmatpush.msra.mxu0 0.0
        %1770 = vmatpush.msra.mxu0 0.0
        %1771 = vmatpush.msra.mxu0 %v1534
        %1772 = vmatmul.f32.gmra.mxu0 %v1754
        %v1773 = vpop.f32.mrf.mxu0
        %v1774 = vadd.f32 0.0, %v1773
        %1775 = vdwg.mxu0
        %v1776 = vrot.slane %v1751, 4
        %v1777 = vsel %vm1185, %v1776, %v1705
        %v1778 = vrot.slane %v1705, 4
        %v1779 = vsel %vm1185, %v1751, %v1778
        %v1781 = vunpack.c.l.s4 1983009808
        %v1782 = vunpack.c.0.s8 %v1781
        %v1783 = vperm.slane %v1777, %v1782
        %v1785 = vunpack.c.l.s4 1983009808
        %v1786 = vunpack.c.0.s8 %v1785
        %v1787 = vperm.slane %v1779, %v1786
        %v1788 = vrot.slane %v1774, 4
        %v1789 = vsel %vm1185, %v1788, %v1728
        %v1790 = vrot.slane %v1728, 4
        %v1791 = vsel %vm1185, %v1774, %v1790
        %v1793 = vunpack.c.l.s4 1983009808
        %v1794 = vunpack.c.0.s8 %v1793
        %v1795 = vperm.slane %v1789, %v1794
        %v1797 = vunpack.c.l.s4 1983009808
        %v1798 = vunpack.c.0.s8 %v1797
        %v1799 = vperm.slane %v1791, %v1798
        %v1800 = vrot.slane %v1795, 4
        %v1801 = vsel %vm1185, %v1800, %v1783
        %v1802 = vrot.slane %v1783, 4
        %v1803 = vsel %vm1185, %v1795, %v1802
        %v1805 = vunpack.c.l.s4 1934713408
        %v1806 = vunpack.c.0.s8 %v1805
        %v1807 = vperm.slane %v1801, %v1806
        %v1809 = vunpack.c.l.s4 1934713408
        %v1810 = vunpack.c.0.s8 %v1809
        %v1811 = vperm.slane %v1803, %v1810
        %v1812 = vrot.slane %v1799, 4
        %v1813 = vsel %vm1185, %v1812, %v1787
        %v1814 = vrot.slane %v1787, 4
        %v1815 = vsel %vm1185, %v1799, %v1814
        %v1817 = vunpack.c.l.s4 1934713408
        %v1818 = vunpack.c.0.s8 %v1817
        %v1819 = vperm.slane %v1813, %v1818
        %v1821 = vunpack.c.l.s4 1934713408
        %v1822 = vunpack.c.0.s8 %v1821
        %v1823 = vperm.slane %v1815, %v1822
        %v1824 = vrot.slane %v1807, 4
        %v1825 = vsel %vm1185, 0.0, %v1824
        %v1826 = vrot.slane %v1811, 4
        %v1827 = vsel %vm1185, 0.0, %v1826
        %v1828 = vrot.slane %v1819, 4
        %v1829 = vsel %vm1185, 0.0, %v1828
        %v1830 = vrot.slane %v1823, 4
        %v1831 = vsel %vm1185, 0.0, %v1830
        %v1832 = vsel %vm1185, %v1826, %v1807
        %v1834 = vunpack.c.l.s4 1983009808
        %v1835 = vunpack.c.0.s8 %v1834
        %v1836 = vperm.slane %v1832, %v1835
        %v1837 = vrot.slane %v1827, 4
        %v1838 = vsel %vm1185, %v1837, %v1825
        %v1840 = vunpack.c.l.s4 1983009808
        %v1841 = vunpack.c.0.s8 %v1840
        %v1842 = vperm.slane %v1838, %v1841
        %v1843 = vsel %vm1185, %v1830, %v1819
        %v1845 = vunpack.c.l.s4 1983009808
        %v1846 = vunpack.c.0.s8 %v1845
        %v1847 = vperm.slane %v1843, %v1846
        %v1848 = vrot.slane %v1831, 4
        %v1849 = vsel %vm1185, %v1848, %v1829
        %v1851 = vunpack.c.l.s4 1983009808
        %v1852 = vunpack.c.0.s8 %v1851
        %v1853 = vperm.slane %v1849, %v1852
        %v1854 = vrot.slane %v1842, 4
        %v1855 = vsel %vm1185, %v1854, %v1836
        %v1856 = vrot.slane %v1836, 4
        %v1857 = vsel %vm1185, %v1842, %v1856
        %v1859 = vunpack.c.l.s4 1934713408
        %v1860 = vunpack.c.0.s8 %v1859
        %v1861 = vperm.slane %v1855, %v1860
        %v1863 = vunpack.c.l.s4 1934713408
        %v1864 = vunpack.c.0.s8 %v1863
        %v1865 = vperm.slane %v1857, %v1864
        %v1866 = vrot.slane %v1853, 4
        %v1867 = vsel %vm1185, %v1866, %v1847
        %v1868 = vrot.slane %v1847, 4
        %v1869 = vsel %vm1185, %v1853, %v1868
        %v1871 = vunpack.c.l.s4 1934713408
        %v1872 = vunpack.c.0.s8 %v1871
        %v1873 = vperm.slane %v1867, %v1872
        %v1875 = vunpack.c.l.s4 1934713408
        %v1876 = vunpack.c.0.s8 %v1875
        %v1877 = vperm.slane %v1869, %v1876
        %v1878 = vrot.slane %v1873, 4
        %v1879 = vsel %vm1185, %v1878, %v1861
        %v1880 = vrot.slane %v1861, 4
        %v1881 = vsel %vm1185, %v1873, %v1880
        %v1882 = vrot.slane %v1877, 4
        %v1883 = vsel %vm1185, %v1882, %v1865
        %v1884 = vrot.slane %v1865, 4
        %v1885 = vsel %vm1185, %v1877, %v1884
        %1887 = vrot.lane.b32.xlu0 %v1881, 8
        %v1888 = vpop.permute.xlu0 %1887
        %1891 = vrot.lane.b32.xlu0 %v1883, 16
        %v1892 = vpop.permute.xlu0 %1891
        %1895 = vrot.lane.b32.xlu0 %v1885, 24
        %v1896 = vpop.permute.xlu0 %1895
        %v1898 = vsel %vm1535, %v1879, %v1888
        %vm1899 = vcmask 130048
        %v1900 = vsel %vm1899, %v1898, %v1892
        %vm1901 = vcmask 195584
        %v1902 = vsel %vm1901, %v1900, %v1896
        %v1903 = vld [vmem:[#allocation10] sm:$0xff]
        %v1904 = vld [vmem:[#allocation10 + $0x8] sm:$0xff]
        %v1905 = vld [vmem:[#allocation10 + $0x10] sm:$0xff]
        %v1906 = vld [vmem:[#allocation10 + $0x18] sm:$0xff]
        %v1907 = vld [vmem:[%s11] sm:$0x1]
        %v1909 = vperm.slane %v1907, 0
        %v1912 = vsel %vm1091, %v1902, 0
        %1914 = vmatpush.msra.mxu0 0.0
        %1915 = vmatpush.msra.mxu0 0.0
        %1916 = vmatpush.msra.mxu0 0.0
        %1917 = vmatpush.msra.mxu0 0.0
        %1918 = vmatpush.msra.mxu0 0.0
        %1919 = vmatpush.msra.mxu0 0.0
        %1920 = vmatpush.msra.mxu0 0.0
        %1921 = vmatpush.msra.mxu0 0.0
        %1922 = vmatpush.msra.mxu0 0.0
        %1923 = vmatpush.msra.mxu0 0.0
        %1924 = vmatpush.msra.mxu0 0.0
        %1925 = vmatpush.msra.mxu0 0.0
        %1926 = vmatpush.msra.mxu0 %v1906
        %1927 = vmatpush.msra.mxu0 %v1905
        %1928 = vmatpush.msra.mxu0 %v1904
        %1929 = vmatpush.msra.mxu0 %v1903
        %1930 = vmatmul.f32.gmra.mxu0 %v1912
        %v1931 = vpop.f32.mrf.mxu0
        %v1932 = vadd.f32 %v1909, %v1931
        %1933 = vdwg.mxu0
        %v1934 = vadd.f32 %v1077, %v1932
        %v1935 = vsel %vm1091, %v1934, 0.0
        %1936 = vadd.xlane.f32.xlu0 %v1935
        %v1937 = vpop.xlane.xlu0 %1936
        %v1938 = vrcp.pop 32.0
        %v1939 = vmul.f32 32.0, %v1938
        %v1940 = vsub.f32 1.0, %v1939
        %v1941 = vmul.f32 %v1938, %v1940
        %v1942 = vadd.f32 %v1938, %v1941
        %vm1943 = vweird.f32 %v1938
        %v1944 = vsel %vm1943, %v1938, %v1942
        %v1945 = vmul.f32 %v1937, %v1944
        %v1946 = vsub.f32 %v1934, %v1945
        %v1947 = vmul.f32 %v1946, %v1946
        %v1948 = vsel %vm1091, %v1947, 0.0
        %1949 = vadd.xlane.f32.xlu0 %v1948
        %v1950 = vpop.xlane.xlu0 %1949
        %v1951 = vmul.f32 %v1950, %v1944
        %v1952 = vadd.f32 %v1951, 1e-05
        %v1953 = vrsqrt.pop %v1952
        %v1954 = vmul.f32 %v1953, %v1952
        %v1955 = vmul.f32 %v1954, %v1953
        %v1956 = vmul.f32 0.5, %v1955
        %v1957 = vsub.f32 1.5, %v1956
        %v1958 = vmul.f32 %v1953, %v1957
        %vm1959 = vweird.f32 %v1952
        %vm1960 = vweird.f32 %v1953
        %vm1961 = vmor %vm1959, %vm1960
        %v1962 = vsel %vm1961, %v1953, %v1958
        %v1963 = vmul.f32 %v1946, %v1962
        %v1965 = vperm.slane %v1073, 0
        %v1967 = vmul.f32 %v1963, %v1965
        %v1969 = vperm.slane %v1074, 0
        %v1971 = vadd.f32 %v1967, %v1969
        %v1972 = vld [vmem:[#allocation11] sm:$0xff]
        %v1973 = vld [vmem:[#allocation11 + $0x8] sm:$0xff]
        %v1974 = vld [vmem:[#allocation11 + $0x10] sm:$0xff]
        %v1975 = vld [vmem:[#allocation11 + $0x18] sm:$0xff]
        %v1976 = vld [vmem:[%s13] sm:$0x1]
        %v1978 = vperm.slane %v1976, 0
        %v1981 = vsel %vm1091, %v1971, 0
        %1983 = vmatpush.msra.mxu0 0.0
        %1984 = vmatpush.msra.mxu0 0.0
        %1985 = vmatpush.msra.mxu0 0.0
        %1986 = vmatpush.msra.mxu0 0.0
        %1987 = vmatpush.msra.mxu0 0.0
        %1988 = vmatpush.msra.mxu0 0.0
        %1989 = vmatpush.msra.mxu0 0.0
        %1990 = vmatpush.msra.mxu0 0.0
        %1991 = vmatpush.msra.mxu0 0.0
        %1992 = vmatpush.msra.mxu0 0.0
        %1993 = vmatpush.msra.mxu0 0.0
        %1994 = vmatpush.msra.mxu0 0.0
        %1995 = vmatpush.msra.mxu0 %v1975
        %1996 = vmatpush.msra.mxu0 %v1974
        %1997 = vmatpush.msra.mxu0 %v1973
        %1998 = vmatpush.msra.mxu0 %v1972
        %1999 = vmatmul.f32.gmra.mxu0 %v1981
        %v2000 = vpop.f32.mrf.mxu0
        %v2001 = vadd.f32 %v1978, %v2000
        %2002 = vdwg.mxu0
        %v2003 = vld [vmem:[#allocation13] sm:$0xff]
        %v2004 = vld [vmem:[#allocation13 + $0x8] sm:$0xff]
        %v2005 = vld [vmem:[#allocation13 + $0x10] sm:$0xff]
        %v2006 = vld [vmem:[#allocation13 + $0x18] sm:$0xff]
        %v2007 = vld [vmem:[%s15] sm:$0x1]
        %v2009 = vperm.slane %v2007, 0
        %v2012 = vsel %vm1091, %v1079, 0
        %v2015 = vsel %vm1091, %v1080, 0
        %2017 = vmatpush.msra.mxu0 0.0
        %2018 = vmatpush.msra.mxu0 0.0
        %2019 = vmatpush.msra.mxu0 0.0
        %2020 = vmatpush.msra.mxu0 0.0
        %2021 = vmatpush.msra.mxu0 0.0
        %2022 = vmatpush.msra.mxu0 0.0
        %2023 = vmatpush.msra.mxu0 0.0
        %2024 = vmatpush.msra.mxu0 0.0
        %2025 = vmatpush.msra.mxu0 0.0
        %2026 = vmatpush.msra.mxu0 0.0
        %2027 = vmatpush.msra.mxu0 0.0
        %2028 = vmatpush.msra.mxu0 0.0
        %2029 = vmatpush.msra.mxu0 %v2006
        %2030 = vmatpush.msra.mxu0 %v2005
        %2031 = vmatpush.msra.mxu0 %v2004
        %2032 = vmatpush.msra.mxu0 %v2003
        %2033 = vmatmul.f32.gmra.mxu0 %v2012
        %v2034 = vpop.f32.mrf.mxu0
        %v2035 = vadd.f32 %v2009, %v2034
        %2036 = vmatmul.f32.gmra.mxu0 %v2015
        %v2037 = vpop.f32.mrf.mxu0
        %v2038 = vadd.f32 %v2009, %v2037
        %2039 = vdwg.mxu0
        %v2040 = vld [vmem:[#allocation14] sm:$0xff]
        %v2041 = vld [vmem:[#allocation14 + $0x8] sm:$0xff]
        %v2042 = vld [vmem:[#allocation14 + $0x10] sm:$0xff]
        %v2043 = vld [vmem:[#allocation14 + $0x18] sm:$0xff]
        %v2044 = vld [vmem:[%s17] sm:$0x1]
        %v2046 = vperm.slane %v2044, 0
        %2048 = vmatpush.msra.mxu0 0.0
        %2049 = vmatpush.msra.mxu0 0.0
        %2050 = vmatpush.msra.mxu0 0.0
        %2051 = vmatpush.msra.mxu0 0.0
        %2052 = vmatpush.msra.mxu0 0.0
        %2053 = vmatpush.msra.mxu0 0.0
        %2054 = vmatpush.msra.mxu0 0.0
        %2055 = vmatpush.msra.mxu0 0.0
        %2056 = vmatpush.msra.mxu0 0.0
        %2057 = vmatpush.msra.mxu0 0.0
        %2058 = vmatpush.msra.mxu0 0.0
        %2059 = vmatpush.msra.mxu0 0.0
        %2060 = vmatpush.msra.mxu0 %v2043
        %2061 = vmatpush.msra.mxu0 %v2042
        %2062 = vmatpush.msra.mxu0 %v2041
        %2063 = vmatpush.msra.mxu0 %v2040
        %2064 = vmatmul.f32.gmra.mxu0 %v2012
        %v2065 = vpop.f32.mrf.mxu0
        %v2066 = vadd.f32 %v2046, %v2065
        %2067 = vmatmul.f32.gmra.mxu0 %v2015
        %v2068 = vpop.f32.mrf.mxu0
        %v2069 = vadd.f32 %v2046, %v2068
        %2070 = vdwg.mxu0
        %2072 = vrot.lane.b32.xlu0 %v2001, 120
        %v2073 = vpop.permute.xlu0 %2072
        %2075 = vrot.lane.b32.xlu0 %v2001, 112
        %v2076 = vpop.permute.xlu0 %2075
        %2078 = vrot.lane.b32.xlu0 %v2001, 104
        %v2079 = vpop.permute.xlu0 %2078
        %v2081 = vrot.slane %v2076, 4
        %v2082 = vsel %vm1185, %v2081, %v2001
        %v2083 = vrot.slane %v2001, 4
        %v2084 = vsel %vm1185, %v2076, %v2083
        %v2086 = vunpack.c.l.s4 1983009808
        %v2087 = vunpack.c.0.s8 %v2086
        %v2088 = vperm.slane %v2082, %v2087
        %v2090 = vunpack.c.l.s4 1983009808
        %v2091 = vunpack.c.0.s8 %v2090
        %v2092 = vperm.slane %v2084, %v2091
        %v2093 = vrot.slane %v2079, 4
        %v2094 = vsel %vm1185, %v2093, %v2073
        %v2095 = vrot.slane %v2073, 4
        %v2096 = vsel %vm1185, %v2079, %v2095
        %v2098 = vunpack.c.l.s4 1983009808
        %v2099 = vunpack.c.0.s8 %v2098
        %v2100 = vperm.slane %v2094, %v2099
        %v2102 = vunpack.c.l.s4 1983009808
        %v2103 = vunpack.c.0.s8 %v2102
        %v2104 = vperm.slane %v2096, %v2103
        %v2105 = vrot.slane %v2100, 4
        %v2106 = vsel %vm1185, %v2105, %v2088
        %v2107 = vrot.slane %v2088, 4
        %v2108 = vsel %vm1185, %v2100, %v2107
        %v2110 = vunpack.c.l.s4 1934713408
        %v2111 = vunpack.c.0.s8 %v2110
        %v2112 = vperm.slane %v2106, %v2111
        %v2114 = vunpack.c.l.s4 1934713408
        %v2115 = vunpack.c.0.s8 %v2114
        %v2116 = vperm.slane %v2108, %v2115
        %v2117 = vrot.slane %v2104, 4
        %v2118 = vsel %vm1185, %v2117, %v2092
        %v2119 = vrot.slane %v2092, 4
        %v2120 = vsel %vm1185, %v2104, %v2119
        %v2122 = vunpack.c.l.s4 1934713408
        %v2123 = vunpack.c.0.s8 %v2122
        %v2124 = vperm.slane %v2118, %v2123
        %v2126 = vunpack.c.l.s4 1934713408
        %v2127 = vunpack.c.0.s8 %v2126
        %v2128 = vperm.slane %v2120, %v2127
        %v2129 = vrot.slane %v2112, 4
        %v2130 = vsel %vm1185, 0.0, %v2129
        %v2131 = vrot.slane %v2116, 4
        %v2132 = vsel %vm1185, 0.0, %v2131
        %v2133 = vrot.slane %v2124, 4
        %v2134 = vsel %vm1185, 0.0, %v2133
        %v2135 = vrot.slane %v2128, 4
        %v2136 = vsel %vm1185, 0.0, %v2135
        %v2137 = vsel %vm1185, %v2131, %v2112
        %v2139 = vunpack.c.l.s4 1983009808
        %v2140 = vunpack.c.0.s8 %v2139
        %v2141 = vperm.slane %v2137, %v2140
        %v2142 = vrot.slane %v2132, 4
        %v2143 = vsel %vm1185, %v2142, %v2130
        %v2145 = vunpack.c.l.s4 1983009808
        %v2146 = vunpack.c.0.s8 %v2145
        %v2147 = vperm.slane %v2143, %v2146
        %v2148 = vsel %vm1185, %v2135, %v2124
        %v2150 = vunpack.c.l.s4 1983009808
        %v2151 = vunpack.c.0.s8 %v2150
        %v2152 = vperm.slane %v2148, %v2151
        %v2153 = vrot.slane %v2136, 4
        %v2154 = vsel %vm1185, %v2153, %v2134
        %v2156 = vunpack.c.l.s4 1983009808
        %v2157 = vunpack.c.0.s8 %v2156
        %v2158 = vperm.slane %v2154, %v2157
        %v2159 = vrot.slane %v2147, 4
        %v2160 = vsel %vm1185, %v2159, %v2141
        %v2161 = vrot.slane %v2141, 4
        %v2162 = vsel %vm1185, %v2147, %v2161
        %v2164 = vunpack.c.l.s4 1934713408
        %v2165 = vunpack.c.0.s8 %v2164
        %v2166 = vperm.slane %v2160, %v2165
        %v2168 = vunpack.c.l.s4 1934713408
        %v2169 = vunpack.c.0.s8 %v2168
        %v2170 = vperm.slane %v2162, %v2169
        %v2171 = vrot.slane %v2158, 4
        %v2172 = vsel %vm1185, %v2171, %v2152
        %v2173 = vrot.slane %v2152, 4
        %v2174 = vsel %vm1185, %v2158, %v2173
        %v2176 = vunpack.c.l.s4 1934713408
        %v2177 = vunpack.c.0.s8 %v2176
        %v2178 = vperm.slane %v2172, %v2177
        %v2180 = vunpack.c.l.s4 1934713408
        %v2181 = vunpack.c.0.s8 %v2180
        %v2182 = vperm.slane %v2174, %v2181
        %v2183 = vrot.slane %v2178, 4
        %v2184 = vsel %vm1185, %v2183, %v2166
        %v2185 = vrot.slane %v2166, 4
        %v2186 = vsel %vm1185, %v2178, %v2185
        %v2187 = vrot.slane %v2182, 4
        %v2188 = vsel %vm1185, %v2187, %v2170
        %v2189 = vrot.slane %v2170, 4
        %v2190 = vsel %vm1185, %v2182, %v2189
        %2193 = vrot.lane.b32.xlu0 %v2035, 120
        %v2194 = vpop.permute.xlu0 %2193
        %2195 = vrot.lane.b32.xlu0 %v2038, 120
        %v2196 = vpop.permute.xlu0 %2195
        %2199 = vrot.lane.b32.xlu0 %v2035, 112
        %v2200 = vpop.permute.xlu0 %2199
        %2201 = vrot.lane.b32.xlu0 %v2038, 112
        %v2202 = vpop.permute.xlu0 %2201
        %2205 = vrot.lane.b32.xlu0 %v2035, 104
        %v2206 = vpop.permute.xlu0 %2205
        %2207 = vrot.lane.b32.xlu0 %v2038, 104
        %v2208 = vpop.permute.xlu0 %2207
        %v2211 = vrot.slane %v2200, 4
        %v2212 = vsel %vm1185, %v2211, %v2035
        %v2213 = vrot.slane %v2035, 4
        %v2214 = vsel %vm1185, %v2200, %v2213
        %v2216 = vunpack.c.l.s4 1983009808
        %v2217 = vunpack.c.0.s8 %v2216
        %v2218 = vperm.slane %v2212, %v2217
        %v2220 = vunpack.c.l.s4 1983009808
        %v2221 = vunpack.c.0.s8 %v2220
        %v2222 = vperm.slane %v2214, %v2221
        %v2223 = vrot.slane %v2206, 4
        %v2224 = vsel %vm1185, %v2223, %v2194
        %v2225 = vrot.slane %v2194, 4
        %v2226 = vsel %vm1185, %v2206, %v2225
        %v2228 = vunpack.c.l.s4 1983009808
        %v2229 = vunpack.c.0.s8 %v2228
        %v2230 = vperm.slane %v2224, %v2229
        %v2232 = vunpack.c.l.s4 1983009808
        %v2233 = vunpack.c.0.s8 %v2232
        %v2234 = vperm.slane %v2226, %v2233
        %v2235 = vrot.slane %v2230, 4
        %v2236 = vsel %vm1185, %v2235, %v2218
        %v2237 = vrot.slane %v2218, 4
        %v2238 = vsel %vm1185, %v2230, %v2237
        %v2240 = vunpack.c.l.s4 1934713408
        %v2241 = vunpack.c.0.s8 %v2240
        %v2242 = vperm.slane %v2236, %v2241
        %v2244 = vunpack.c.l.s4 1934713408
        %v2245 = vunpack.c.0.s8 %v2244
        %v2246 = vperm.slane %v2238, %v2245
        %v2247 = vrot.slane %v2234, 4
        %v2248 = vsel %vm1185, %v2247, %v2222
        %v2249 = vrot.slane %v2222, 4
        %v2250 = vsel %vm1185, %v2234, %v2249
        %v2252 = vunpack.c.l.s4 1934713408
        %v2253 = vunpack.c.0.s8 %v2252
        %v2254 = vperm.slane %v2248, %v2253
        %v2256 = vunpack.c.l.s4 1934713408
        %v2257 = vunpack.c.0.s8 %v2256
        %v2258 = vperm.slane %v2250, %v2257
        %v2259 = vrot.slane %v2242, 4
        %v2260 = vsel %vm1185, 0.0, %v2259
        %v2261 = vrot.slane %v2246, 4
        %v2262 = vsel %vm1185, 0.0, %v2261
        %v2263 = vrot.slane %v2254, 4
        %v2264 = vsel %vm1185, 0.0, %v2263
        %v2265 = vrot.slane %v2258, 4
        %v2266 = vsel %vm1185, 0.0, %v2265
        %v2267 = vrot.slane %v2202, 4
        %v2268 = vsel %vm1185, %v2267, %v2038
        %v2269 = vrot.slane %v2038, 4
        %v2270 = vsel %vm1185, %v2202, %v2269
        %v2272 = vunpack.c.l.s4 1983009808
        %v2273 = vunpack.c.0.s8 %v2272
        %v2274 = vperm.slane %v2268, %v2273
        %v2276 = vunpack.c.l.s4 1983009808
        %v2277 = vunpack.c.0.s8 %v2276
        %v2278 = vperm.slane %v2270, %v2277
        %v2279 = vrot.slane %v2208, 4
        %v2280 = vsel %vm1185, %v2279, %v2196
        %v2281 = vrot.slane %v2196, 4
        %v2282 = vsel %vm1185, %v2208, %v2281
        %v2284 = vunpack.c.l.s4 1983009808
        %v2285 = vunpack.c.0.s8 %v2284
        %v2286 = vperm.slane %v2280, %v2285
        %v2288 = vunpack.c.l.s4 1983009808
        %v2289 = vunpack.c.0.s8 %v2288
        %v2290 = vperm.slane %v2282, %v2289
        %v2291 = vrot.slane %v2286, 4
        %v2292 = vsel %vm1185, %v2291, %v2274
        %v2293 = vrot.slane %v2274, 4
        %v2294 = vsel %vm1185, %v2286, %v2293
        %v2296 = vunpack.c.l.s4 1934713408
        %v2297 = vunpack.c.0.s8 %v2296
        %v2298 = vperm.slane %v2292, %v2297
        %v2300 = vunpack.c.l.s4 1934713408
        %v2301 = vunpack.c.0.s8 %v2300
        %v2302 = vperm.slane %v2294, %v2301
        %v2303 = vrot.slane %v2290, 4
        %v2304 = vsel %vm1185, %v2303, %v2278
        %v2305 = vrot.slane %v2278, 4
        %v2306 = vsel %vm1185, %v2290, %v2305
        %v2308 = vunpack.c.l.s4 1934713408
        %v2309 = vunpack.c.0.s8 %v2308
        %v2310 = vperm.slane %v2304, %v2309
        %v2312 = vunpack.c.l.s4 1934713408
        %v2313 = vunpack.c.0.s8 %v2312
        %v2314 = vperm.slane %v2306, %v2313
        %v2315 = vrot.slane %v2298, 4
        %v2316 = vsel %vm1185, 0.0, %v2315
        %v2317 = vrot.slane %v2302, 4
        %v2318 = vsel %vm1185, 0.0, %v2317
        %v2319 = vrot.slane %v2310, 4
        %v2320 = vsel %vm1185, 0.0, %v2319
        %v2321 = vrot.slane %v2314, 4
        %v2322 = vsel %vm1185, 0.0, %v2321
        %v2323 = vsel %vm1185, %v2261, %v2242
        %v2325 = vunpack.c.l.s4 1983009808
        %v2326 = vunpack.c.0.s8 %v2325
        %v2327 = vperm.slane %v2323, %v2326
        %v2328 = vrot.slane %v2262, 4
        %v2329 = vsel %vm1185, %v2328, %v2260
        %v2331 = vunpack.c.l.s4 1983009808
        %v2332 = vunpack.c.0.s8 %v2331
        %v2333 = vperm.slane %v2329, %v2332
        %v2334 = vsel %vm1185, %v2265, %v2254
        %v2336 = vunpack.c.l.s4 1983009808
        %v2337 = vunpack.c.0.s8 %v2336
        %v2338 = vperm.slane %v2334, %v2337
        %v2339 = vrot.slane %v2266, 4
        %v2340 = vsel %vm1185, %v2339, %v2264
        %v2342 = vunpack.c.l.s4 1983009808
        %v2343 = vunpack.c.0.s8 %v2342
        %v2344 = vperm.slane %v2340, %v2343
        %v2345 = vrot.slane %v2333, 4
        %v2346 = vsel %vm1185, %v2345, %v2327
        %v2347 = vrot.slane %v2327, 4
        %v2348 = vsel %vm1185, %v2333, %v2347
        %v2350 = vunpack.c.l.s4 1934713408
        %v2351 = vunpack.c.0.s8 %v2350
        %v2352 = vperm.slane %v2346, %v2351
        %v2354 = vunpack.c.l.s4 1934713408
        %v2355 = vunpack.c.0.s8 %v2354
        %v2356 = vperm.slane %v2348, %v2355
        %v2357 = vrot.slane %v2344, 4
        %v2358 = vsel %vm1185, %v2357, %v2338
        %v2359 = vrot.slane %v2338, 4
        %v2360 = vsel %vm1185, %v2344, %v2359
        %v2362 = vunpack.c.l.s4 1934713408
        %v2363 = vunpack.c.0.s8 %v2362
        %v2364 = vperm.slane %v2358, %v2363
        %v2366 = vunpack.c.l.s4 1934713408
        %v2367 = vunpack.c.0.s8 %v2366
        %v2368 = vperm.slane %v2360, %v2367
        %v2369 = vrot.slane %v2364, 4
        %v2370 = vsel %vm1185, %v2369, %v2352
        %v2371 = vrot.slane %v2352, 4
        %v2372 = vsel %vm1185, %v2364, %v2371
        %v2373 = vrot.slane %v2368, 4
        %v2374 = vsel %vm1185, %v2373, %v2356
        %v2375 = vrot.slane %v2356, 4
        %v2376 = vsel %vm1185, %v2368, %v2375
        %v2377 = vsel %vm1185, %v2317, %v2298
        %v2379 = vunpack.c.l.s4 1983009808
        %v2380 = vunpack.c.0.s8 %v2379
        %v2381 = vperm.slane %v2377, %v2380
        %v2382 = vrot.slane %v2318, 4
        %v2383 = vsel %vm1185, %v2382, %v2316
        %v2385 = vunpack.c.l.s4 1983009808
        %v2386 = vunpack.c.0.s8 %v2385
        %v2387 = vperm.slane %v2383, %v2386
        %v2388 = vsel %vm1185, %v2321, %v2310
        %v2390 = vunpack.c.l.s4 1983009808
        %v2391 = vunpack.c.0.s8 %v2390
        %v2392 = vperm.slane %v2388, %v2391
        %v2393 = vrot.slane %v2322, 4
        %v2394 = vsel %vm1185, %v2393, %v2320
        %v2396 = vunpack.c.l.s4 1983009808
        %v2397 = vunpack.c.0.s8 %v2396
        %v2398 = vperm.slane %v2394, %v2397
        %v2399 = vrot.slane %v2387, 4
        %v2400 = vsel %vm1185, %v2399, %v2381
        %v2401 = vrot.slane %v2381, 4
        %v2402 = vsel %vm1185, %v2387, %v2401
        %v2404 = vunpack.c.l.s4 1934713408
        %v2405 = vunpack.c.0.s8 %v2404
        %v2406 = vperm.slane %v2400, %v2405
        %v2408 = vunpack.c.l.s4 1934713408
        %v2409 = vunpack.c.0.s8 %v2408
        %v2410 = vperm.slane %v2402, %v2409
        %v2411 = vrot.slane %v2398, 4
        %v2412 = vsel %vm1185, %v2411, %v2392
        %v2413 = vrot.slane %v2392, 4
        %v2414 = vsel %vm1185, %v2398, %v2413
        %v2416 = vunpack.c.l.s4 1934713408
        %v2417 = vunpack.c.0.s8 %v2416
        %v2418 = vperm.slane %v2412, %v2417
        %v2420 = vunpack.c.l.s4 1934713408
        %v2421 = vunpack.c.0.s8 %v2420
        %v2422 = vperm.slane %v2414, %v2421
        %v2423 = vrot.slane %v2418, 4
        %v2424 = vsel %vm1185, %v2423, %v2406
        %v2425 = vrot.slane %v2406, 4
        %v2426 = vsel %vm1185, %v2418, %v2425
        %v2427 = vrot.slane %v2422, 4
        %v2428 = vsel %vm1185, %v2427, %v2410
        %v2429 = vrot.slane %v2410, 4
        %v2430 = vsel %vm1185, %v2422, %v2429
        %2433 = vrot.lane.b32.xlu0 %v2066, 120
        %v2434 = vpop.permute.xlu0 %2433
        %2435 = vrot.lane.b32.xlu0 %v2069, 120
        %v2436 = vpop.permute.xlu0 %2435
        %2439 = vrot.lane.b32.xlu0 %v2066, 112
        %v2440 = vpop.permute.xlu0 %2439
        %2441 = vrot.lane.b32.xlu0 %v2069, 112
        %v2442 = vpop.permute.xlu0 %2441
        %2445 = vrot.lane.b32.xlu0 %v2066, 104
        %v2446 = vpop.permute.xlu0 %2445
        %2447 = vrot.lane.b32.xlu0 %v2069, 104
        %v2448 = vpop.permute.xlu0 %2447
        %v2451 = vrot.slane %v2440, 4
        %v2452 = vsel %vm1185, %v2451, %v2066
        %v2453 = vrot.slane %v2066, 4
        %v2454 = vsel %vm1185, %v2440, %v2453
        %v2456 = vunpack.c.l.s4 1983009808
        %v2457 = vunpack.c.0.s8 %v2456
        %v2458 = vperm.slane %v2452, %v2457
        %v2460 = vunpack.c.l.s4 1983009808
        %v2461 = vunpack.c.0.s8 %v2460
        %v2462 = vperm.slane %v2454, %v2461
        %v2463 = vrot.slane %v2446, 4
        %v2464 = vsel %vm1185, %v2463, %v2434
        %v2465 = vrot.slane %v2434, 4
        %v2466 = vsel %vm1185, %v2446, %v2465
        %v2468 = vunpack.c.l.s4 1983009808
        %v2469 = vunpack.c.0.s8 %v2468
        %v2470 = vperm.slane %v2464, %v2469
        %v2472 = vunpack.c.l.s4 1983009808
        %v2473 = vunpack.c.0.s8 %v2472
        %v2474 = vperm.slane %v2466, %v2473
        %v2475 = vrot.slane %v2470, 4
        %v2476 = vsel %vm1185, %v2475, %v2458
        %v2477 = vrot.slane %v2458, 4
        %v2478 = vsel %vm1185, %v2470, %v2477
        %v2480 = vunpack.c.l.s4 1934713408
        %v2481 = vunpack.c.0.s8 %v2480
        %v2482 = vperm.slane %v2476, %v2481
        %v2484 = vunpack.c.l.s4 1934713408
        %v2485 = vunpack.c.0.s8 %v2484
        %v2486 = vperm.slane %v2478, %v2485
        %v2487 = vrot.slane %v2474, 4
        %v2488 = vsel %vm1185, %v2487, %v2462
        %v2489 = vrot.slane %v2462, 4
        %v2490 = vsel %vm1185, %v2474, %v2489
        %v2492 = vunpack.c.l.s4 1934713408
        %v2493 = vunpack.c.0.s8 %v2492
        %v2494 = vperm.slane %v2488, %v2493
        %v2496 = vunpack.c.l.s4 1934713408
        %v2497 = vunpack.c.0.s8 %v2496
        %v2498 = vperm.slane %v2490, %v2497
        %v2499 = vrot.slane %v2482, 4
        %v2500 = vsel %vm1185, 0.0, %v2499
        %v2501 = vrot.slane %v2486, 4
        %v2502 = vsel %vm1185, 0.0, %v2501
        %v2503 = vrot.slane %v2494, 4
        %v2504 = vsel %vm1185, 0.0, %v2503
        %v2505 = vrot.slane %v2498, 4
        %v2506 = vsel %vm1185, 0.0, %v2505
        %v2507 = vrot.slane %v2442, 4
        %v2508 = vsel %vm1185, %v2507, %v2069
        %v2509 = vrot.slane %v2069, 4
        %v2510 = vsel %vm1185, %v2442, %v2509
        %v2512 = vunpack.c.l.s4 1983009808
        %v2513 = vunpack.c.0.s8 %v2512
        %v2514 = vperm.slane %v2508, %v2513
        %v2516 = vunpack.c.l.s4 1983009808
        %v2517 = vunpack.c.0.s8 %v2516
        %v2518 = vperm.slane %v2510, %v2517
        %v2519 = vrot.slane %v2448, 4
        %v2520 = vsel %vm1185, %v2519, %v2436
        %v2521 = vrot.slane %v2436, 4
        %v2522 = vsel %vm1185, %v2448, %v2521
        %v2524 = vunpack.c.l.s4 1983009808
        %v2525 = vunpack.c.0.s8 %v2524
        %v2526 = vperm.slane %v2520, %v2525
        %v2528 = vunpack.c.l.s4 1983009808
        %v2529 = vunpack.c.0.s8 %v2528
        %v2530 = vperm.slane %v2522, %v2529
        %v2531 = vrot.slane %v2526, 4
        %v2532 = vsel %vm1185, %v2531, %v2514
        %v2533 = vrot.slane %v2514, 4
        %v2534 = vsel %vm1185, %v2526, %v2533
        %v2536 = vunpack.c.l.s4 1934713408
        %v2537 = vunpack.c.0.s8 %v2536
        %v2538 = vperm.slane %v2532, %v2537
        %v2540 = vunpack.c.l.s4 1934713408
        %v2541 = vunpack.c.0.s8 %v2540
        %v2542 = vperm.slane %v2534, %v2541
        %v2543 = vrot.slane %v2530, 4
        %v2544 = vsel %vm1185, %v2543, %v2518
        %v2545 = vrot.slane %v2518, 4
        %v2546 = vsel %vm1185, %v2530, %v2545
        %v2548 = vunpack.c.l.s4 1934713408
        %v2549 = vunpack.c.0.s8 %v2548
        %v2550 = vperm.slane %v2544, %v2549
        %v2552 = vunpack.c.l.s4 1934713408
        %v2553 = vunpack.c.0.s8 %v2552
        %v2554 = vperm.slane %v2546, %v2553
        %v2555 = vrot.slane %v2538, 4
        %v2556 = vsel %vm1185, 0.0, %v2555
        %v2557 = vrot.slane %v2542, 4
        %v2558 = vsel %vm1185, 0.0, %v2557
        %v2559 = vrot.slane %v2550, 4
        %v2560 = vsel %vm1185, 0.0, %v2559
        %v2561 = vrot.slane %v2554, 4
        %v2562 = vsel %vm1185, 0.0, %v2561
        %v2563 = vsel %vm1185, %v2501, %v2482
        %v2565 = vunpack.c.l.s4 1983009808
        %v2566 = vunpack.c.0.s8 %v2565
        %v2567 = vperm.slane %v2563, %v2566
        %v2568 = vrot.slane %v2502, 4
        %v2569 = vsel %vm1185, %v2568, %v2500
        %v2571 = vunpack.c.l.s4 1983009808
        %v2572 = vunpack.c.0.s8 %v2571
        %v2573 = vperm.slane %v2569, %v2572
        %v2574 = vsel %vm1185, %v2505, %v2494
        %v2576 = vunpack.c.l.s4 1983009808
        %v2577 = vunpack.c.0.s8 %v2576
        %v2578 = vperm.slane %v2574, %v2577
        %v2579 = vrot.slane %v2506, 4
        %v2580 = vsel %vm1185, %v2579, %v2504
        %v2582 = vunpack.c.l.s4 1983009808
        %v2583 = vunpack.c.0.s8 %v2582
        %v2584 = vperm.slane %v2580, %v2583
        %v2585 = vrot.slane %v2573, 4
        %v2586 = vsel %vm1185, %v2585, %v2567
        %v2587 = vrot.slane %v2567, 4
        %v2588 = vsel %vm1185, %v2573, %v2587
        %v2590 = vunpack.c.l.s4 1934713408
        %v2591 = vunpack.c.0.s8 %v2590
        %v2592 = vperm.slane %v2586, %v2591
        %v2594 = vunpack.c.l.s4 1934713408
        %v2595 = vunpack.c.0.s8 %v2594
        %v2596 = vperm.slane %v2588, %v2595
        %v2597 = vrot.slane %v2584, 4
        %v2598 = vsel %vm1185, %v2597, %v2578
        %v2599 = vrot.slane %v2578, 4
        %v2600 = vsel %vm1185, %v2584, %v2599
        %v2602 = vunpack.c.l.s4 1934713408
        %v2603 = vunpack.c.0.s8 %v2602
        %v2604 = vperm.slane %v2598, %v2603
        %v2606 = vunpack.c.l.s4 1934713408
        %v2607 = vunpack.c.0.s8 %v2606
        %v2608 = vperm.slane %v2600, %v2607
        %v2609 = vrot.slane %v2604, 4
        %v2610 = vsel %vm1185, %v2609, %v2592
        %v2611 = vrot.slane %v2592, 4
        %v2612 = vsel %vm1185, %v2604, %v2611
        %v2613 = vrot.slane %v2608, 4
        %v2614 = vsel %vm1185, %v2613, %v2596
        %v2615 = vrot.slane %v2596, 4
        %v2616 = vsel %vm1185, %v2608, %v2615
        %v2617 = vsel %vm1185, %v2557, %v2538
        %v2619 = vunpack.c.l.s4 1983009808
        %v2620 = vunpack.c.0.s8 %v2619
        %v2621 = vperm.slane %v2617, %v2620
        %v2622 = vrot.slane %v2558, 4
        %v2623 = vsel %vm1185, %v2622, %v2556
        %v2625 = vunpack.c.l.s4 1983009808
        %v2626 = vunpack.c.0.s8 %v2625
        %v2627 = vperm.slane %v2623, %v2626
        %v2628 = vsel %vm1185, %v2561, %v2550
        %v2630 = vunpack.c.l.s4 1983009808
        %v2631 = vunpack.c.0.s8 %v2630
        %v2632 = vperm.slane %v2628, %v2631
        %v2633 = vrot.slane %v2562, 4
        %v2634 = vsel %vm1185, %v2633, %v2560
        %v2636 = vunpack.c.l.s4 1983009808
        %v2637 = vunpack.c.0.s8 %v2636
        %v2638 = vperm.slane %v2634, %v2637
        %v2639 = vrot.slane %v2627, 4
        %v2640 = vsel %vm1185, %v2639, %v2621
        %v2641 = vrot.slane %v2621, 4
        %v2642 = vsel %vm1185, %v2627, %v2641
        %v2644 = vunpack.c.l.s4 1934713408
        %v2645 = vunpack.c.0.s8 %v2644
        %v2646 = vperm.slane %v2640, %v2645
        %v2648 = vunpack.c.l.s4 1934713408
        %v2649 = vunpack.c.0.s8 %v2648
        %v2650 = vperm.slane %v2642, %v2649
        %v2651 = vrot.slane %v2638, 4
        %v2652 = vsel %vm1185, %v2651, %v2632
        %v2653 = vrot.slane %v2632, 4
        %v2654 = vsel %vm1185, %v2638, %v2653
        %v2656 = vunpack.c.l.s4 1934713408
        %v2657 = vunpack.c.0.s8 %v2656
        %v2658 = vperm.slane %v2652, %v2657
        %v2660 = vunpack.c.l.s4 1934713408
        %v2661 = vunpack.c.0.s8 %v2660
        %v2662 = vperm.slane %v2654, %v2661
        %v2663 = vrot.slane %v2658, 4
        %v2664 = vsel %vm1185, %v2663, %v2646
        %v2665 = vrot.slane %v2646, 4
        %v2666 = vsel %vm1185, %v2658, %v2665
        %v2667 = vrot.slane %v2662, 4
        %v2668 = vsel %vm1185, %v2667, %v2650
        %v2669 = vrot.slane %v2650, 4
        %v2670 = vsel %vm1185, %v2662, %v2669
        %v2672 = vperm.slane %v1082, 0
        %v2675 = vsel %vm1535, %v2184, 0
        %v2678 = vsel %vm1535, %v2370, 0
        %v2681 = vsel %vm1535, %v2424, 0
        %2683 = vmatpush.xpose.msra.mxu0 0.0
        %2684 = vmatpush.xpose.msra.mxu0 0.0
        %2685 = vmatpush.xpose.msra.mxu0 0.0
        %2686 = vmatpush.xpose.msra.mxu0 0.0
        %2687 = vmatpush.xpose.msra.mxu0 0.0
        %2688 = vmatpush.xpose.msra.mxu0 0.0
        %2689 = vmatpush.xpose.msra.mxu0 0.0
        %2690 = vmatpush.xpose.msra.mxu0 0.0
        %2691 = vmatpush.xpose.msra.mxu0 0.0
        %2692 = vmatpush.xpose.msra.mxu0 0.0
        %2693 = vmatpush.xpose.msra.mxu0 0.0
        %2694 = vmatpush.xpose.msra.mxu0 0.0
        %2695 = vmatpush.xpose.msra.mxu0 0.0
        %2696 = vmatpush.xpose.msra.mxu0 0.0
        %2697 = vmatpush.xpose.msra.mxu0 %v2681
        %2698 = vmatpush.xpose.msra.mxu0 %v2678
        %2699 = vmatmul.f32.gmra.mxu0 %v2675
        %v2700 = vpop.f32.mrf.mxu0
        %v2701 = vadd.f32 %v2672, %v2700
        %2702 = vdwg.mxu0
        %v2704 = vsel %vm1535, %v2186, 0
        %v2707 = vsel %vm1535, %v2372, 0
        %v2710 = vsel %vm1535, %v2426, 0
        %2712 = vmatpush.xpose.msra.mxu0 0.0
        %2713 = vmatpush.xpose.msra.mxu0 0.0
        %2714 = vmatpush.xpose.msra.mxu0 0.0
        %2715 = vmatpush.xpose.msra.mxu0 0.0
        %2716 = vmatpush.xpose.msra.mxu0 0.0
        %2717 = vmatpush.xpose.msra.mxu0 0.0
        %2718 = vmatpush.xpose.msra.mxu0 0.0
        %2719 = vmatpush.xpose.msra.mxu0 0.0
        %2720 = vmatpush.xpose.msra.mxu0 0.0
        %2721 = vmatpush.xpose.msra.mxu0 0.0
        %2722 = vmatpush.xpose.msra.mxu0 0.0
        %2723 = vmatpush.xpose.msra.mxu0 0.0
        %2724 = vmatpush.xpose.msra.mxu0 0.0
        %2725 = vmatpush.xpose.msra.mxu0 0.0
        %2726 = vmatpush.xpose.msra.mxu0 %v2710
        %2727 = vmatpush.xpose.msra.mxu0 %v2707
        %2728 = vmatmul.f32.gmra.mxu0 %v2704
        %v2729 = vpop.f32.mrf.mxu0
        %v2730 = vadd.f32 %v2672, %v2729
        %2731 = vdwg.mxu0
        %v2733 = vsel %vm1535, %v2188, 0
        %v2736 = vsel %vm1535, %v2374, 0
        %v2739 = vsel %vm1535, %v2428, 0
        %2741 = vmatpush.xpose.msra.mxu0 0.0
        %2742 = vmatpush.xpose.msra.mxu0 0.0
        %2743 = vmatpush.xpose.msra.mxu0 0.0
        %2744 = vmatpush.xpose.msra.mxu0 0.0
        %2745 = vmatpush.xpose.msra.mxu0 0.0
        %2746 = vmatpush.xpose.msra.mxu0 0.0
        %2747 = vmatpush.xpose.msra.mxu0 0.0
        %2748 = vmatpush.xpose.msra.mxu0 0.0
        %2749 = vmatpush.xpose.msra.mxu0 0.0
        %2750 = vmatpush.xpose.msra.mxu0 0.0
        %2751 = vmatpush.xpose.msra.mxu0 0.0
        %2752 = vmatpush.xpose.msra.mxu0 0.0
        %2753 = vmatpush.xpose.msra.mxu0 0.0
        %2754 = vmatpush.xpose.msra.mxu0 0.0
        %2755 = vmatpush.xpose.msra.mxu0 %v2739
        %2756 = vmatpush.xpose.msra.mxu0 %v2736
        %2757 = vmatmul.f32.gmra.mxu0 %v2733
        %v2758 = vpop.f32.mrf.mxu0
        %v2759 = vadd.f32 %v2672, %v2758
        %2760 = vdwg.mxu0
        %v2762 = vsel %vm1535, %v2190, 0
        %v2765 = vsel %vm1535, %v2376, 0
        %v2768 = vsel %vm1535, %v2430, 0
        %2770 = vmatpush.xpose.msra.mxu0 0.0
        %2771 = vmatpush.xpose.msra.mxu0 0.0
        %2772 = vmatpush.xpose.msra.mxu0 0.0
        %2773 = vmatpush.xpose.msra.mxu0 0.0
        %2774 = vmatpush.xpose.msra.mxu0 0.0
        %2775 = vmatpush.xpose.msra.mxu0 0.0
        %2776 = vmatpush.xpose.msra.mxu0 0.0
        %2777 = vmatpush.xpose.msra.mxu0 0.0
        %2778 = vmatpush.xpose.msra.mxu0 0.0
        %2779 = vmatpush.xpose.msra.mxu0 0.0
        %2780 = vmatpush.xpose.msra.mxu0 0.0
        %2781 = vmatpush.xpose.msra.mxu0 0.0
        %2782 = vmatpush.xpose.msra.mxu0 0.0
        %2783 = vmatpush.xpose.msra.mxu0 0.0
        %2784 = vmatpush.xpose.msra.mxu0 %v2768
        %2785 = vmatpush.xpose.msra.mxu0 %v2765
        %2786 = vmatmul.f32.gmra.mxu0 %v2762
        %v2787 = vpop.f32.mrf.mxu0
        %v2788 = vadd.f32 %v2672, %v2787
        %2789 = vdwg.mxu0
        %v2790 = vsel %vm1899, %v2701, -inf
        %2791 = vmax.xlane.f32.xlu0 %v2790
        %v2792 = vpop.xlane.xlu0 %2791
        %v2793 = vsel %vm1899, %v2730, -inf
        %2794 = vmax.xlane.f32.xlu0 %v2793
        %v2795 = vpop.xlane.xlu0 %2794
        %v2796 = vsel %vm1899, %v2759, -inf
        %2797 = vmax.xlane.f32.xlu0 %v2796
        %v2798 = vpop.xlane.xlu0 %2797
        %v2799 = vsel %vm1899, %v2788, -inf
        %2800 = vmax.xlane.f32.xlu0 %v2799
        %v2801 = vpop.xlane.xlu0 %2800
        %v2802 = vsub.f32 %v2701, %v2792
        %v2803 = vsub.f32 %v2730, %v2795
        %v2804 = vsub.f32 %v2759, %v2798
        %v2805 = vsub.f32 %v2788, %v2801
        %v2806 = vmul.f32 %v2802, 1.442695
        %v2807 = vpow.pop %v2806
        %v2808 = vmul.f32 %v2803, 1.442695
        %v2809 = vpow.pop %v2808
        %v2810 = vmul.f32 %v2804, 1.442695
        %v2811 = vpow.pop %v2810
        %v2812 = vmul.f32 %v2805, 1.442695
        %v2813 = vpow.pop %v2812
        %v2814 = vsel %vm1899, %v2807, 0.0
        %2815 = vadd.xlane.f32.xlu0 %v2814
        %v2816 = vpop.xlane.xlu0 %2815
        %v2817 = vsel %vm1899, %v2809, 0.0
        %2818 = vadd.xlane.f32.xlu0 %v2817
        %v2819 = vpop.xlane.xlu0 %2818
        %v2820 = vsel %vm1899, %v2811, 0.0
        %2821 = vadd.xlane.f32.xlu0 %v2820
        %v2822 = vpop.xlane.xlu0 %2821
        %v2823 = vsel %vm1899, %v2813, 0.0
        %2824 = vadd.xlane.f32.xlu0 %v2823
        %v2825 = vpop.xlane.xlu0 %2824
        %v2826 = vrcp.pop %v2816
        %v2827 = vmul.f32 %v2816, %v2826
        %v2828 = vsub.f32 1.0, %v2827
        %v2829 = vmul.f32 %v2826, %v2828
        %v2830 = vadd.f32 %v2826, %v2829
        %vm2831 = vweird.f32 %v2816
        %vm2832 = vweird.f32 %v2826
        %vm2833 = vmor %vm2831, %vm2832
        %v2834 = vsel %vm2833, %v2826, %v2830
        %v2835 = vand.u32 2147483647, %v2816
        %vm2836 = vcmp.eq.f32.partialorder %v2835, 8.507059e+37
        %v2837 = vand.u32 %v2816, 2147483648
        %v2838 = vor.u32 1.1754944e-38, %v2837
        %v2839 = vsel %vm2836, %v2838, %v2834
        %v2840 = vrcp.pop %v2819
        %v2841 = vmul.f32 %v2819, %v2840
        %v2842 = vsub.f32 1.0, %v2841
        %v2843 = vmul.f32 %v2840, %v2842
        %v2844 = vadd.f32 %v2840, %v2843
        %vm2845 = vweird.f32 %v2819
        %vm2846 = vweird.f32 %v2840
        %vm2847 = vmor %vm2845, %vm2846
        %v2848 = vsel %vm2847, %v2840, %v2844
        %v2849 = vand.u32 2147483647, %v2819
        %vm2850 = vcmp.eq.f32.partialorder %v2849, 8.507059e+37
        %v2851 = vand.u32 %v2819, 2147483648
        %v2852 = vor.u32 1.1754944e-38, %v2851
        %v2853 = vsel %vm2850, %v2852, %v2848
        %v2854 = vrcp.pop %v2822
        %v2855 = vmul.f32 %v2822, %v2854
        %v2856 = vsub.f32 1.0, %v2855
        %v2857 = vmul.f32 %v2854, %v2856
        %v2858 = vadd.f32 %v2854, %v2857
        %vm2859 = vweird.f32 %v2822
        %vm2860 = vweird.f32 %v2854
        %vm2861 = vmor %vm2859, %vm2860
        %v2862 = vsel %vm2861, %v2854, %v2858
        %v2863 = vand.u32 2147483647, %v2822
        %vm2864 = vcmp.eq.f32.partialorder %v2863, 8.507059e+37
        %v2865 = vand.u32 %v2822, 2147483648
        %v2866 = vor.u32 1.1754944e-38, %v2865
        %v2867 = vsel %vm2864, %v2866, %v2862
        %v2868 = vrcp.pop %v2825
        %v2869 = vmul.f32 %v2825, %v2868
        %v2870 = vsub.f32 1.0, %v2869
        %v2871 = vmul.f32 %v2868, %v2870
        %v2872 = vadd.f32 %v2868, %v2871
        %vm2873 = vweird.f32 %v2825
        %vm2874 = vweird.f32 %v2868
        %vm2875 = vmor %vm2873, %vm2874
        %v2876 = vsel %vm2875, %v2868, %v2872
        %v2877 = vand.u32 2147483647, %v2825
        %vm2878 = vcmp.eq.f32.partialorder %v2877, 8.507059e+37
        %v2879 = vand.u32 %v2825, 2147483648
        %v2880 = vor.u32 1.1754944e-38, %v2879
        %v2881 = vsel %vm2878, %v2880, %v2876
        %v2882 = vmul.f32 %v2807, %v2839
        %v2883 = vmul.f32 %v2809, %v2853
        %v2884 = vmul.f32 %v2811, %v2867
        %v2885 = vmul.f32 %v2813, %v2881
        %v2887 = vsel %vm1899, %v2882, 0
        %2889 = vmatpush.msra.mxu0 0.0
        %2890 = vmatpush.msra.mxu0 0.0
        %2891 = vmatpush.msra.mxu0 0.0
        %2892 = vmatpush.msra.mxu0 0.0
        %2893 = vmatpush.msra.mxu0 0.0
        %2894 = vmatpush.msra.mxu0 0.0
        %2895 = vmatpush.msra.mxu0 0.0
        %2896 = vmatpush.msra.mxu0 0.0
        %2897 = vmatpush.msra.mxu0 0.0
        %2898 = vmatpush.msra.mxu0 0.0
        %2899 = vmatpush.msra.mxu0 0.0
        %2900 = vmatpush.msra.mxu0 0.0
        %2901 = vmatpush.msra.mxu0 0.0
        %2902 = vmatpush.msra.mxu0 0.0
        %2903 = vmatpush.msra.mxu0 %v2664
        %2904 = vmatpush.msra.mxu0 %v2610
        %2905 = vmatmul.f32.gmra.mxu0 %v2887
        %v2906 = vpop.f32.mrf.mxu0
        %v2907 = vadd.f32 0.0, %v2906
        %2908 = vdwg.mxu0
        %v2910 = vsel %vm1899, %v2883, 0
        %2912 = vmatpush.msra.mxu0 0.0
        %2913 = vmatpush.msra.mxu0 0.0
        %2914 = vmatpush.msra.mxu0 0.0
        %2915 = vmatpush.msra.mxu0 0.0
        %2916 = vmatpush.msra.mxu0 0.0
        %2917 = vmatpush.msra.mxu0 0.0
        %2918 = vmatpush.msra.mxu0 0.0
        %2919 = vmatpush.msra.mxu0 0.0
        %2920 = vmatpush.msra.mxu0 0.0
        %2921 = vmatpush.msra.mxu0 0.0
        %2922 = vmatpush.msra.mxu0 0.0
        %2923 = vmatpush.msra.mxu0 0.0
        %2924 = vmatpush.msra.mxu0 0.0
        %2925 = vmatpush.msra.mxu0 0.0
        %2926 = vmatpush.msra.mxu0 %v2666
        %2927 = vmatpush.msra.mxu0 %v2612
        %2928 = vmatmul.f32.gmra.mxu0 %v2910
        %v2929 = vpop.f32.mrf.mxu0
        %v2930 = vadd.f32 0.0, %v2929
        %2931 = vdwg.mxu0
        %v2933 = vsel %vm1899, %v2884, 0
        %2935 = vmatpush.msra.mxu0 0.0
        %2936 = vmatpush.msra.mxu0 0.0
        %2937 = vmatpush.msra.mxu0 0.0
        %2938 = vmatpush.msra.mxu0 0.0
        %2939 = vmatpush.msra.mxu0 0.0
        %2940 = vmatpush.msra.mxu0 0.0
        %2941 = vmatpush.msra.mxu0 0.0
        %2942 = vmatpush.msra.mxu0 0.0
        %2943 = vmatpush.msra.mxu0 0.0
        %2944 = vmatpush.msra.mxu0 0.0
        %2945 = vmatpush.msra.mxu0 0.0
        %2946 = vmatpush.msra.mxu0 0.0
        %2947 = vmatpush.msra.mxu0 0.0
        %2948 = vmatpush.msra.mxu0 0.0
        %2949 = vmatpush.msra.mxu0 %v2668
        %2950 = vmatpush.msra.mxu0 %v2614
        %2951 = vmatmul.f32.gmra.mxu0 %v2933
        %v2952 = vpop.f32.mrf.mxu0
        %v2953 = vadd.f32 0.0, %v2952
        %2954 = vdwg.mxu0
        %v2956 = vsel %vm1899, %v2885, 0
        %2958 = vmatpush.msra.mxu0 0.0
        %2959 = vmatpush.msra.mxu0 0.0
        %2960 = vmatpush.msra.mxu0 0.0
        %2961 = vmatpush.msra.mxu0 0.0
        %2962 = vmatpush.msra.mxu0 0.0
        %2963 = vmatpush.msra.mxu0 0.0
        %2964 = vmatpush.msra.mxu0 0.0
        %2965 = vmatpush.msra.mxu0 0.0
        %2966 = vmatpush.msra.mxu0 0.0
        %2967 = vmatpush.msra.mxu0 0.0
        %2968 = vmatpush.msra.mxu0 0.0
        %2969 = vmatpush.msra.mxu0 0.0
        %2970 = vmatpush.msra.mxu0 0.0
        %2971 = vmatpush.msra.mxu0 0.0
        %2972 = vmatpush.msra.mxu0 %v2670
        %2973 = vmatpush.msra.mxu0 %v2616
        %2974 = vmatmul.f32.gmra.mxu0 %v2956
        %v2975 = vpop.f32.mrf.mxu0
        %v2976 = vadd.f32 0.0, %v2975
        %2977 = vdwg.mxu0
        %v2978 = vrot.slane %v2953, 4
        %v2979 = vsel %vm1185, %v2978, %v2907
        %v2980 = vrot.slane %v2907, 4
        %v2981 = vsel %vm1185, %v2953, %v2980
        %v2983 = vunpack.c.l.s4 1983009808
        %v2984 = vunpack.c.0.s8 %v2983
        %v2985 = vperm.slane %v2979, %v2984
        %v2987 = vunpack.c.l.s4 1983009808
        %v2988 = vunpack.c.0.s8 %v2987
        %v2989 = vperm.slane %v2981, %v2988
        %v2990 = vrot.slane %v2976, 4
        %v2991 = vsel %vm1185, %v2990, %v2930
        %v2992 = vrot.slane %v2930, 4
        %v2993 = vsel %vm1185, %v2976, %v2992
        %v2995 = vunpack.c.l.s4 1983009808
        %v2996 = vunpack.c.0.s8 %v2995
        %v2997 = vperm.slane %v2991, %v2996
        %v2999 = vunpack.c.l.s4 1983009808
        %v3000 = vunpack.c.0.s8 %v2999
        %v3001 = vperm.slane %v2993, %v3000
        %v3002 = vrot.slane %v2997, 4
        %v3003 = vsel %vm1185, %v3002, %v2985
        %v3004 = vrot.slane %v2985, 4
        %v3005 = vsel %vm1185, %v2997, %v3004
        %v3007 = vunpack.c.l.s4 1934713408
        %v3008 = vunpack.c.0.s8 %v3007
        %v3009 = vperm.slane %v3003, %v3008
        %v3011 = vunpack.c.l.s4 1934713408
        %v3012 = vunpack.c.0.s8 %v3011
        %v3013 = vperm.slane %v3005, %v3012
        %v3014 = vrot.slane %v3001, 4
        %v3015 = vsel %vm1185, %v3014, %v2989
        %v3016 = vrot.slane %v2989, 4
        %v3017 = vsel %vm1185, %v3001, %v3016
        %v3019 = vunpack.c.l.s4 1934713408
        %v3020 = vunpack.c.0.s8 %v3019
        %v3021 = vperm.slane %v3015, %v3020
        %v3023 = vunpack.c.l.s4 1934713408
        %v3024 = vunpack.c.0.s8 %v3023
        %v3025 = vperm.slane %v3017, %v3024
        %v3026 = vrot.slane %v3009, 4
        %v3027 = vsel %vm1185, 0.0, %v3026
        %v3028 = vrot.slane %v3013, 4
        %v3029 = vsel %vm1185, 0.0, %v3028
        %v3030 = vrot.slane %v3021, 4
        %v3031 = vsel %vm1185, 0.0, %v3030
        %v3032 = vrot.slane %v3025, 4
        %v3033 = vsel %vm1185, 0.0, %v3032
        %v3034 = vsel %vm1185, %v3028, %v3009
        %v3036 = vunpack.c.l.s4 1983009808
        %v3037 = vunpack.c.0.s8 %v3036
        %v3038 = vperm.slane %v3034, %v3037
        %v3039 = vrot.slane %v3029, 4
        %v3040 = vsel %vm1185, %v3039, %v3027
        %v3042 = vunpack.c.l.s4 1983009808
        %v3043 = vunpack.c.0.s8 %v3042
        %v3044 = vperm.slane %v3040, %v3043
        %v3045 = vsel %vm1185, %v3032, %v3021
        %v3047 = vunpack.c.l.s4 1983009808
        %v3048 = vunpack.c.0.s8 %v3047
        %v3049 = vperm.slane %v3045, %v3048
        %v3050 = vrot.slane %v3033, 4
        %v3051 = vsel %vm1185, %v3050, %v3031
        %v3053 = vunpack.c.l.s4 1983009808
        %v3054 = vunpack.c.0.s8 %v3053
        %v3055 = vperm.slane %v3051, %v3054
        %v3056 = vrot.slane %v3044, 4
        %v3057 = vsel %vm1185, %v3056, %v3038
        %v3058 = vrot.slane %v3038, 4
        %v3059 = vsel %vm1185, %v3044, %v3058
        %v3061 = vunpack.c.l.s4 1934713408
        %v3062 = vunpack.c.0.s8 %v3061
        %v3063 = vperm.slane %v3057, %v3062
        %v3065 = vunpack.c.l.s4 1934713408
        %v3066 = vunpack.c.0.s8 %v3065
        %v3067 = vperm.slane %v3059, %v3066
        %v3068 = vrot.slane %v3055, 4
        %v3069 = vsel %vm1185, %v3068, %v3049
        %v3070 = vrot.slane %v3049, 4
        %v3071 = vsel %vm1185, %v3055, %v3070
        %v3073 = vunpack.c.l.s4 1934713408
        %v3074 = vunpack.c.0.s8 %v3073
        %v3075 = vperm.slane %v3069, %v3074
        %v3077 = vunpack.c.l.s4 1934713408
        %v3078 = vunpack.c.0.s8 %v3077
        %v3079 = vperm.slane %v3071, %v3078
        %v3080 = vrot.slane %v3075, 4
        %v3081 = vsel %vm1185, %v3080, %v3063
        %v3082 = vrot.slane %v3063, 4
        %v3083 = vsel %vm1185, %v3075, %v3082
        %v3084 = vrot.slane %v3079, 4
        %v3085 = vsel %vm1185, %v3084, %v3067
        %v3086 = vrot.slane %v3067, 4
        %v3087 = vsel %vm1185, %v3079, %v3086
        %3089 = vrot.lane.b32.xlu0 %v3083, 8
        %v3090 = vpop.permute.xlu0 %3089
        %3093 = vrot.lane.b32.xlu0 %v3085, 16
        %v3094 = vpop.permute.xlu0 %3093
        %3097 = vrot.lane.b32.xlu0 %v3087, 24
        %v3098 = vpop.permute.xlu0 %3097
        %v3100 = vsel %vm1535, %v3081, %v3090
        %v3101 = vsel %vm1899, %v3100, %v3094
        %v3102 = vsel %vm1901, %v3101, %v3098
        %v3103 = vld [vmem:[#allocation16] sm:$0xff]
        %v3104 = vld [vmem:[#allocation16 + $0x8] sm:$0xff]
        %v3105 = vld [vmem:[#allocation16 + $0x10] sm:$0xff]
        %v3106 = vld [vmem:[#allocation16 + $0x18] sm:$0xff]
        %v3107 = vld [vmem:[%s19] sm:$0x1]
        %v3109 = vperm.slane %v3107, 0
        %v3112 = vsel %vm1091, %v3102, 0
        %3114 = vmatpush.msra.mxu0 0.0
        %3115 = vmatpush.msra.mxu0 0.0
        %3116 = vmatpush.msra.mxu0 0.0
        %3117 = vmatpush.msra.mxu0 0.0
        %3118 = vmatpush.msra.mxu0 0.0
        %3119 = vmatpush.msra.mxu0 0.0
        %3120 = vmatpush.msra.mxu0 0.0
        %3121 = vmatpush.msra.mxu0 0.0
        %3122 = vmatpush.msra.mxu0 0.0
        %3123 = vmatpush.msra.mxu0 0.0
        %3124 = vmatpush.msra.mxu0 0.0
        %3125 = vmatpush.msra.mxu0 0.0
        %3126 = vmatpush.msra.mxu0 %v3106
        %3127 = vmatpush.msra.mxu0 %v3105
        %3128 = vmatpush.msra.mxu0 %v3104
        %3129 = vmatpush.msra.mxu0 %v3103
        %3130 = vmatmul.f32.gmra.mxu0 %v3112
        %v3131 = vpop.f32.mrf.mxu0
        %v3132 = vadd.f32 %v3109, %v3131
        %3133 = vdwg.mxu0
        %3134 = vst.msk [vmem:[%s1067] sm:$0xff] %vm1899, %v2882
        %3135 = vst.msk [vmem:[%s1067 + $0x8] sm:$0xff] %vm1899, %v2883
        %3136 = vst.msk [vmem:[%s1067 + $0x10] sm:$0xff] %vm1899, %v2884
        %3137 = vst.msk [vmem:[%s1067 + $0x18] sm:$0xff] %vm1899, %v2885
        %v3138 = vadd.f32 %v1971, %v3132
        %v3139 = vsel %vm1091, %v3138, 0.0
        %3140 = vadd.xlane.f32.xlu0 %v3139
        %v3141 = vpop.xlane.xlu0 %3140
        %v3142 = vmul.f32 %v3141, %v1944
        %v3143 = vsub.f32 %v3138, %v3142
        %v3144 = vmul.f32 %v3143, %v3143
        %v3145 = vsel %vm1091, %v3144, 0.0
        %3146 = vadd.xlane.f32.xlu0 %v3145
        %v3147 = vpop.xlane.xlu0 %3146
        %v3148 = vmul.f32 %v3147, %v1944
        %v3149 = vadd.f32 %v3148, 1e-05
        %v3150 = vrsqrt.pop %v3149
        %v3151 = vmul.f32 %v3150, %v3149
        %v3152 = vmul.f32 %v3151, %v3150
        %v3153 = vmul.f32 0.5, %v3152
        %v3154 = vsub.f32 1.5, %v3153
        %v3155 = vmul.f32 %v3150, %v3154
        %vm3156 = vweird.f32 %v3149
        %vm3157 = vweird.f32 %v3150
        %vm3158 = vmor %vm3156, %vm3157
        %v3159 = vsel %vm3158, %v3150, %v3155
        %v3160 = vmul.f32 %v3143, %v3159
        %v3161 = vmul.f32 %v3160, %v1965
        %v3162 = vadd.f32 %v3161, %v1969
        %v3163 = vld [vmem:[#allocation17] sm:$0xff]
        %v3164 = vld [vmem:[#allocation17 + $0x8] sm:$0xff]
        %v3165 = vld [vmem:[#allocation17 + $0x10] sm:$0xff]
        %v3166 = vld [vmem:[#allocation17 + $0x18] sm:$0xff]
        %v3167 = vld [vmem:[%s21] sm:$0x1]
        %v3169 = vperm.slane %v3167, 0
        %v3172 = vsel %vm1091, %v3162, 0
        %3174 = vmatpush.msra.mxu0 0.0
        %3175 = vmatpush.msra.mxu0 0.0
        %3176 = vmatpush.msra.mxu0 0.0
        %3177 = vmatpush.msra.mxu0 0.0
        %3178 = vmatpush.msra.mxu0 0.0
        %3179 = vmatpush.msra.mxu0 0.0
        %3180 = vmatpush.msra.mxu0 0.0
        %3181 = vmatpush.msra.mxu0 0.0
        %3182 = vmatpush.msra.mxu0 0.0
        %3183 = vmatpush.msra.mxu0 0.0
        %3184 = vmatpush.msra.mxu0 0.0
        %3185 = vmatpush.msra.mxu0 0.0
        %3186 = vmatpush.msra.mxu0 %v3166
        %3187 = vmatpush.msra.mxu0 %v3165
        %3188 = vmatpush.msra.mxu0 %v3164
        %3189 = vmatpush.msra.mxu0 %v3163
        %3190 = vmatmul.f32.gmra.mxu0 %v3172
        %v3191 = vpop.f32.mrf.mxu0
        %v3192 = vadd.f32 %v3169, %v3191
        %3193 = vdwg.mxu0
        %v3194 = vmax.f32 %v3192, 0.0
        %v3195 = vld [vmem:[%s22] sm:$0xff]
        %v3196 = vld [vmem:[%s22 + $0x8] sm:$0xff]
        %v3197 = vld [vmem:[%s22 + $0x10] sm:$0xff]
        %v3198 = vld [vmem:[%s22 + $0x18] sm:$0xff]
        %v3199 = vld [vmem:[%s22 + $0x20] sm:$0xff]
        %v3200 = vld [vmem:[%s22 + $0x28] sm:$0xff]
        %v3201 = vld [vmem:[%s22 + $0x30] sm:$0xff]
        %v3202 = vld [vmem:[%s22 + $0x38] sm:$0xff]
        %v3203 = vld [vmem:[%s23] sm:$0x1]
        %v3205 = vperm.slane %v3203, 0
        %vm3207 = vcmask 523264
        %v3209 = vsel %vm3207, %v3194, 0
        %3211 = vmatpush.msra.mxu0 0.0
        %3212 = vmatpush.msra.mxu0 0.0
        %3213 = vmatpush.msra.mxu0 0.0
        %3214 = vmatpush.msra.mxu0 0.0
        %3215 = vmatpush.msra.mxu0 0.0
        %3216 = vmatpush.msra.mxu0 0.0
        %3217 = vmatpush.msra.mxu0 0.0
        %3218 = vmatpush.msra.mxu0 0.0
        %3219 = vmatpush.msra.mxu0 %v3202
        %3220 = vmatpush.msra.mxu0 %v3201
        %3221 = vmatpush.msra.mxu0 %v3200
        %3222 = vmatpush.msra.mxu0 %v3199
        %3223 = vmatpush.msra.mxu0 %v3198
        %3224 = vmatpush.msra.mxu0 %v3197
        %3225 = vmatpush.msra.mxu0 %v3196
        %3226 = vmatpush.msra.mxu0 %v3195
        %3227 = vmatmul.f32.gmra.mxu0 %v3209
        %v3228 = vpop.f32.mrf.mxu0
        %v3229 = vadd.f32 %v3205, %v3228
        %3230 = vdwg.mxu0
        %v3231 = vadd.f32 %v3162, %v3229
        %v3232 = vsel %vm1091, %v3231, 0.0
        %3233 = vadd.xlane.f32.xlu0 %v3232
        %v3234 = vpop.xlane.xlu0 %3233
        %v3235 = vmul.f32 %v3234, %v1944
        %v3236 = vsub.f32 %v3231, %v3235
        %v3237 = vmul.f32 %v3236, %v3236
        %v3238 = vsel %vm1091, %v3237, 0.0
        %3239 = vadd.xlane.f32.xlu0 %v3238
        %v3240 = vpop.xlane.xlu0 %3239
        %v3241 = vmul.f32 %v3240, %v1944
        %v3242 = vadd.f32 %v3241, 1e-05
        %v3243 = vrsqrt.pop %v3242
        %v3244 = vmul.f32 %v3243, %v3242
        %v3245 = vmul.f32 %v3244, %v3243
        %v3246 = vmul.f32 0.5, %v3245
        %v3247 = vsub.f32 1.5, %v3246
        %v3248 = vmul.f32 %v3243, %v3247
        %vm3249 = vweird.f32 %v3242
        %vm3250 = vweird.f32 %v3243
        %vm3251 = vmor %vm3249, %vm3250
        %v3252 = vsel %vm3251, %v3243, %v3248
        %v3253 = vmul.f32 %v3236, %v3252
        %v3254 = vmul.f32 %v3253, %v1965
        %v3255 = vadd.f32 %v3254, %v1969
        %3256 = vst.msk [vmem:[%s1060] sm:$0xff] %vm1091, %v3255
        %s3257 = sand.u32 %s645, 1
        %s3258 = scalar_lea.sflag [#allocation4], %s3257
        %s3259 = sand.u32 %s645, 1
        %s3260 = smul.addr %s3259, 8
        %s3261 = scalar_lea.vmem [#allocation19], %s3260
        %s3262 = sand.u32 %s673, 1
        %s3263 = scalar_lea.sflag [#allocation21], %s3262
        %s3264 = sand.u32 %s673, 1
        %s3265 = smul.addr %s3264, 32
        %s3266 = scalar_lea.vmem [#allocation20], %s3265
        // Predicated region
        $region165: #{tpu_custom_call.1} parent=123 // pred_check
          %p3267 = pneg %p655
        $region166: #{tpu_custom_call.1} parent=123 // pred_check_branch
          %3269 = sbr.rel (%p3267) target = $region168
        $region167: #{tpu_custom_call.1} parent=123 // pred_region
          %3271 = vsyncadd %s3258, 0
          %s3272 = sadd.s32 %s60, %s59
          %s3273 = smul.addr %s3272, 8
          %s3274 = scalar_lea.hbm %s26, %s3273
          %s3276 = sshll.u32 %s3261, 4
          %s3277 = int_to_ptr.vmem [resolvable:$true] %s3276
          %s3278 = sshll.u32 %s3274, 4
          %s3279 = int_to_ptr.hbm [resolvable:$true] %s3278
          %3281 = dma.vmem_to_hbm [thread:$0]  %s3277, 128, %s3279, %s3258
        $region168: #{tpu_custom_call.1} parent=123 // pred_fallthru
          _
        // Predicated region
        $region169: #{tpu_custom_call.1} parent=123 // pred_check
          %p3282 = pneg %p683
        $region170: #{tpu_custom_call.1} parent=123 // pred_check_branch
          %3284 = sbr.rel (%p3282) target = $region172
        $region171: #{tpu_custom_call.1} parent=123 // pred_region
          %3286 = vsyncadd %s3263, 0
          %s3287 = smul.addr %s59, 4
          %s3288 = sadd.s32 %s60, %s3287
          %s3289 = smul.addr %s3288, 8
          %s3290 = scalar_lea.hbm %s27, %s3289
          %s3291 = sshll.u32 %s3266, 4
          %s3292 = int_to_ptr.vmem [resolvable:$true] %s3291
          %s3293 = sshll.u32 %s3290, 4
          %s3294 = int_to_ptr.hbm [resolvable:$true] %s3293
          %3299 = dma.vmem_to_hbm [thread:$0]  %s3292, 512, %s3294, %s3263, 128, 128, 8
        $region172: #{tpu_custom_call.1} parent=123 // pred_fallthru
          _
      $region124: #{tpu_custom_call.1} parent=5 // pred_fallthru
        _
      %p3300 = scmp.le.s32.totalorder 2, %s50
      // Predicated region
      $region173: #{tpu_custom_call.1} parent=5 // pred_check
        %p3301 = pneg %p3300
      $region174: #{tpu_custom_call.1} parent=5 // pred_check_branch
        %3303 = sbr.rel (%p3301) target = $region176
      $region175: #{tpu_custom_call.1} parent=5 // pred_region
        %s3304 = ssub.s32 %s50, 2
        // Predicated region
        $region177: #{tpu_custom_call.1} parent=175 // pred_check
          %p3305 = pneg %p661
        $region178: #{tpu_custom_call.1} parent=175 // pred_check_branch
          %3307 = sbr.rel (%p3305) target = $region180
        $region179: #{tpu_custom_call.1} parent=175 // pred_region
          %s3308 = sand.u32 %s646, 1
          %s3309 = scalar_lea.sflag [#allocation4], %s3308
          %s3310 = sand.u32 %s646, 1
          %s3311 = smul.addr %s3310, 8
          %s3312 = scalar_lea.vmem [#allocation19], %s3311
          %3314 = dma.done %s3309, 128
        $region180: #{tpu_custom_call.1} parent=175 // pred_fallthru
          _
        // Predicated region
        $region181: #{tpu_custom_call.1} parent=175 // pred_check
          %p3315 = pneg %p689
        $region182: #{tpu_custom_call.1} parent=175 // pred_check_branch
          %3317 = sbr.rel (%p3315) target = $region184
        $region183: #{tpu_custom_call.1} parent=175 // pred_region
          %s3318 = sand.u32 %s674, 1
          %s3319 = scalar_lea.sflag [#allocation21], %s3318
          %s3320 = sand.u32 %s674, 1
          %s3321 = smul.addr %s3320, 32
          %s3322 = scalar_lea.vmem [#allocation20], %s3321
          %3324 = dma.done %s3319, 512
        $region184: #{tpu_custom_call.1} parent=175 // pred_fallthru
          _
      $region176: #{tpu_custom_call.1} parent=5 // pred_fallthru
        _
    $region6: #{tpu_custom_call.1} parent=1 // loop_footer
      %s54 = sadd.s32 1, %s50
    $region7: #{tpu_custom_call.1} parent=1 // loop_footer_branch
      %49 = sbr.rel target = $region3
    $region8: #{tpu_custom_call.1} parent=1 // loop_exit
      _
    %3325 = vsyncpa [#allocation3], 1
    %s3326 = scalar_lea.sflag [#allocation3], 1
    %3327 = vsyncpa %s3326, 1
    %3328 = vsyncpa [#allocation6], 1
    %s3329 = scalar_lea.sflag [#allocation6], 1
    %3330 = vsyncpa %s3329, 1
    %3331 = vsyncpa [#allocation9], 1
    %3332 = vsyncpa [#allocation12], 1
    %3333 = vsyncpa [#allocation15], 1
    %3334 = vsyncpa [#allocation18], 1
    %3335 = vsyncpa [#allocation4], 1
    %s3336 = scalar_lea.sflag [#allocation4], 1
    %3337 = vsyncpa %s3336, 1
    %3338 = vsyncpa [#allocation21], 1
    %s3339 = scalar_lea.sflag [#allocation21], 1
    %3340 = vsyncpa %s3339, 1

</llo_original>
